<compile_context>
chip_gen: v7x
topology: tpu7x:2x2x1
jax: 0.10.0
libtpu: 0.0.40
codegen_flags: <defaults>
</compile_context>

<pallas_src>
import functools

import jax
import jax.numpy as jnp
from jax.experimental import pallas as pl
from jax.experimental.pallas import tpu as pltpu


# --------------------------------------------------------------------------
# Pallas kernels
# --------------------------------------------------------------------------
def _conv1_kernel(a_ref, w_ref, b_ref, o_ref):
    """Single-step (M,K)@(K,N) + bias + ReLU (no accumulator, no pl.when)."""
    acc = jnp.dot(a_ref[...], w_ref[...], preferred_element_type=jnp.float32)
    o_ref[...] = jnp.maximum(acc + b_ref[...], 0.0).astype(o_ref.dtype)


def conv1_matmul(a, w, b):
    """a:(M,K) bf16, w:(K,N) bf16, b:(1,N) f32 -> ReLU(a@w+b) as (M,N) bf16."""
    M, K = a.shape
    N = w.shape[1]
    return pl.pallas_call(
        _conv1_kernel,
        out_shape=jax.ShapeDtypeStruct((M, N), jnp.bfloat16),
        grid=(1,),
        in_specs=[
            pl.BlockSpec((M, K), lambda i: (0, 0)),
            pl.BlockSpec((K, N), lambda i: (0, 0)),
            pl.BlockSpec((1, N), lambda i: (0, 0)),
        ],
        out_specs=pl.BlockSpec((M, N), lambda i: (0, 0)),
    )(a, w, b)


def _tail_kernel(a2_ref, y_ref, w2_ref, b2_ref, bn_g_ref, bn_b_ref,
                 w3c_ref, b3_ref, we_ref, be_ref, wf1_ref, bf1_ref,
                 wf2_ref, bf2_ref, o_ref, *, eps):
    """Fused: conv2+ReLU, BatchNorm2d, conv3+ReLU, sigmoid(encoder), fc1+ReLU, fc2."""
    nb = o_ref.shape[0]

    # conv2 (4x4 / stride 2) as a matmul on pre-extracted patches + bias + ReLU.
    r2 = jnp.dot(a2_ref[...], w2_ref[...], preferred_element_type=jnp.float32)
    r2 = jnp.maximum(r2 + b2_ref[...], 0.0)                        # (9B, 64) f32

    # BatchNorm2d with training-mode batch statistics (biased variance, as PyTorch).
    # TODO(synk): if the reference model runs in eval(), use running stats instead.
    mean = jnp.mean(r2, axis=0, keepdims=True)
    var = jnp.mean((r2 - mean) ** 2, axis=0, keepdims=True)
    r2 = (r2 - mean) * jax.lax.rsqrt(var + eps) * bn_g_ref[...] + bn_b_ref[...]

    # conv3: its 3x3 / stride-2 window covers the whole 3x3 input, so it is a
    # linear layer on the flattened activation.  Rows of r2 are ordered
    # (pos=(kh,kw), b) and w3c is laid out block-diagonally as
    # w3c[c, pos*64 + n] = w3[n, c, kh, kw]; position pos's contribution to
    # batch b is t[pos*B + b, pos*64 + n] -> 9 static slices + adds, no reshape.
    t = jnp.dot(r2.astype(jnp.bfloat16), w3c_ref[...],
                preferred_element_type=jnp.float32)                # (9B, 9*64)
    x3 = t[0:nb, 0:64]
    for j in range(1, 9):
        x3 = x3 + t[nb * j:nb * (j + 1), 64 * j:64 * (j + 1)]
    x3 = jnp.maximum(x3 + b3_ref[...], 0.0)                        # (B, 64) f32

    # sigmoid(encoder(y)) -- stable sigmoid via EUP tanh, f32 math.
    ye = jnp.dot(y_ref[...], we_ref[...], preferred_element_type=jnp.float32)
    ye = 0.5 * (jnp.tanh(0.5 * (ye + be_ref[...])) + 1.0)          # (B, 64) f32

    # fc1 + ReLU, fc2.
    z = jnp.dot((x3 + ye).astype(jnp.bfloat16), wf1_ref[...],
                preferred_element_type=jnp.float32) + bf1_ref[...]
    z = jnp.maximum(z, 0.0).astype(jnp.bfloat16)                   # (B, 32)
    o_ref[...] = jnp.dot(z, wf2_ref[...],
                         preferred_element_type=jnp.float32) + bf2_ref[...]


def tail_fused(a2, y, params, eps=1e-5):
    B = y.shape[0]
    n_out = params["wf2"].shape[1]
    args = (a2, y, params["w2"], params["b2"], params["bn_g"], params["bn_b"],
            params["w3c"], params["b3"], params["we"], params["be"],
            params["wf1"], params["bf1"], params["wf2"], params["bf2"])
    in_specs = [pl.BlockSpec(a.shape, lambda i: (0, 0)) for a in args]
    return pl.pallas_call(
        functools.partial(_tail_kernel, eps=eps),
        out_shape=jax.ShapeDtypeStruct((B, n_out), jnp.float32),
        grid=(1,),
        in_specs=in_specs,
        out_specs=pl.BlockSpec((B, n_out), lambda i: (0, 0)),
    )(*args)


# --------------------------------------------------------------------------
# GhostNet forward
# --------------------------------------------------------------------------
def ghostnet_forward(params, x, y):
    B, C, H, W = x.shape
    assert C * 16 == 64 and H == 36 and W == 36, "GhostNet forward requires C=4, H=W=36"

    # Embedding as a one-hot matmul (exact row gather executed on the MXU).
    # The subsequent reshape reproduces torch's per-channel .view(B,16,H,W)
    # followed by cat(dim=1) bit-exactly (pure row-major relabel).
    idx = x.reshape(B, C, H * W).astype(jnp.int32) \
        + 9 * jnp.arange(C, dtype=jnp.int32)[None, :, None]
    onehot = jax.nn.one_hot(idx, 9 * C, dtype=jnp.bfloat16)         # (B, C, HW, 36)
    g = jnp.dot(onehot.reshape(-1, 9 * C), params["emb"],
                preferred_element_type=jnp.bfloat16)                 # (B*C*HW, 16)

    # conv1 im2col via space-to-depth: kernel 8 / stride 4 on 36 = 9*4 means
    # output (oh,ow) reads row-blocks (oh,oh+1) x col-blocks (ow,ow+1).
    # Pure slice/stack/transpose -- never lowers to an identity-filter conv.
    hb = g.reshape(B, 64, 9, 4, 9, 4)                  # (b, c, bh, rh, bw, rw)
    parts = [hb[:, :, i:i + 8, :, j:j + 8, :] for i in (0, 1) for j in (0, 1)]
    a1 = jnp.stack(parts, axis=2).reshape(B, 64, 2, 2, 8, 4, 8, 4)
    a1 = a1.transpose(0, 4, 6, 1, 2, 5, 3, 7)          # (b, oh, ow, c, i, rh, j, rw)
    a1 = a1.reshape(B * 8 * 8, 64 * 8 * 8)             # rows (b,oh,ow); K order (c,kh,kw)

    # conv1 matmul + bias + ReLU: single-step Pallas kernel.
    r1 = conv1_matmul(a1, params["w1"], params["b1"])  # (128, 64) bf16

    # conv2 im2col: 16 strided slices of a 16 KiB tensor (cheap XLA data movement).
    r1_4d = r1.reshape(B, 8, 8, 64)
    taps = [r1_4d[:, kh:kh + 5:2, kw:kw + 5:2, :]
            for kh in range(4) for kw in range(4)]      # each (B, 3, 3, 64)
    a2 = jnp.stack(taps, axis=3)                        # (B, 3, 3, 16, 64)
    a2 = a2.transpose(1, 2, 0, 3, 4).reshape(B * 9, 16 * 64)
    # rows ordered (oh2, ow2, b) -- required by the in-kernel conv3 block trick.

    # Fused tail: conv2+ReLU, BN, conv3+ReLU, sigmoid(encoder), fc1+ReLU, fc2.
    # TODO(synk): longer-term, fold conv1 + the conv2 im2col into this same
    # pallas_call so the whole post-embedding network is one kernel.
    out = tail_fused(a2, y.astype(jnp.bfloat16), params)   # (B, 15) f32
    return out.reshape(-1, 3, 5)


# --------------------------------------------------------------------------
# Parameter construction: PyTorch layouts generated, then all reshape /
# transpose / bf16 casts hoisted here (done once, not per forward pass).
# --------------------------------------------------------------------------
def init_params(key, input_channel_num, num_actions, extra_size):
    ks = jax.random.split(key, 16)
    C = input_channel_num

    def nrm(k, shape, scale):
        return jax.random.normal(k, shape, jnp.float32) * scale

    emb = nrm(ks[0], (C, 9, 16), 1.0)
    w1 = nrm(ks[4], (64, 64, 8, 8), 1.0 / (64 * 8 * 8) ** 0.5)
    b1 = nrm(ks[5], (64,), 0.01)
    w2 = nrm(ks[6], (64, 64, 4, 4), 1.0 / (64 * 4 * 4) ** 0.5)
    b2 = nrm(ks[7], (64,), 0.01)
    w3 = nrm(ks[8], (64, 64, 3, 3), 1.0 / (64 * 3 * 3) ** 0.5)
    b3 = nrm(ks[9], (64,), 0.01)
    we = nrm(ks[10], (64, extra_size), 1.0 / extra_size ** 0.5)
    be = nrm(ks[11], (64,), 0.01)
    wf1 = nrm(ks[12], (32, 64), 1.0 / 64 ** 0.5)
    bf1 = nrm(ks[13], (32,), 0.01)
    wf2 = nrm(ks[14], (num_actions * 3, 32), 1.0 / 32 ** 0.5)
    bf2 = nrm(ks[15], (num_actions * 3,), 0.01)

    bf16 = jnp.bfloat16
    return {
        "emb": emb.reshape(C * 9, 16).astype(bf16),                      # stacked tables
        "w1": w1.reshape(64, -1).T.astype(bf16),                         # K order (c,kh,kw)
        "b1": b1.reshape(1, -1),
        "w2": w2.transpose(2, 3, 1, 0).reshape(-1, 64).astype(bf16),     # K order (kh,kw,c)
        "b2": b2.reshape(1, -1),
        "bn_g": jnp.ones((1, 64), jnp.float32),
        "bn_b": jnp.zeros((1, 64), jnp.float32),
        "w3c": w3.transpose(1, 2, 3, 0).reshape(64, -1).astype(bf16),    # (c, pos*64+n) blocks
        "b3": b3.reshape(1, -1),
        "we": we.T.astype(bf16),
        "be": be.reshape(1, -1),
        "wf1": wf1.T.astype(bf16),
        "bf1": bf1.reshape(1, -1),
        "wf2": wf2.T.astype(bf16),
        "bf2": bf2.reshape(1, -1),
    }


if __name__ == "__main__":
    # Module structure forces: input_channel_num=4 (16*4=64 conv1 in-channels),
    # H=W=36 so the conv stack flattens to exactly 64 features, num_actions=5
    # so the output reshapes to (-1, 3, 5).
    B, C_IN, H, W = 2, 4, 36, 36
    NUM_ACTIONS, EXTRA_SIZE = 5, 8

    key = jax.random.PRNGKey(0)
    kx, ky, kp = jax.random.split(key, 3)

    x = jax.random.randint(kx, (B, C_IN, H, W), 0, 9, dtype=jnp.int32)
    y = jax.random.normal(ky, (B, EXTRA_SIZE), jnp.float32)
    params = init_params(kp, C_IN, NUM_ACTIONS, EXTRA_SIZE)

    out = jax.jit(ghostnet_forward)(params, x, y)
    out = jax.block_until_ready(out)
    assert out.shape == (B, 3, 5), out.shape
    print("KERNEL_OK")
</pallas_src>

<mosaic_0001>
module attributes {stable_mosaic.version = 11 : i64} {
  func.func @_conv1_kernel(%arg0: i32, %arg1: memref<128x4096xbf16, #tpu.memory_space<vmem>>, %arg2: memref<4096x64xbf16, #tpu.memory_space<vmem>>, %arg3: memref<1x64xf32, #tpu.memory_space<vmem>>, %arg4: memref<128x64xbf16, #tpu.memory_space<vmem>>) attributes {dimension_semantics = [#tpu.dimension_semantics<arbitrary>], iteration_bounds = array<i64: 1>, scalar_prefetch = 0 : i64, scratch_operands = 0 : i64, tpu.core_type = #tpu.core_type<tc>, window_params = [{pipeline_mode = #tpu.pipeline_mode<synchronous>, transform_indices = @transform_0, window_bounds = array<i64: 128, 4096>}, {pipeline_mode = #tpu.pipeline_mode<synchronous>, transform_indices = @transform_1, window_bounds = array<i64: 4096, 64>}, {pipeline_mode = #tpu.pipeline_mode<synchronous>, transform_indices = @transform_2, window_bounds = array<i64: 1, 64>}, {pipeline_mode = #tpu.pipeline_mode<synchronous>, transform_indices = @transform_3, window_bounds = array<i64: 128, 64>}]} {
    %c0 = arith.constant 0 : index
    %c0_0 = arith.constant 0 : index
    %0 = vector.load %arg1[%c0, %c0_0] : memref<128x4096xbf16, #tpu.memory_space<vmem>>, vector<128x4096xbf16>
    %c0_1 = arith.constant 0 : index
    %c0_2 = arith.constant 0 : index
    %1 = vector.load %arg2[%c0_1, %c0_2] : memref<4096x64xbf16, #tpu.memory_space<vmem>>, vector<4096x64xbf16>
    %cst = arith.constant dense<0.000000e+00> : vector<128x64xf32>
    %2 = tpu.matmul %0, %1, %cst {dimension_numbers = #tpu.dot_dimension_numbers<[1], [0], [0], [1], [0, 0, 1, 1], [], []>} : vector<128x4096xbf16>, vector<4096x64xbf16>, vector<128x64xf32> -> vector<128x64xf32>
    %c0_3 = arith.constant 0 : index
    %c0_4 = arith.constant 0 : index
    %3 = vector.load %arg3[%c0_3, %c0_4] : memref<1x64xf32, #tpu.memory_space<vmem>>, vector<1x64xf32>
    %4 = vector.broadcast %3 : vector<1x64xf32> to vector<128x64xf32>
    %5 = arith.addf %2, %4 : vector<128x64xf32>
    %cst_5 = arith.constant 0.000000e+00 : f32
    %6 = vector.broadcast %cst_5 : f32 to vector<128x64xf32>
    %7 = arith.maximumf %5, %6 : vector<128x64xf32>
    %8 = arith.truncf %7 : vector<128x64xf32> to vector<128x64xbf16>
    %c0_6 = arith.constant 0 : index
    %c0_7 = arith.constant 0 : index
    %9 = vector.load %arg4[%c0_6, %c0_7] : memref<128x64xbf16, #tpu.memory_space<vmem>>, vector<128x64xbf16>
    tpu.vector_store %arg4[%c0_6, %c0_7], %8 {strides = array<i32>} : memref<128x64xbf16, #tpu.memory_space<vmem>>, vector<128x64xbf16>,
    return
  }
  func.func @transform_0(%arg0: i32) -> (i32, i32) {
    %c0_i32 = arith.constant 0 : i32
    %c0_i32_0 = arith.constant 0 : i32
    %c0_i32_1 = arith.constant 0 : i32
    return %c0_i32, %c0_i32_0 : i32, i32
  }
  func.func @transform_1(%arg0: i32) -> (i32, i32) {
    %c0_i32 = arith.constant 0 : i32
    %c0_i32_0 = arith.constant 0 : i32
    %c0_i32_1 = arith.constant 0 : i32
    return %c0_i32, %c0_i32_0 : i32, i32
  }
  func.func @transform_2(%arg0: i32) -> (i32, i32) {
    %c0_i32 = arith.constant 0 : i32
    %c0_i32_0 = arith.constant 0 : i32
    %c0_i32_1 = arith.constant 0 : i32
    return %c0_i32, %c0_i32_0 : i32, i32
  }
  func.func @transform_3(%arg0: i32) -> (i32, i32) {
    %c0_i32 = arith.constant 0 : i32
    %c0_i32_0 = arith.constant 0 : i32
    %c0_i32_1 = arith.constant 0 : i32
    return %c0_i32, %c0_i32_0 : i32, i32
  }
}

module attributes {stable_mosaic.version = 11 : i64} {
  func.func @_tail_kernel(%arg0: i32, %arg1: memref<18x1024xbf16, #tpu.memory_space<vmem>>, %arg2: memref<2x8xbf16, #tpu.memory_space<vmem>>, %arg3: memref<1024x64xbf16, #tpu.memory_space<vmem>>, %arg4: memref<1x64xf32, #tpu.memory_space<vmem>>, %arg5: memref<1x64xf32, #tpu.memory_space<vmem>>, %arg6: memref<1x64xf32, #tpu.memory_space<vmem>>, %arg7: memref<64x576xbf16, #tpu.memory_space<vmem>>, %arg8: memref<1x64xf32, #tpu.memory_space<vmem>>, %arg9: memref<8x64xbf16, #tpu.memory_space<vmem>>, %arg10: memref<1x64xf32, #tpu.memory_space<vmem>>, %arg11: memref<64x32xbf16, #tpu.memory_space<vmem>>, %arg12: memref<1x32xf32, #tpu.memory_space<vmem>>, %arg13: memref<32x15xbf16, #tpu.memory_space<vmem>>, %arg14: memref<1x15xf32, #tpu.memory_space<vmem>>, %arg15: memref<2x15xf32, #tpu.memory_space<vmem>>) attributes {dimension_semantics = [#tpu.dimension_semantics<arbitrary>], iteration_bounds = array<i64: 1>, scalar_prefetch = 0 : i64, scratch_operands = 0 : i64, tpu.core_type = #tpu.core_type<tc>, window_params = [{pipeline_mode = #tpu.pipeline_mode<synchronous>, transform_indices = @transform_0, window_bounds = array<i64: 18, 1024>}, {pipeline_mode = #tpu.pipeline_mode<synchronous>, transform_indices = @transform_1, window_bounds = array<i64: 2, 8>}, {pipeline_mode = #tpu.pipeline_mode<synchronous>, transform_indices = @transform_2, window_bounds = array<i64: 1024, 64>}, {pipeline_mode = #tpu.pipeline_mode<synchronous>, transform_indices = @transform_3, window_bounds = array<i64: 1, 64>}, {pipeline_mode = #tpu.pipeline_mode<synchronous>, transform_indices = @transform_4, window_bounds = array<i64: 1, 64>}, {pipeline_mode = #tpu.pipeline_mode<synchronous>, transform_indices = @transform_5, window_bounds = array<i64: 1, 64>}, {pipeline_mode = #tpu.pipeline_mode<synchronous>, transform_indices = @transform_6, window_bounds = array<i64: 64, 576>}, {pipeline_mode = #tpu.pipeline_mode<synchronous>, transform_indices = @transform_7, window_bounds = array<i64: 1, 64>}, {pipeline_mode = #tpu.pipeline_mode<synchronous>, transform_indices = @transform_8, window_bounds = array<i64: 8, 64>}, {pipeline_mode = #tpu.pipeline_mode<synchronous>, transform_indices = @transform_9, window_bounds = array<i64: 1, 64>}, {pipeline_mode = #tpu.pipeline_mode<synchronous>, transform_indices = @transform_10, window_bounds = array<i64: 64, 32>}, {pipeline_mode = #tpu.pipeline_mode<synchronous>, transform_indices = @transform_11, window_bounds = array<i64: 1, 32>}, {pipeline_mode = #tpu.pipeline_mode<synchronous>, transform_indices = @transform_12, window_bounds = array<i64: 32, 15>}, {pipeline_mode = #tpu.pipeline_mode<synchronous>, transform_indices = @transform_13, window_bounds = array<i64: 1, 15>}, {pipeline_mode = #tpu.pipeline_mode<synchronous>, transform_indices = @transform_14, window_bounds = array<i64: 2, 15>}]} {
    %c0 = arith.constant 0 : index
    %c0_0 = arith.constant 0 : index
    %0 = vector.load %arg1[%c0, %c0_0] : memref<18x1024xbf16, #tpu.memory_space<vmem>>, vector<18x1024xbf16>
    %c0_1 = arith.constant 0 : index
    %c0_2 = arith.constant 0 : index
    %1 = vector.load %arg3[%c0_1, %c0_2] : memref<1024x64xbf16, #tpu.memory_space<vmem>>, vector<1024x64xbf16>
    %cst = arith.constant dense<0.000000e+00> : vector<18x64xf32>
    %2 = tpu.matmul %0, %1, %cst {dimension_numbers = #tpu.dot_dimension_numbers<[1], [0], [0], [1], [0, 0, 1, 1], [], []>} : vector<18x1024xbf16>, vector<1024x64xbf16>, vector<18x64xf32> -> vector<18x64xf32>
    %c0_3 = arith.constant 0 : index
    %c0_4 = arith.constant 0 : index
    %3 = vector.load %arg4[%c0_3, %c0_4] : memref<1x64xf32, #tpu.memory_space<vmem>>, vector<1x64xf32>
    %4 = vector.broadcast %3 : vector<1x64xf32> to vector<18x64xf32>
    %5 = arith.addf %2, %4 : vector<18x64xf32>
    %cst_5 = arith.constant 0.000000e+00 : f32
    %6 = vector.broadcast %cst_5 : f32 to vector<18x64xf32>
    %7 = arith.maximumf %5, %6 : vector<18x64xf32>
    %cst_6 = arith.constant dense<0.000000e+00> : vector<64xf32>
    %8 = vector.multi_reduction <add>, %7, %cst_6 [0] : vector<18x64xf32> to vector<64xf32>
    %9 = vector.shape_cast %8 : vector<64xf32> to vector<1x64xf32>
    %cst_7 = arith.constant 1.800000e+01 : f32
    %10 = vector.broadcast %cst_7 : f32 to vector<1x64xf32>
    %11 = arith.divf %9, %10 : vector<1x64xf32>
    %12 = vector.broadcast %11 : vector<1x64xf32> to vector<18x64xf32>
    %13 = arith.subf %7, %12 : vector<18x64xf32>
    %14 = arith.mulf %13, %13 : vector<18x64xf32>
    %cst_8 = arith.constant dense<0.000000e+00> : vector<64xf32>
    %15 = vector.multi_reduction <add>, %14, %cst_8 [0] : vector<18x64xf32> to vector<64xf32>
    %16 = vector.shape_cast %15 : vector<64xf32> to vector<1x64xf32>
    %cst_9 = arith.constant 1.800000e+01 : f32
    %17 = vector.broadcast %cst_9 : f32 to vector<1x64xf32>
    %18 = arith.divf %16, %17 : vector<1x64xf32>
    %19 = vector.broadcast %11 : vector<1x64xf32> to vector<18x64xf32>
    %20 = arith.subf %7, %19 : vector<18x64xf32>
    %cst_10 = arith.constant 9.99999974E-6 : f32
    %21 = vector.broadcast %cst_10 : f32 to vector<1x64xf32>
    %22 = arith.addf %18, %21 : vector<1x64xf32>
    %23 = math.rsqrt %22 : vector<1x64xf32>
    %24 = vector.broadcast %23 : vector<1x64xf32> to vector<18x64xf32>
    %25 = arith.mulf %20, %24 : vector<18x64xf32>
    %c0_11 = arith.constant 0 : index
    %c0_12 = arith.constant 0 : index
    %26 = vector.load %arg5[%c0_11, %c0_12] : memref<1x64xf32, #tpu.memory_space<vmem>>, vector<1x64xf32>
    %27 = vector.broadcast %26 : vector<1x64xf32> to vector<18x64xf32>
    %28 = arith.mulf %25, %27 : vector<18x64xf32>
    %c0_13 = arith.constant 0 : index
    %c0_14 = arith.constant 0 : index
    %29 = vector.load %arg6[%c0_13, %c0_14] : memref<1x64xf32, #tpu.memory_space<vmem>>, vector<1x64xf32>
    %30 = vector.broadcast %29 : vector<1x64xf32> to vector<18x64xf32>
    %31 = arith.addf %28, %30 : vector<18x64xf32>
    %32 = arith.truncf %31 : vector<18x64xf32> to vector<18x64xbf16>
    %c0_15 = arith.constant 0 : index
    %c0_16 = arith.constant 0 : index
    %33 = vector.load %arg7[%c0_15, %c0_16] : memref<64x576xbf16, #tpu.memory_space<vmem>>, vector<64x576xbf16>
    %cst_17 = arith.constant dense<0.000000e+00> : vector<18x576xf32>
    %34 = tpu.matmul %32, %33, %cst_17 {dimension_numbers = #tpu.dot_dimension_numbers<[1], [0], [0], [1], [0, 0, 1, 1], [], []>} : vector<18x64xbf16>, vector<64x576xbf16>, vector<18x576xf32> -> vector<18x576xf32>
    %35 = vector.extract_strided_slice %34 {offsets = [0, 0], sizes = [2, 64], strides = [1, 1]} : vector<18x576xf32> to vector<2x64xf32>
    %36 = vector.extract_strided_slice %34 {offsets = [2, 64], sizes = [2, 64], strides = [1, 1]} : vector<18x576xf32> to vector<2x64xf32>
    %37 = arith.addf %35, %36 : vector<2x64xf32>
    %38 = vector.extract_strided_slice %34 {offsets = [4, 128], sizes = [2, 64], strides = [1, 1]} : vector<18x576xf32> to vector<2x64xf32>
    %39 = arith.addf %37, %38 : vector<2x64xf32>
    %40 = vector.extract_strided_slice %34 {offsets = [6, 192], sizes = [2, 64], strides = [1, 1]} : vector<18x576xf32> to vector<2x64xf32>
    %41 = arith.addf %39, %40 : vector<2x64xf32>
    %42 = vector.extract_strided_slice %34 {offsets = [8, 256], sizes = [2, 64], strides = [1, 1]} : vector<18x576xf32> to vector<2x64xf32>
    %43 = arith.addf %41, %42 : vector<2x64xf32>
    %44 = vector.extract_strided_slice %34 {offsets = [10, 320], sizes = [2, 64], strides = [1, 1]} : vector<18x576xf32> to vector<2x64xf32>
    %45 = arith.addf %43, %44 : vector<2x64xf32>
    %46 = vector.extract_strided_slice %34 {offsets = [12, 384], sizes = [2, 64], strides = [1, 1]} : vector<18x576xf32> to vector<2x64xf32>
    %47 = arith.addf %45, %46 : vector<2x64xf32>
    %48 = vector.extract_strided_slice %34 {offsets = [14, 448], sizes = [2, 64], strides = [1, 1]} : vector<18x576xf32> to vector<2x64xf32>
    %49 = arith.addf %47, %48 : vector<2x64xf32>
    %50 = vector.extract_strided_slice %34 {offsets = [16, 512], sizes = [2, 64], strides = [1, 1]} : vector<18x576xf32> to vector<2x64xf32>
    %51 = arith.addf %49, %50 : vector<2x64xf32>
    %c0_18 = arith.constant 0 : index
    %c0_19 = arith.constant 0 : index
    %52 = vector.load %arg8[%c0_18, %c0_19] : memref<1x64xf32, #tpu.memory_space<vmem>>, vector<1x64xf32>
    %53 = vector.broadcast %52 : vector<1x64xf32> to vector<2x64xf32>
    %54 = arith.addf %51, %53 : vector<2x64xf32>
    %cst_20 = arith.constant 0.000000e+00 : f32
    %55 = vector.broadcast %cst_20 : f32 to vector<2x64xf32>
    %56 = arith.maximumf %54, %55 : vector<2x64xf32>
    %c0_21 = arith.constant 0 : index
    %c0_22 = arith.constant 0 : index
    %57 = vector.load %arg2[%c0_21, %c0_22] : memref<2x8xbf16, #tpu.memory_space<vmem>>, vector<2x8xbf16>
    %c0_23 = arith.constant 0 : index
    %c0_24 = arith.constant 0 : index
    %58 = vector.load %arg9[%c0_23, %c0_24] : memref<8x64xbf16, #tpu.memory_space<vmem>>, vector<8x64xbf16>
    %cst_25 = arith.constant dense<0.000000e+00> : vector<2x64xf32>
    %59 = tpu.matmul %57, %58, %cst_25 {dimension_numbers = #tpu.dot_dimension_numbers<[1], [0], [0], [1], [0, 0, 1, 1], [], []>} : vector<2x8xbf16>, vector<8x64xbf16>, vector<2x64xf32> -> vector<2x64xf32>
    %c0_26 = arith.constant 0 : index
    %c0_27 = arith.constant 0 : index
    %60 = vector.load %arg10[%c0_26, %c0_27] : memref<1x64xf32, #tpu.memory_space<vmem>>, vector<1x64xf32>
    %61 = vector.broadcast %60 : vector<1x64xf32> to vector<2x64xf32>
    %62 = arith.addf %59, %61 : vector<2x64xf32>
    %cst_28 = arith.constant 5.000000e-01 : f32
    %63 = vector.broadcast %cst_28 : f32 to vector<2x64xf32>
    %64 = arith.mulf %63, %62 : vector<2x64xf32>
    %65 = math.tanh %64 : vector<2x64xf32>
    %cst_29 = arith.constant 1.000000e+00 : f32
    %66 = vector.broadcast %cst_29 : f32 to vector<2x64xf32>
    %67 = arith.addf %65, %66 : vector<2x64xf32>
    %cst_30 = arith.constant 5.000000e-01 : f32
    %68 = vector.broadcast %cst_30 : f32 to vector<2x64xf32>
    %69 = arith.mulf %68, %67 : vector<2x64xf32>
    %70 = arith.addf %56, %69 : vector<2x64xf32>
    %71 = arith.truncf %70 : vector<2x64xf32> to vector<2x64xbf16>
    %c0_31 = arith.constant 0 : index
    %c0_32 = arith.constant 0 : index
    %72 = vector.load %arg11[%c0_31, %c0_32] : memref<64x32xbf16, #tpu.memory_space<vmem>>, vector<64x32xbf16>
    %cst_33 = arith.constant dense<0.000000e+00> : vector<2x32xf32>
    %73 = tpu.matmul %71, %72, %cst_33 {dimension_numbers = #tpu.dot_dimension_numbers<[1], [0], [0], [1], [0, 0, 1, 1], [], []>} : vector<2x64xbf16>, vector<64x32xbf16>, vector<2x32xf32> -> vector<2x32xf32>
    %c0_34 = arith.constant 0 : index
    %c0_35 = arith.constant 0 : index
    %74 = vector.load %arg12[%c0_34, %c0_35] : memref<1x32xf32, #tpu.memory_space<vmem>>, vector<1x32xf32>
    %75 = vector.broadcast %74 : vector<1x32xf32> to vector<2x32xf32>
    %76 = arith.addf %73, %75 : vector<2x32xf32>
    %cst_36 = arith.constant 0.000000e+00 : f32
    %77 = vector.broadcast %cst_36 : f32 to vector<2x32xf32>
    %78 = arith.maximumf %76, %77 : vector<2x32xf32>
    %79 = arith.truncf %78 : vector<2x32xf32> to vector<2x32xbf16>
    %c0_37 = arith.constant 0 : index
    %c0_38 = arith.constant 0 : index
    %80 = vector.load %arg13[%c0_37, %c0_38] : memref<32x15xbf16, #tpu.memory_space<vmem>>, vector<32x15xbf16>
    %cst_39 = arith.constant dense<0.000000e+00> : vector<2x15xf32>
    %81 = tpu.matmul %79, %80, %cst_39 {dimension_numbers = #tpu.dot_dimension_numbers<[1], [0], [0], [1], [0, 0, 1, 1], [], []>} : vector<2x32xbf16>, vector<32x15xbf16>, vector<2x15xf32> -> vector<2x15xf32>
    %c0_40 = arith.constant 0 : index
    %c0_41 = arith.constant 0 : index
    %82 = vector.load %arg14[%c0_40, %c0_41] : memref<1x15xf32, #tpu.memory_space<vmem>>, vector<1x15xf32>
    %83 = vector.broadcast %82 : vector<1x15xf32> to vector<2x15xf32>
    %84 = arith.addf %81, %83 : vector<2x15xf32>
    %c0_42 = arith.constant 0 : index
    %c0_43 = arith.constant 0 : index
    %85 = vector.load %arg15[%c0_42, %c0_43] : memref<2x15xf32, #tpu.memory_space<vmem>>, vector<2x15xf32>
    tpu.vector_store %arg15[%c0_42, %c0_43], %84 {strides = array<i32>} : memref<2x15xf32, #tpu.memory_space<vmem>>, vector<2x15xf32>,
    return
  }
  func.func @transform_0(%arg0: i32) -> (i32, i32) {
    %c0_i32 = arith.constant 0 : i32
    %c0_i32_0 = arith.constant 0 : i32
    %c0_i32_1 = arith.constant 0 : i32
    return %c0_i32, %c0_i32_0 : i32, i32
  }
  func.func @transform_1(%arg0: i32) -> (i32, i32) {
    %c0_i32 = arith.constant 0 : i32
    %c0_i32_0 = arith.constant 0 : i32
    %c0_i32_1 = arith.constant 0 : i32
    return %c0_i32, %c0_i32_0 : i32, i32
  }
  func.func @transform_2(%arg0: i32) -> (i32, i32) {
    %c0_i32 = arith.constant 0 : i32
    %c0_i32_0 = arith.constant 0 : i32
    %c0_i32_1 = arith.constant 0 : i32
    return %c0_i32, %c0_i32_0 : i32, i32
  }
  func.func @transform_3(%arg0: i32) -> (i32, i32) {
    %c0_i32 = arith.constant 0 : i32
    %c0_i32_0 = arith.constant 0 : i32
    %c0_i32_1 = arith.constant 0 : i32
    return %c0_i32, %c0_i32_0 : i32, i32
  }
  func.func @transform_4(%arg0: i32) -> (i32, i32) {
    %c0_i32 = arith.constant 0 : i32
    %c0_i32_0 = arith.constant 0 : i32
    %c0_i32_1 = arith.constant 0 : i32
    return %c0_i32, %c0_i32_0 : i32, i32
  }
  func.func @transform_5(%arg0: i32) -> (i32, i32) {
    %c0_i32 = arith.constant 0 : i32
    %c0_i32_0 = arith.constant 0 : i32
    %c0_i32_1 = arith.constant 0 : i32
    return %c0_i32, %c0_i32_0 : i32, i32
  }
  func.func @transform_6(%arg0: i32) -> (i32, i32) {
    %c0_i32 = arith.constant 0 : i32
    %c0_i32_0 = arith.constant 0 : i32
    %c0_i32_1 = arith.constant 0 : i32
    return %c0_i32, %c0_i32_0 : i32, i32
  }
  func.func @transform_7(%arg0: i32) -> (i32, i32) {
    %c0_i32 = arith.constant 0 : i32
    %c0_i32_0 = arith.constant 0 : i32
    %c0_i32_1 = arith.constant 0 : i32
    return %c0_i32, %c0_i32_0 : i32, i32
  }
  func.func @transform_8(%arg0: i32) -> (i32, i32) {
    %c0_i32 = arith.constant 0 : i32
    %c0_i32_0 = arith.constant 0 : i32
    %c0_i32_1 = arith.constant 0 : i32
    return %c0_i32, %c0_i32_0 : i32, i32
  }
  func.func @transform_9(%arg0: i32) -> (i32, i32) {
    %c0_i32 = arith.constant 0 : i32
    %c0_i32_0 = arith.constant 0 : i32
    %c0_i32_1 = arith.constant 0 : i32
    return %c0_i32, %c0_i32_0 : i32, i32
  }
  func.func @transform_10(%arg0: i32) -> (i32, i32) {
    %c0_i32 = arith.constant 0 : i32
    %c0_i32_0 = arith.constant 0 : i32
    %c0_i32_1 = arith.constant 0 : i32
    return %c0_i32, %c0_i32_0 : i32, i32
  }
  func.func @transform_11(%arg0: i32) -> (i32, i32) {
    %c0_i32 = arith.constant 0 : i32
    %c0_i32_0 = arith.constant 0 : i32
    %c0_i32_1 = arith.constant 0 : i32
    return %c0_i32, %c0_i32_0 : i32, i32
  }
  func.func @transform_12(%arg0: i32) -> (i32, i32) {
    %c0_i32 = arith.constant 0 : i32
    %c0_i32_0 = arith.constant 0 : i32
    %c0_i32_1 = arith.constant 0 : i32
    return %c0_i32, %c0_i32_0 : i32, i32
  }
  func.func @transform_13(%arg0: i32) -> (i32, i32) {
    %c0_i32 = arith.constant 0 : i32
    %c0_i32_0 = arith.constant 0 : i32
    %c0_i32_1 = arith.constant 0 : i32
    return %c0_i32, %c0_i32_0 : i32, i32
  }
  func.func @transform_14(%arg0: i32) -> (i32, i32) {
    %c0_i32 = arith.constant 0 : i32
    %c0_i32_0 = arith.constant 0 : i32
    %c0_i32_1 = arith.constant 0 : i32
    return %c0_i32, %c0_i32_0 : i32, i32
  }
}

</mosaic_0001>

<llo_original>
// kernel: ghostnet_forward.2
$region0: #{ghostnet_forward.2}
  #allocation0 [shape = 'u32[]', space=smem, size = 0x4, offset = 0x4, fixed_abs, tag = 'smem constant byte address 0x4 - core index']
  #allocation1 [shape = 'u32[144,128]{1,0:T(1,128)}', space=vmem, size = 0x12000, scoped, tag = 'internal scratch']
  %s0 = inlined_call_operand.vmem [shape: bf16[128,4096], index: 0, kind: input, shape index: {}]
  %s1 = inlined_call_operand.vmem [shape: bf16[4096,64], index: 1, kind: input, shape index: {}]
  %s2 = inlined_call_operand.vmem [shape: f32[1,64], index: 2, kind: input, shape index: {}]
  %s3 = inlined_call_operand.vmem [shape: bf16[128,64], index: 3, kind: output, shape index: {}]
  %s4 = sld [smem:[#allocation0]]
  $region22: #{ghostnet_forward.2} parent=0
    _
  %s6 = ssub.s32 1, %s4
  %s7 = scalar_select 0, %s6, %s4
  // Predicated region
  $region2: #{ghostnet_forward.2} parent=0 // pred_check
    _
  $region3: #{ghostnet_forward.2} parent=0 // pred_check_branch
    %9 = sbr.rel (0) target = $region5
  $region4: #{ghostnet_forward.2} parent=0 // pred_region
    _
  $region5: #{ghostnet_forward.2} parent=0 // pred_fallthru
    _
  // Predicated region
  $region6: #{ghostnet_forward.2} parent=0 // pred_check
    _
  $region7: #{ghostnet_forward.2} parent=0 // pred_check_branch
    %11 = sbr.rel (0) target = $region9
  $region8: #{ghostnet_forward.2} parent=0 // pred_region
    _
  $region9: #{ghostnet_forward.2} parent=0 // pred_fallthru
    _
  // Predicated region
  $region10: #{ghostnet_forward.2} parent=0 // pred_check
    _
  $region11: #{ghostnet_forward.2} parent=0 // pred_check_branch
    %13 = sbr.rel (0) target = $region13
  $region12: #{ghostnet_forward.2} parent=0 // pred_region
    _
  $region13: #{ghostnet_forward.2} parent=0 // pred_fallthru
    _
  %v15 = vld [vmem:[%s0] sm:$0xff]
  %v16 = vld [vmem:[%s0 + $0x8] sm:$0xff]
  %v17 = vld [vmem:[%s0 + $0x10] sm:$0xff]
  %v18 = vld [vmem:[%s0 + $0x18] sm:$0xff]
  %v19 = vld [vmem:[%s0 + $0x20] sm:$0xff]
  %v20 = vld [vmem:[%s0 + $0x28] sm:$0xff]
  %v21 = vld [vmem:[%s0 + $0x30] sm:$0xff]
  %v22 = vld [vmem:[%s0 + $0x38] sm:$0xff]
  %v23 = vld [vmem:[%s0 + $0x40] sm:$0xff]
  %v24 = vld [vmem:[%s0 + $0x48] sm:$0xff]
  %v25 = vld [vmem:[%s0 + $0x50] sm:$0xff]
  %v26 = vld [vmem:[%s0 + $0x58] sm:$0xff]
  %v27 = vld [vmem:[%s0 + $0x60] sm:$0xff]
  %v28 = vld [vmem:[%s0 + $0x68] sm:$0xff]
  %v29 = vld [vmem:[%s0 + $0x70] sm:$0xff]
  %v30 = vld [vmem:[%s0 + $0x78] sm:$0xff]
  %v31 = vld [vmem:[%s0 + $0x80] sm:$0xff]
  %v32 = vld [vmem:[%s0 + $0x88] sm:$0xff]
  %v33 = vld [vmem:[%s0 + $0x90] sm:$0xff]
  %v34 = vld [vmem:[%s0 + $0x98] sm:$0xff]
  %v35 = vld [vmem:[%s0 + $0xa0] sm:$0xff]
  %v36 = vld [vmem:[%s0 + $0xa8] sm:$0xff]
  %v37 = vld [vmem:[%s0 + $0xb0] sm:$0xff]
  %v38 = vld [vmem:[%s0 + $0xb8] sm:$0xff]
  %v39 = vld [vmem:[%s0 + $0xc0] sm:$0xff]
  %v40 = vld [vmem:[%s0 + $0xc8] sm:$0xff]
  %v41 = vld [vmem:[%s0 + $0xd0] sm:$0xff]
  %v42 = vld [vmem:[%s0 + $0xd8] sm:$0xff]
  %v43 = vld [vmem:[%s0 + $0xe0] sm:$0xff]
  %v44 = vld [vmem:[%s0 + $0xe8] sm:$0xff]
  %v45 = vld [vmem:[%s0 + $0xf0] sm:$0xff]
  %v46 = vld [vmem:[%s0 + $0xf8] sm:$0xff]
  %v47 = vld [vmem:[%s0 + $0x100] sm:$0xff]
  %v48 = vld [vmem:[%s0 + $0x108] sm:$0xff]
  %v49 = vld [vmem:[%s0 + $0x110] sm:$0xff]
  %v50 = vld [vmem:[%s0 + $0x118] sm:$0xff]
  %v51 = vld [vmem:[%s0 + $0x120] sm:$0xff]
  %v52 = vld [vmem:[%s0 + $0x128] sm:$0xff]
  %v53 = vld [vmem:[%s0 + $0x130] sm:$0xff]
  %v54 = vld [vmem:[%s0 + $0x138] sm:$0xff]
  %v55 = vld [vmem:[%s0 + $0x140] sm:$0xff]
  %v56 = vld [vmem:[%s0 + $0x148] sm:$0xff]
  %v57 = vld [vmem:[%s0 + $0x150] sm:$0xff]
  %v58 = vld [vmem:[%s0 + $0x158] sm:$0xff]
  %v59 = vld [vmem:[%s0 + $0x160] sm:$0xff]
  %v60 = vld [vmem:[%s0 + $0x168] sm:$0xff]
  %v61 = vld [vmem:[%s0 + $0x170] sm:$0xff]
  %v62 = vld [vmem:[%s0 + $0x178] sm:$0xff]
  %v63 = vld [vmem:[%s0 + $0x180] sm:$0xff]
  %v64 = vld [vmem:[%s0 + $0x188] sm:$0xff]
  %v65 = vld [vmem:[%s0 + $0x190] sm:$0xff]
  %v66 = vld [vmem:[%s0 + $0x198] sm:$0xff]
  %v67 = vld [vmem:[%s0 + $0x1a0] sm:$0xff]
  %v68 = vld [vmem:[%s0 + $0x1a8] sm:$0xff]
  %v69 = vld [vmem:[%s0 + $0x1b0] sm:$0xff]
  %v70 = vld [vmem:[%s0 + $0x1b8] sm:$0xff]
  %v71 = vld [vmem:[%s0 + $0x1c0] sm:$0xff]
  %v72 = vld [vmem:[%s0 + $0x1c8] sm:$0xff]
  %v73 = vld [vmem:[%s0 + $0x1d0] sm:$0xff]
  %v74 = vld [vmem:[%s0 + $0x1d8] sm:$0xff]
  %v75 = vld [vmem:[%s0 + $0x1e0] sm:$0xff]
  %v76 = vld [vmem:[%s0 + $0x1e8] sm:$0xff]
  %v77 = vld [vmem:[%s0 + $0x1f0] sm:$0xff]
  %v78 = vld [vmem:[%s0 + $0x1f8] sm:$0xff]
  %v79 = vld [vmem:[%s0 + $0x200] sm:$0xff]
  %v80 = vld [vmem:[%s0 + $0x208] sm:$0xff]
  %v81 = vld [vmem:[%s0 + $0x210] sm:$0xff]
  %v82 = vld [vmem:[%s0 + $0x218] sm:$0xff]
  %v83 = vld [vmem:[%s0 + $0x220] sm:$0xff]
  %v84 = vld [vmem:[%s0 + $0x228] sm:$0xff]
  %v85 = vld [vmem:[%s0 + $0x230] sm:$0xff]
  %v86 = vld [vmem:[%s0 + $0x238] sm:$0xff]
  %v87 = vld [vmem:[%s0 + $0x240] sm:$0xff]
  %v88 = vld [vmem:[%s0 + $0x248] sm:$0xff]
  %v89 = vld [vmem:[%s0 + $0x250] sm:$0xff]
  %v90 = vld [vmem:[%s0 + $0x258] sm:$0xff]
  %v91 = vld [vmem:[%s0 + $0x260] sm:$0xff]
  %v92 = vld [vmem:[%s0 + $0x268] sm:$0xff]
  %v93 = vld [vmem:[%s0 + $0x270] sm:$0xff]
  %v94 = vld [vmem:[%s0 + $0x278] sm:$0xff]
  %v95 = vld [vmem:[%s0 + $0x280] sm:$0xff]
  %v96 = vld [vmem:[%s0 + $0x288] sm:$0xff]
  %v97 = vld [vmem:[%s0 + $0x290] sm:$0xff]
  %v98 = vld [vmem:[%s0 + $0x298] sm:$0xff]
  %v99 = vld [vmem:[%s0 + $0x2a0] sm:$0xff]
  %v100 = vld [vmem:[%s0 + $0x2a8] sm:$0xff]
  %v101 = vld [vmem:[%s0 + $0x2b0] sm:$0xff]
  %v102 = vld [vmem:[%s0 + $0x2b8] sm:$0xff]
  %v103 = vld [vmem:[%s0 + $0x2c0] sm:$0xff]
  %v104 = vld [vmem:[%s0 + $0x2c8] sm:$0xff]
  %v105 = vld [vmem:[%s0 + $0x2d0] sm:$0xff]
  %v106 = vld [vmem:[%s0 + $0x2d8] sm:$0xff]
  %v107 = vld [vmem:[%s0 + $0x2e0] sm:$0xff]
  %v108 = vld [vmem:[%s0 + $0x2e8] sm:$0xff]
  %v109 = vld [vmem:[%s0 + $0x2f0] sm:$0xff]
  %v110 = vld [vmem:[%s0 + $0x2f8] sm:$0xff]
  %v111 = vld [vmem:[%s0 + $0x300] sm:$0xff]
  %v112 = vld [vmem:[%s0 + $0x308] sm:$0xff]
  %v113 = vld [vmem:[%s0 + $0x310] sm:$0xff]
  %v114 = vld [vmem:[%s0 + $0x318] sm:$0xff]
  %v115 = vld [vmem:[%s0 + $0x320] sm:$0xff]
  %v116 = vld [vmem:[%s0 + $0x328] sm:$0xff]
  %v117 = vld [vmem:[%s0 + $0x330] sm:$0xff]
  %v118 = vld [vmem:[%s0 + $0x338] sm:$0xff]
  %v119 = vld [vmem:[%s0 + $0x340] sm:$0xff]
  %v120 = vld [vmem:[%s0 + $0x348] sm:$0xff]
  %v121 = vld [vmem:[%s0 + $0x350] sm:$0xff]
  %v122 = vld [vmem:[%s0 + $0x358] sm:$0xff]
  %v123 = vld [vmem:[%s0 + $0x360] sm:$0xff]
  %v124 = vld [vmem:[%s0 + $0x368] sm:$0xff]
  %v125 = vld [vmem:[%s0 + $0x370] sm:$0xff]
  %v126 = vld [vmem:[%s0 + $0x378] sm:$0xff]
  %v127 = vld [vmem:[%s0 + $0x380] sm:$0xff]
  %v128 = vld [vmem:[%s0 + $0x388] sm:$0xff]
  %v129 = vld [vmem:[%s0 + $0x390] sm:$0xff]
  %v130 = vld [vmem:[%s0 + $0x398] sm:$0xff]
  %v131 = vld [vmem:[%s0 + $0x3a0] sm:$0xff]
  %v132 = vld [vmem:[%s0 + $0x3a8] sm:$0xff]
  %v133 = vld [vmem:[%s0 + $0x3b0] sm:$0xff]
  %v134 = vld [vmem:[%s0 + $0x3b8] sm:$0xff]
  %v135 = vld [vmem:[%s0 + $0x3c0] sm:$0xff]
  %v136 = vld [vmem:[%s0 + $0x3c8] sm:$0xff]
  %v137 = vld [vmem:[%s0 + $0x3d0] sm:$0xff]
  %v138 = vld [vmem:[%s0 + $0x3d8] sm:$0xff]
  %v139 = vld [vmem:[%s0 + $0x3e0] sm:$0xff]
  %v140 = vld [vmem:[%s0 + $0x3e8] sm:$0xff]
  %v141 = vld [vmem:[%s0 + $0x3f0] sm:$0xff]
  %v142 = vld [vmem:[%s0 + $0x3f8] sm:$0xff]
  %v143 = vld [vmem:[%s0 + $0x400] sm:$0xff]
  %v144 = vld [vmem:[%s0 + $0x408] sm:$0xff]
  %v145 = vld [vmem:[%s0 + $0x410] sm:$0xff]
  %v146 = vld [vmem:[%s0 + $0x418] sm:$0xff]
  %v147 = vld [vmem:[%s0 + $0x420] sm:$0xff]
  %v148 = vld [vmem:[%s0 + $0x428] sm:$0xff]
  %v149 = vld [vmem:[%s0 + $0x430] sm:$0xff]
  %v150 = vld [vmem:[%s0 + $0x438] sm:$0xff]
  %v151 = vld [vmem:[%s0 + $0x440] sm:$0xff]
  %v152 = vld [vmem:[%s0 + $0x448] sm:$0xff]
  %v153 = vld [vmem:[%s0 + $0x450] sm:$0xff]
  %v154 = vld [vmem:[%s0 + $0x458] sm:$0xff]
  %v155 = vld [vmem:[%s0 + $0x460] sm:$0xff]
  %v156 = vld [vmem:[%s0 + $0x468] sm:$0xff]
  %v157 = vld [vmem:[%s0 + $0x470] sm:$0xff]
  %v158 = vld [vmem:[%s0 + $0x478] sm:$0xff]
  %v159 = vld [vmem:[%s0 + $0x480] sm:$0xff]
  %v160 = vld [vmem:[%s0 + $0x488] sm:$0xff]
  %v161 = vld [vmem:[%s0 + $0x490] sm:$0xff]
  %v162 = vld [vmem:[%s0 + $0x498] sm:$0xff]
  %v163 = vld [vmem:[%s0 + $0x4a0] sm:$0xff]
  %v164 = vld [vmem:[%s0 + $0x4a8] sm:$0xff]
  %v165 = vld [vmem:[%s0 + $0x4b0] sm:$0xff]
  %v166 = vld [vmem:[%s0 + $0x4b8] sm:$0xff]
  %v167 = vld [vmem:[%s0 + $0x4c0] sm:$0xff]
  %v168 = vld [vmem:[%s0 + $0x4c8] sm:$0xff]
  %v169 = vld [vmem:[%s0 + $0x4d0] sm:$0xff]
  %v170 = vld [vmem:[%s0 + $0x4d8] sm:$0xff]
  %v171 = vld [vmem:[%s0 + $0x4e0] sm:$0xff]
  %v172 = vld [vmem:[%s0 + $0x4e8] sm:$0xff]
  %v173 = vld [vmem:[%s0 + $0x4f0] sm:$0xff]
  %v174 = vld [vmem:[%s0 + $0x4f8] sm:$0xff]
  %v175 = vld [vmem:[%s0 + $0x500] sm:$0xff]
  %v176 = vld [vmem:[%s0 + $0x508] sm:$0xff]
  %v177 = vld [vmem:[%s0 + $0x510] sm:$0xff]
  %v178 = vld [vmem:[%s0 + $0x518] sm:$0xff]
  %v179 = vld [vmem:[%s0 + $0x520] sm:$0xff]
  %v180 = vld [vmem:[%s0 + $0x528] sm:$0xff]
  %v181 = vld [vmem:[%s0 + $0x530] sm:$0xff]
  %v182 = vld [vmem:[%s0 + $0x538] sm:$0xff]
  %v183 = vld [vmem:[%s0 + $0x540] sm:$0xff]
  %v184 = vld [vmem:[%s0 + $0x548] sm:$0xff]
  %v185 = vld [vmem:[%s0 + $0x550] sm:$0xff]
  %v186 = vld [vmem:[%s0 + $0x558] sm:$0xff]
  %v187 = vld [vmem:[%s0 + $0x560] sm:$0xff]
  %v188 = vld [vmem:[%s0 + $0x568] sm:$0xff]
  %v189 = vld [vmem:[%s0 + $0x570] sm:$0xff]
  %v190 = vld [vmem:[%s0 + $0x578] sm:$0xff]
  %v191 = vld [vmem:[%s0 + $0x580] sm:$0xff]
  %v192 = vld [vmem:[%s0 + $0x588] sm:$0xff]
  %v193 = vld [vmem:[%s0 + $0x590] sm:$0xff]
  %v194 = vld [vmem:[%s0 + $0x598] sm:$0xff]
  %v195 = vld [vmem:[%s0 + $0x5a0] sm:$0xff]
  %v196 = vld [vmem:[%s0 + $0x5a8] sm:$0xff]
  %v197 = vld [vmem:[%s0 + $0x5b0] sm:$0xff]
  %v198 = vld [vmem:[%s0 + $0x5b8] sm:$0xff]
  %v199 = vld [vmem:[%s0 + $0x5c0] sm:$0xff]
  %v200 = vld [vmem:[%s0 + $0x5c8] sm:$0xff]
  %v201 = vld [vmem:[%s0 + $0x5d0] sm:$0xff]
  %v202 = vld [vmem:[%s0 + $0x5d8] sm:$0xff]
  %v203 = vld [vmem:[%s0 + $0x5e0] sm:$0xff]
  %v204 = vld [vmem:[%s0 + $0x5e8] sm:$0xff]
  %v205 = vld [vmem:[%s0 + $0x5f0] sm:$0xff]
  %v206 = vld [vmem:[%s0 + $0x5f8] sm:$0xff]
  %v207 = vld [vmem:[%s0 + $0x600] sm:$0xff]
  %v208 = vld [vmem:[%s0 + $0x608] sm:$0xff]
  %v209 = vld [vmem:[%s0 + $0x610] sm:$0xff]
  %v210 = vld [vmem:[%s0 + $0x618] sm:$0xff]
  %v211 = vld [vmem:[%s0 + $0x620] sm:$0xff]
  %v212 = vld [vmem:[%s0 + $0x628] sm:$0xff]
  %v213 = vld [vmem:[%s0 + $0x630] sm:$0xff]
  %v214 = vld [vmem:[%s0 + $0x638] sm:$0xff]
  %v215 = vld [vmem:[%s0 + $0x640] sm:$0xff]
  %v216 = vld [vmem:[%s0 + $0x648] sm:$0xff]
  %v217 = vld [vmem:[%s0 + $0x650] sm:$0xff]
  %v218 = vld [vmem:[%s0 + $0x658] sm:$0xff]
  %v219 = vld [vmem:[%s0 + $0x660] sm:$0xff]
  %v220 = vld [vmem:[%s0 + $0x668] sm:$0xff]
  %v221 = vld [vmem:[%s0 + $0x670] sm:$0xff]
  %v222 = vld [vmem:[%s0 + $0x678] sm:$0xff]
  %v223 = vld [vmem:[%s0 + $0x680] sm:$0xff]
  %v224 = vld [vmem:[%s0 + $0x688] sm:$0xff]
  %v225 = vld [vmem:[%s0 + $0x690] sm:$0xff]
  %v226 = vld [vmem:[%s0 + $0x698] sm:$0xff]
  %v227 = vld [vmem:[%s0 + $0x6a0] sm:$0xff]
  %v228 = vld [vmem:[%s0 + $0x6a8] sm:$0xff]
  %v229 = vld [vmem:[%s0 + $0x6b0] sm:$0xff]
  %v230 = vld [vmem:[%s0 + $0x6b8] sm:$0xff]
  %v231 = vld [vmem:[%s0 + $0x6c0] sm:$0xff]
  %v232 = vld [vmem:[%s0 + $0x6c8] sm:$0xff]
  %v233 = vld [vmem:[%s0 + $0x6d0] sm:$0xff]
  %v234 = vld [vmem:[%s0 + $0x6d8] sm:$0xff]
  %v235 = vld [vmem:[%s0 + $0x6e0] sm:$0xff]
  %v236 = vld [vmem:[%s0 + $0x6e8] sm:$0xff]
  %v237 = vld [vmem:[%s0 + $0x6f0] sm:$0xff]
  %v238 = vld [vmem:[%s0 + $0x6f8] sm:$0xff]
  %v239 = vld [vmem:[%s0 + $0x700] sm:$0xff]
  %v240 = vld [vmem:[%s0 + $0x708] sm:$0xff]
  %v241 = vld [vmem:[%s0 + $0x710] sm:$0xff]
  %v242 = vld [vmem:[%s0 + $0x718] sm:$0xff]
  %v243 = vld [vmem:[%s0 + $0x720] sm:$0xff]
  %v244 = vld [vmem:[%s0 + $0x728] sm:$0xff]
  %v245 = vld [vmem:[%s0 + $0x730] sm:$0xff]
  %v246 = vld [vmem:[%s0 + $0x738] sm:$0xff]
  %v247 = vld [vmem:[%s0 + $0x740] sm:$0xff]
  %v248 = vld [vmem:[%s0 + $0x748] sm:$0xff]
  %v249 = vld [vmem:[%s0 + $0x750] sm:$0xff]
  %v250 = vld [vmem:[%s0 + $0x758] sm:$0xff]
  %v251 = vld [vmem:[%s0 + $0x760] sm:$0xff]
  %v252 = vld [vmem:[%s0 + $0x768] sm:$0xff]
  %v253 = vld [vmem:[%s0 + $0x770] sm:$0xff]
  %v254 = vld [vmem:[%s0 + $0x778] sm:$0xff]
  %v255 = vld [vmem:[%s0 + $0x780] sm:$0xff]
  %v256 = vld [vmem:[%s0 + $0x788] sm:$0xff]
  %v257 = vld [vmem:[%s0 + $0x790] sm:$0xff]
  %v258 = vld [vmem:[%s0 + $0x798] sm:$0xff]
  %v259 = vld [vmem:[%s0 + $0x7a0] sm:$0xff]
  %v260 = vld [vmem:[%s0 + $0x7a8] sm:$0xff]
  %v261 = vld [vmem:[%s0 + $0x7b0] sm:$0xff]
  %v262 = vld [vmem:[%s0 + $0x7b8] sm:$0xff]
  %v263 = vld [vmem:[%s0 + $0x7c0] sm:$0xff]
  %v264 = vld [vmem:[%s0 + $0x7c8] sm:$0xff]
  %v265 = vld [vmem:[%s0 + $0x7d0] sm:$0xff]
  %v266 = vld [vmem:[%s0 + $0x7d8] sm:$0xff]
  %v267 = vld [vmem:[%s0 + $0x7e0] sm:$0xff]
  %v268 = vld [vmem:[%s0 + $0x7e8] sm:$0xff]
  %v269 = vld [vmem:[%s0 + $0x7f0] sm:$0xff]
  %v270 = vld [vmem:[%s0 + $0x7f8] sm:$0xff]
  %v271 = vld [vmem:[%s1] sm:$0xf]
  %v272 = vld [vmem:[%s1 + $0x4] sm:$0xf]
  %v273 = vld [vmem:[%s1 + $0x8] sm:$0xf]
  %v274 = vld [vmem:[%s1 + $0xc] sm:$0xf]
  %v275 = vld [vmem:[%s1 + $0x10] sm:$0xf]
  %v276 = vld [vmem:[%s1 + $0x14] sm:$0xf]
  %v277 = vld [vmem:[%s1 + $0x18] sm:$0xf]
  %v278 = vld [vmem:[%s1 + $0x1c] sm:$0xf]
  %v279 = vld [vmem:[%s1 + $0x20] sm:$0xf]
  %v280 = vld [vmem:[%s1 + $0x24] sm:$0xf]
  %v281 = vld [vmem:[%s1 + $0x28] sm:$0xf]
  %v282 = vld [vmem:[%s1 + $0x2c] sm:$0xf]
  %v283 = vld [vmem:[%s1 + $0x30] sm:$0xf]
  %v284 = vld [vmem:[%s1 + $0x34] sm:$0xf]
  %v285 = vld [vmem:[%s1 + $0x38] sm:$0xf]
  %v286 = vld [vmem:[%s1 + $0x3c] sm:$0xf]
  %v287 = vld [vmem:[%s1 + $0x40] sm:$0xf]
  %v288 = vld [vmem:[%s1 + $0x44] sm:$0xf]
  %v289 = vld [vmem:[%s1 + $0x48] sm:$0xf]
  %v290 = vld [vmem:[%s1 + $0x4c] sm:$0xf]
  %v291 = vld [vmem:[%s1 + $0x50] sm:$0xf]
  %v292 = vld [vmem:[%s1 + $0x54] sm:$0xf]
  %v293 = vld [vmem:[%s1 + $0x58] sm:$0xf]
  %v294 = vld [vmem:[%s1 + $0x5c] sm:$0xf]
  %v295 = vld [vmem:[%s1 + $0x60] sm:$0xf]
  %v296 = vld [vmem:[%s1 + $0x64] sm:$0xf]
  %v297 = vld [vmem:[%s1 + $0x68] sm:$0xf]
  %v298 = vld [vmem:[%s1 + $0x6c] sm:$0xf]
  %v299 = vld [vmem:[%s1 + $0x70] sm:$0xf]
  %v300 = vld [vmem:[%s1 + $0x74] sm:$0xf]
  %v301 = vld [vmem:[%s1 + $0x78] sm:$0xf]
  %v302 = vld [vmem:[%s1 + $0x7c] sm:$0xf]
  %v303 = vld [vmem:[%s1 + $0x80] sm:$0xf]
  %v304 = vld [vmem:[%s1 + $0x84] sm:$0xf]
  %v305 = vld [vmem:[%s1 + $0x88] sm:$0xf]
  %v306 = vld [vmem:[%s1 + $0x8c] sm:$0xf]
  %v307 = vld [vmem:[%s1 + $0x90] sm:$0xf]
  %v308 = vld [vmem:[%s1 + $0x94] sm:$0xf]
  %v309 = vld [vmem:[%s1 + $0x98] sm:$0xf]
  %v310 = vld [vmem:[%s1 + $0x9c] sm:$0xf]
  %v311 = vld [vmem:[%s1 + $0xa0] sm:$0xf]
  %v312 = vld [vmem:[%s1 + $0xa4] sm:$0xf]
  %v313 = vld [vmem:[%s1 + $0xa8] sm:$0xf]
  %v314 = vld [vmem:[%s1 + $0xac] sm:$0xf]
  %v315 = vld [vmem:[%s1 + $0xb0] sm:$0xf]
  %v316 = vld [vmem:[%s1 + $0xb4] sm:$0xf]
  %v317 = vld [vmem:[%s1 + $0xb8] sm:$0xf]
  %v318 = vld [vmem:[%s1 + $0xbc] sm:$0xf]
  %v319 = vld [vmem:[%s1 + $0xc0] sm:$0xf]
  %v320 = vld [vmem:[%s1 + $0xc4] sm:$0xf]
  %v321 = vld [vmem:[%s1 + $0xc8] sm:$0xf]
  %v322 = vld [vmem:[%s1 + $0xcc] sm:$0xf]
  %v323 = vld [vmem:[%s1 + $0xd0] sm:$0xf]
  %v324 = vld [vmem:[%s1 + $0xd4] sm:$0xf]
  %v325 = vld [vmem:[%s1 + $0xd8] sm:$0xf]
  %v326 = vld [vmem:[%s1 + $0xdc] sm:$0xf]
  %v327 = vld [vmem:[%s1 + $0xe0] sm:$0xf]
  %v328 = vld [vmem:[%s1 + $0xe4] sm:$0xf]
  %v329 = vld [vmem:[%s1 + $0xe8] sm:$0xf]
  %v330 = vld [vmem:[%s1 + $0xec] sm:$0xf]
  %v331 = vld [vmem:[%s1 + $0xf0] sm:$0xf]
  %v332 = vld [vmem:[%s1 + $0xf4] sm:$0xf]
  %v333 = vld [vmem:[%s1 + $0xf8] sm:$0xf]
  %v334 = vld [vmem:[%s1 + $0xfc] sm:$0xf]
  %v335 = vld [vmem:[%s1 + $0x100] sm:$0xf]
  %v336 = vld [vmem:[%s1 + $0x104] sm:$0xf]
  %v337 = vld [vmem:[%s1 + $0x108] sm:$0xf]
  %v338 = vld [vmem:[%s1 + $0x10c] sm:$0xf]
  %v339 = vld [vmem:[%s1 + $0x110] sm:$0xf]
  %v340 = vld [vmem:[%s1 + $0x114] sm:$0xf]
  %v341 = vld [vmem:[%s1 + $0x118] sm:$0xf]
  %v342 = vld [vmem:[%s1 + $0x11c] sm:$0xf]
  %v343 = vld [vmem:[%s1 + $0x120] sm:$0xf]
  %v344 = vld [vmem:[%s1 + $0x124] sm:$0xf]
  %v345 = vld [vmem:[%s1 + $0x128] sm:$0xf]
  %v346 = vld [vmem:[%s1 + $0x12c] sm:$0xf]
  %v347 = vld [vmem:[%s1 + $0x130] sm:$0xf]
  %v348 = vld [vmem:[%s1 + $0x134] sm:$0xf]
  %v349 = vld [vmem:[%s1 + $0x138] sm:$0xf]
  %v350 = vld [vmem:[%s1 + $0x13c] sm:$0xf]
  %v351 = vld [vmem:[%s1 + $0x140] sm:$0xf]
  %v352 = vld [vmem:[%s1 + $0x144] sm:$0xf]
  %v353 = vld [vmem:[%s1 + $0x148] sm:$0xf]
  %v354 = vld [vmem:[%s1 + $0x14c] sm:$0xf]
  %v355 = vld [vmem:[%s1 + $0x150] sm:$0xf]
  %v356 = vld [vmem:[%s1 + $0x154] sm:$0xf]
  %v357 = vld [vmem:[%s1 + $0x158] sm:$0xf]
  %v358 = vld [vmem:[%s1 + $0x15c] sm:$0xf]
  %v359 = vld [vmem:[%s1 + $0x160] sm:$0xf]
  %v360 = vld [vmem:[%s1 + $0x164] sm:$0xf]
  %v361 = vld [vmem:[%s1 + $0x168] sm:$0xf]
  %v362 = vld [vmem:[%s1 + $0x16c] sm:$0xf]
  %v363 = vld [vmem:[%s1 + $0x170] sm:$0xf]
  %v364 = vld [vmem:[%s1 + $0x174] sm:$0xf]
  %v365 = vld [vmem:[%s1 + $0x178] sm:$0xf]
  %v366 = vld [vmem:[%s1 + $0x17c] sm:$0xf]
  %v367 = vld [vmem:[%s1 + $0x180] sm:$0xf]
  %v368 = vld [vmem:[%s1 + $0x184] sm:$0xf]
  %v369 = vld [vmem:[%s1 + $0x188] sm:$0xf]
  %v370 = vld [vmem:[%s1 + $0x18c] sm:$0xf]
  %v371 = vld [vmem:[%s1 + $0x190] sm:$0xf]
  %v372 = vld [vmem:[%s1 + $0x194] sm:$0xf]
  %v373 = vld [vmem:[%s1 + $0x198] sm:$0xf]
  %v374 = vld [vmem:[%s1 + $0x19c] sm:$0xf]
  %v375 = vld [vmem:[%s1 + $0x1a0] sm:$0xf]
  %v376 = vld [vmem:[%s1 + $0x1a4] sm:$0xf]
  %v377 = vld [vmem:[%s1 + $0x1a8] sm:$0xf]
  %v378 = vld [vmem:[%s1 + $0x1ac] sm:$0xf]
  %v379 = vld [vmem:[%s1 + $0x1b0] sm:$0xf]
  %v380 = vld [vmem:[%s1 + $0x1b4] sm:$0xf]
  %v381 = vld [vmem:[%s1 + $0x1b8] sm:$0xf]
  %v382 = vld [vmem:[%s1 + $0x1bc] sm:$0xf]
  %v383 = vld [vmem:[%s1 + $0x1c0] sm:$0xf]
  %v384 = vld [vmem:[%s1 + $0x1c4] sm:$0xf]
  %v385 = vld [vmem:[%s1 + $0x1c8] sm:$0xf]
  %v386 = vld [vmem:[%s1 + $0x1cc] sm:$0xf]
  %v387 = vld [vmem:[%s1 + $0x1d0] sm:$0xf]
  %v388 = vld [vmem:[%s1 + $0x1d4] sm:$0xf]
  %v389 = vld [vmem:[%s1 + $0x1d8] sm:$0xf]
  %v390 = vld [vmem:[%s1 + $0x1dc] sm:$0xf]
  %v391 = vld [vmem:[%s1 + $0x1e0] sm:$0xf]
  %v392 = vld [vmem:[%s1 + $0x1e4] sm:$0xf]
  %v393 = vld [vmem:[%s1 + $0x1e8] sm:$0xf]
  %v394 = vld [vmem:[%s1 + $0x1ec] sm:$0xf]
  %v395 = vld [vmem:[%s1 + $0x1f0] sm:$0xf]
  %v396 = vld [vmem:[%s1 + $0x1f4] sm:$0xf]
  %v397 = vld [vmem:[%s1 + $0x1f8] sm:$0xf]
  %v398 = vld [vmem:[%s1 + $0x1fc] sm:$0xf]
  %v399 = vld [vmem:[%s1 + $0x200] sm:$0xf]
  %v400 = vld [vmem:[%s1 + $0x204] sm:$0xf]
  %v401 = vld [vmem:[%s1 + $0x208] sm:$0xf]
  %v402 = vld [vmem:[%s1 + $0x20c] sm:$0xf]
  %v403 = vld [vmem:[%s1 + $0x210] sm:$0xf]
  %v404 = vld [vmem:[%s1 + $0x214] sm:$0xf]
  %v405 = vld [vmem:[%s1 + $0x218] sm:$0xf]
  %v406 = vld [vmem:[%s1 + $0x21c] sm:$0xf]
  %v407 = vld [vmem:[%s1 + $0x220] sm:$0xf]
  %v408 = vld [vmem:[%s1 + $0x224] sm:$0xf]
  %v409 = vld [vmem:[%s1 + $0x228] sm:$0xf]
  %v410 = vld [vmem:[%s1 + $0x22c] sm:$0xf]
  %v411 = vld [vmem:[%s1 + $0x230] sm:$0xf]
  %v412 = vld [vmem:[%s1 + $0x234] sm:$0xf]
  %v413 = vld [vmem:[%s1 + $0x238] sm:$0xf]
  %v414 = vld [vmem:[%s1 + $0x23c] sm:$0xf]
  %v415 = vld [vmem:[%s1 + $0x240] sm:$0xf]
  %v416 = vld [vmem:[%s1 + $0x244] sm:$0xf]
  %v417 = vld [vmem:[%s1 + $0x248] sm:$0xf]
  %v418 = vld [vmem:[%s1 + $0x24c] sm:$0xf]
  %v419 = vld [vmem:[%s1 + $0x250] sm:$0xf]
  %v420 = vld [vmem:[%s1 + $0x254] sm:$0xf]
  %v421 = vld [vmem:[%s1 + $0x258] sm:$0xf]
  %v422 = vld [vmem:[%s1 + $0x25c] sm:$0xf]
  %v423 = vld [vmem:[%s1 + $0x260] sm:$0xf]
  %v424 = vld [vmem:[%s1 + $0x264] sm:$0xf]
  %v425 = vld [vmem:[%s1 + $0x268] sm:$0xf]
  %v426 = vld [vmem:[%s1 + $0x26c] sm:$0xf]
  %v427 = vld [vmem:[%s1 + $0x270] sm:$0xf]
  %v428 = vld [vmem:[%s1 + $0x274] sm:$0xf]
  %v429 = vld [vmem:[%s1 + $0x278] sm:$0xf]
  %v430 = vld [vmem:[%s1 + $0x27c] sm:$0xf]
  %v431 = vld [vmem:[%s1 + $0x280] sm:$0xf]
  %v432 = vld [vmem:[%s1 + $0x284] sm:$0xf]
  %v433 = vld [vmem:[%s1 + $0x288] sm:$0xf]
  %v434 = vld [vmem:[%s1 + $0x28c] sm:$0xf]
  %v435 = vld [vmem:[%s1 + $0x290] sm:$0xf]
  %v436 = vld [vmem:[%s1 + $0x294] sm:$0xf]
  %v437 = vld [vmem:[%s1 + $0x298] sm:$0xf]
  %v438 = vld [vmem:[%s1 + $0x29c] sm:$0xf]
  %v439 = vld [vmem:[%s1 + $0x2a0] sm:$0xf]
  %v440 = vld [vmem:[%s1 + $0x2a4] sm:$0xf]
  %v441 = vld [vmem:[%s1 + $0x2a8] sm:$0xf]
  %v442 = vld [vmem:[%s1 + $0x2ac] sm:$0xf]
  %v443 = vld [vmem:[%s1 + $0x2b0] sm:$0xf]
  %v444 = vld [vmem:[%s1 + $0x2b4] sm:$0xf]
  %v445 = vld [vmem:[%s1 + $0x2b8] sm:$0xf]
  %v446 = vld [vmem:[%s1 + $0x2bc] sm:$0xf]
  %v447 = vld [vmem:[%s1 + $0x2c0] sm:$0xf]
  %v448 = vld [vmem:[%s1 + $0x2c4] sm:$0xf]
  %v449 = vld [vmem:[%s1 + $0x2c8] sm:$0xf]
  %v450 = vld [vmem:[%s1 + $0x2cc] sm:$0xf]
  %v451 = vld [vmem:[%s1 + $0x2d0] sm:$0xf]
  %v452 = vld [vmem:[%s1 + $0x2d4] sm:$0xf]
  %v453 = vld [vmem:[%s1 + $0x2d8] sm:$0xf]
  %v454 = vld [vmem:[%s1 + $0x2dc] sm:$0xf]
  %v455 = vld [vmem:[%s1 + $0x2e0] sm:$0xf]
  %v456 = vld [vmem:[%s1 + $0x2e4] sm:$0xf]
  %v457 = vld [vmem:[%s1 + $0x2e8] sm:$0xf]
  %v458 = vld [vmem:[%s1 + $0x2ec] sm:$0xf]
  %v459 = vld [vmem:[%s1 + $0x2f0] sm:$0xf]
  %v460 = vld [vmem:[%s1 + $0x2f4] sm:$0xf]
  %v461 = vld [vmem:[%s1 + $0x2f8] sm:$0xf]
  %v462 = vld [vmem:[%s1 + $0x2fc] sm:$0xf]
  %v463 = vld [vmem:[%s1 + $0x300] sm:$0xf]
  %v464 = vld [vmem:[%s1 + $0x304] sm:$0xf]
  %v465 = vld [vmem:[%s1 + $0x308] sm:$0xf]
  %v466 = vld [vmem:[%s1 + $0x30c] sm:$0xf]
  %v467 = vld [vmem:[%s1 + $0x310] sm:$0xf]
  %v468 = vld [vmem:[%s1 + $0x314] sm:$0xf]
  %v469 = vld [vmem:[%s1 + $0x318] sm:$0xf]
  %v470 = vld [vmem:[%s1 + $0x31c] sm:$0xf]
  %v471 = vld [vmem:[%s1 + $0x320] sm:$0xf]
  %v472 = vld [vmem:[%s1 + $0x324] sm:$0xf]
  %v473 = vld [vmem:[%s1 + $0x328] sm:$0xf]
  %v474 = vld [vmem:[%s1 + $0x32c] sm:$0xf]
  %v475 = vld [vmem:[%s1 + $0x330] sm:$0xf]
  %v476 = vld [vmem:[%s1 + $0x334] sm:$0xf]
  %v477 = vld [vmem:[%s1 + $0x338] sm:$0xf]
  %v478 = vld [vmem:[%s1 + $0x33c] sm:$0xf]
  %v479 = vld [vmem:[%s1 + $0x340] sm:$0xf]
  %v480 = vld [vmem:[%s1 + $0x344] sm:$0xf]
  %v481 = vld [vmem:[%s1 + $0x348] sm:$0xf]
  %v482 = vld [vmem:[%s1 + $0x34c] sm:$0xf]
  %v483 = vld [vmem:[%s1 + $0x350] sm:$0xf]
  %v484 = vld [vmem:[%s1 + $0x354] sm:$0xf]
  %v485 = vld [vmem:[%s1 + $0x358] sm:$0xf]
  %v486 = vld [vmem:[%s1 + $0x35c] sm:$0xf]
  %v487 = vld [vmem:[%s1 + $0x360] sm:$0xf]
  %v488 = vld [vmem:[%s1 + $0x364] sm:$0xf]
  %v489 = vld [vmem:[%s1 + $0x368] sm:$0xf]
  %v490 = vld [vmem:[%s1 + $0x36c] sm:$0xf]
  %v491 = vld [vmem:[%s1 + $0x370] sm:$0xf]
  %v492 = vld [vmem:[%s1 + $0x374] sm:$0xf]
  %v493 = vld [vmem:[%s1 + $0x378] sm:$0xf]
  %v494 = vld [vmem:[%s1 + $0x37c] sm:$0xf]
  %v495 = vld [vmem:[%s1 + $0x380] sm:$0xf]
  %v496 = vld [vmem:[%s1 + $0x384] sm:$0xf]
  %v497 = vld [vmem:[%s1 + $0x388] sm:$0xf]
  %v498 = vld [vmem:[%s1 + $0x38c] sm:$0xf]
  %v499 = vld [vmem:[%s1 + $0x390] sm:$0xf]
  %v500 = vld [vmem:[%s1 + $0x394] sm:$0xf]
  %v501 = vld [vmem:[%s1 + $0x398] sm:$0xf]
  %v502 = vld [vmem:[%s1 + $0x39c] sm:$0xf]
  %v503 = vld [vmem:[%s1 + $0x3a0] sm:$0xf]
  %v504 = vld [vmem:[%s1 + $0x3a4] sm:$0xf]
  %v505 = vld [vmem:[%s1 + $0x3a8] sm:$0xf]
  %v506 = vld [vmem:[%s1 + $0x3ac] sm:$0xf]
  %v507 = vld [vmem:[%s1 + $0x3b0] sm:$0xf]
  %v508 = vld [vmem:[%s1 + $0x3b4] sm:$0xf]
  %v509 = vld [vmem:[%s1 + $0x3b8] sm:$0xf]
  %v510 = vld [vmem:[%s1 + $0x3bc] sm:$0xf]
  %v511 = vld [vmem:[%s1 + $0x3c0] sm:$0xf]
  %v512 = vld [vmem:[%s1 + $0x3c4] sm:$0xf]
  %v513 = vld [vmem:[%s1 + $0x3c8] sm:$0xf]
  %v514 = vld [vmem:[%s1 + $0x3cc] sm:$0xf]
  %v515 = vld [vmem:[%s1 + $0x3d0] sm:$0xf]
  %v516 = vld [vmem:[%s1 + $0x3d4] sm:$0xf]
  %v517 = vld [vmem:[%s1 + $0x3d8] sm:$0xf]
  %v518 = vld [vmem:[%s1 + $0x3dc] sm:$0xf]
  %v519 = vld [vmem:[%s1 + $0x3e0] sm:$0xf]
  %v520 = vld [vmem:[%s1 + $0x3e4] sm:$0xf]
  %v521 = vld [vmem:[%s1 + $0x3e8] sm:$0xf]
  %v522 = vld [vmem:[%s1 + $0x3ec] sm:$0xf]
  %v523 = vld [vmem:[%s1 + $0x3f0] sm:$0xf]
  %v524 = vld [vmem:[%s1 + $0x3f4] sm:$0xf]
  %v525 = vld [vmem:[%s1 + $0x3f8] sm:$0xf]
  %v526 = vld [vmem:[%s1 + $0x3fc] sm:$0xf]
  %v527 = vld [vmem:[%s1 + $0x400] sm:$0xf]
  %v528 = vld [vmem:[%s1 + $0x404] sm:$0xf]
  %v529 = vld [vmem:[%s1 + $0x408] sm:$0xf]
  %v530 = vld [vmem:[%s1 + $0x40c] sm:$0xf]
  %v531 = vld [vmem:[%s1 + $0x410] sm:$0xf]
  %v532 = vld [vmem:[%s1 + $0x414] sm:$0xf]
  %v533 = vld [vmem:[%s1 + $0x418] sm:$0xf]
  %v534 = vld [vmem:[%s1 + $0x41c] sm:$0xf]
  %v535 = vld [vmem:[%s1 + $0x420] sm:$0xf]
  %v536 = vld [vmem:[%s1 + $0x424] sm:$0xf]
  %v537 = vld [vmem:[%s1 + $0x428] sm:$0xf]
  %v538 = vld [vmem:[%s1 + $0x42c] sm:$0xf]
  %v539 = vld [vmem:[%s1 + $0x430] sm:$0xf]
  %v540 = vld [vmem:[%s1 + $0x434] sm:$0xf]
  %v541 = vld [vmem:[%s1 + $0x438] sm:$0xf]
  %v542 = vld [vmem:[%s1 + $0x43c] sm:$0xf]
  %v543 = vld [vmem:[%s1 + $0x440] sm:$0xf]
  %v544 = vld [vmem:[%s1 + $0x444] sm:$0xf]
  %v545 = vld [vmem:[%s1 + $0x448] sm:$0xf]
  %v546 = vld [vmem:[%s1 + $0x44c] sm:$0xf]
  %v547 = vld [vmem:[%s1 + $0x450] sm:$0xf]
  %v548 = vld [vmem:[%s1 + $0x454] sm:$0xf]
  %v549 = vld [vmem:[%s1 + $0x458] sm:$0xf]
  %v550 = vld [vmem:[%s1 + $0x45c] sm:$0xf]
  %v551 = vld [vmem:[%s1 + $0x460] sm:$0xf]
  %v552 = vld [vmem:[%s1 + $0x464] sm:$0xf]
  %v553 = vld [vmem:[%s1 + $0x468] sm:$0xf]
  %v554 = vld [vmem:[%s1 + $0x46c] sm:$0xf]
  %v555 = vld [vmem:[%s1 + $0x470] sm:$0xf]
  %v556 = vld [vmem:[%s1 + $0x474] sm:$0xf]
  %v557 = vld [vmem:[%s1 + $0x478] sm:$0xf]
  %v558 = vld [vmem:[%s1 + $0x47c] sm:$0xf]
  %v559 = vld [vmem:[%s1 + $0x480] sm:$0xf]
  %v560 = vld [vmem:[%s1 + $0x484] sm:$0xf]
  %v561 = vld [vmem:[%s1 + $0x488] sm:$0xf]
  %v562 = vld [vmem:[%s1 + $0x48c] sm:$0xf]
  %v563 = vld [vmem:[%s1 + $0x490] sm:$0xf]
  %v564 = vld [vmem:[%s1 + $0x494] sm:$0xf]
  %v565 = vld [vmem:[%s1 + $0x498] sm:$0xf]
  %v566 = vld [vmem:[%s1 + $0x49c] sm:$0xf]
  %v567 = vld [vmem:[%s1 + $0x4a0] sm:$0xf]
  %v568 = vld [vmem:[%s1 + $0x4a4] sm:$0xf]
  %v569 = vld [vmem:[%s1 + $0x4a8] sm:$0xf]
  %v570 = vld [vmem:[%s1 + $0x4ac] sm:$0xf]
  %v571 = vld [vmem:[%s1 + $0x4b0] sm:$0xf]
  %v572 = vld [vmem:[%s1 + $0x4b4] sm:$0xf]
  %v573 = vld [vmem:[%s1 + $0x4b8] sm:$0xf]
  %v574 = vld [vmem:[%s1 + $0x4bc] sm:$0xf]
  %v575 = vld [vmem:[%s1 + $0x4c0] sm:$0xf]
  %v576 = vld [vmem:[%s1 + $0x4c4] sm:$0xf]
  %v577 = vld [vmem:[%s1 + $0x4c8] sm:$0xf]
  %v578 = vld [vmem:[%s1 + $0x4cc] sm:$0xf]
  %v579 = vld [vmem:[%s1 + $0x4d0] sm:$0xf]
  %v580 = vld [vmem:[%s1 + $0x4d4] sm:$0xf]
  %v581 = vld [vmem:[%s1 + $0x4d8] sm:$0xf]
  %v582 = vld [vmem:[%s1 + $0x4dc] sm:$0xf]
  %v583 = vld [vmem:[%s1 + $0x4e0] sm:$0xf]
  %v584 = vld [vmem:[%s1 + $0x4e4] sm:$0xf]
  %v585 = vld [vmem:[%s1 + $0x4e8] sm:$0xf]
  %v586 = vld [vmem:[%s1 + $0x4ec] sm:$0xf]
  %v587 = vld [vmem:[%s1 + $0x4f0] sm:$0xf]
  %v588 = vld [vmem:[%s1 + $0x4f4] sm:$0xf]
  %v589 = vld [vmem:[%s1 + $0x4f8] sm:$0xf]
  %v590 = vld [vmem:[%s1 + $0x4fc] sm:$0xf]
  %v591 = vld [vmem:[%s1 + $0x500] sm:$0xf]
  %v592 = vld [vmem:[%s1 + $0x504] sm:$0xf]
  %v593 = vld [vmem:[%s1 + $0x508] sm:$0xf]
  %v594 = vld [vmem:[%s1 + $0x50c] sm:$0xf]
  %v595 = vld [vmem:[%s1 + $0x510] sm:$0xf]
  %v596 = vld [vmem:[%s1 + $0x514] sm:$0xf]
  %v597 = vld [vmem:[%s1 + $0x518] sm:$0xf]
  %v598 = vld [vmem:[%s1 + $0x51c] sm:$0xf]
  %v599 = vld [vmem:[%s1 + $0x520] sm:$0xf]
  %v600 = vld [vmem:[%s1 + $0x524] sm:$0xf]
  %v601 = vld [vmem:[%s1 + $0x528] sm:$0xf]
  %v602 = vld [vmem:[%s1 + $0x52c] sm:$0xf]
  %v603 = vld [vmem:[%s1 + $0x530] sm:$0xf]
  %v604 = vld [vmem:[%s1 + $0x534] sm:$0xf]
  %v605 = vld [vmem:[%s1 + $0x538] sm:$0xf]
  %v606 = vld [vmem:[%s1 + $0x53c] sm:$0xf]
  %v607 = vld [vmem:[%s1 + $0x540] sm:$0xf]
  %v608 = vld [vmem:[%s1 + $0x544] sm:$0xf]
  %v609 = vld [vmem:[%s1 + $0x548] sm:$0xf]
  %v610 = vld [vmem:[%s1 + $0x54c] sm:$0xf]
  %v611 = vld [vmem:[%s1 + $0x550] sm:$0xf]
  %v612 = vld [vmem:[%s1 + $0x554] sm:$0xf]
  %v613 = vld [vmem:[%s1 + $0x558] sm:$0xf]
  %v614 = vld [vmem:[%s1 + $0x55c] sm:$0xf]
  %v615 = vld [vmem:[%s1 + $0x560] sm:$0xf]
  %v616 = vld [vmem:[%s1 + $0x564] sm:$0xf]
  %v617 = vld [vmem:[%s1 + $0x568] sm:$0xf]
  %v618 = vld [vmem:[%s1 + $0x56c] sm:$0xf]
  %v619 = vld [vmem:[%s1 + $0x570] sm:$0xf]
  %v620 = vld [vmem:[%s1 + $0x574] sm:$0xf]
  %v621 = vld [vmem:[%s1 + $0x578] sm:$0xf]
  %v622 = vld [vmem:[%s1 + $0x57c] sm:$0xf]
  %v623 = vld [vmem:[%s1 + $0x580] sm:$0xf]
  %v624 = vld [vmem:[%s1 + $0x584] sm:$0xf]
  %v625 = vld [vmem:[%s1 + $0x588] sm:$0xf]
  %v626 = vld [vmem:[%s1 + $0x58c] sm:$0xf]
  %v627 = vld [vmem:[%s1 + $0x590] sm:$0xf]
  %v628 = vld [vmem:[%s1 + $0x594] sm:$0xf]
  %v629 = vld [vmem:[%s1 + $0x598] sm:$0xf]
  %v630 = vld [vmem:[%s1 + $0x59c] sm:$0xf]
  %v631 = vld [vmem:[%s1 + $0x5a0] sm:$0xf]
  %v632 = vld [vmem:[%s1 + $0x5a4] sm:$0xf]
  %v633 = vld [vmem:[%s1 + $0x5a8] sm:$0xf]
  %v634 = vld [vmem:[%s1 + $0x5ac] sm:$0xf]
  %v635 = vld [vmem:[%s1 + $0x5b0] sm:$0xf]
  %v636 = vld [vmem:[%s1 + $0x5b4] sm:$0xf]
  %v637 = vld [vmem:[%s1 + $0x5b8] sm:$0xf]
  %v638 = vld [vmem:[%s1 + $0x5bc] sm:$0xf]
  %v639 = vld [vmem:[%s1 + $0x5c0] sm:$0xf]
  %v640 = vld [vmem:[%s1 + $0x5c4] sm:$0xf]
  %v641 = vld [vmem:[%s1 + $0x5c8] sm:$0xf]
  %v642 = vld [vmem:[%s1 + $0x5cc] sm:$0xf]
  %v643 = vld [vmem:[%s1 + $0x5d0] sm:$0xf]
  %v644 = vld [vmem:[%s1 + $0x5d4] sm:$0xf]
  %v645 = vld [vmem:[%s1 + $0x5d8] sm:$0xf]
  %v646 = vld [vmem:[%s1 + $0x5dc] sm:$0xf]
  %v647 = vld [vmem:[%s1 + $0x5e0] sm:$0xf]
  %v648 = vld [vmem:[%s1 + $0x5e4] sm:$0xf]
  %v649 = vld [vmem:[%s1 + $0x5e8] sm:$0xf]
  %v650 = vld [vmem:[%s1 + $0x5ec] sm:$0xf]
  %v651 = vld [vmem:[%s1 + $0x5f0] sm:$0xf]
  %v652 = vld [vmem:[%s1 + $0x5f4] sm:$0xf]
  %v653 = vld [vmem:[%s1 + $0x5f8] sm:$0xf]
  %v654 = vld [vmem:[%s1 + $0x5fc] sm:$0xf]
  %v655 = vld [vmem:[%s1 + $0x600] sm:$0xf]
  %v656 = vld [vmem:[%s1 + $0x604] sm:$0xf]
  %v657 = vld [vmem:[%s1 + $0x608] sm:$0xf]
  %v658 = vld [vmem:[%s1 + $0x60c] sm:$0xf]
  %v659 = vld [vmem:[%s1 + $0x610] sm:$0xf]
  %v660 = vld [vmem:[%s1 + $0x614] sm:$0xf]
  %v661 = vld [vmem:[%s1 + $0x618] sm:$0xf]
  %v662 = vld [vmem:[%s1 + $0x61c] sm:$0xf]
  %v663 = vld [vmem:[%s1 + $0x620] sm:$0xf]
  %v664 = vld [vmem:[%s1 + $0x624] sm:$0xf]
  %v665 = vld [vmem:[%s1 + $0x628] sm:$0xf]
  %v666 = vld [vmem:[%s1 + $0x62c] sm:$0xf]
  %v667 = vld [vmem:[%s1 + $0x630] sm:$0xf]
  %v668 = vld [vmem:[%s1 + $0x634] sm:$0xf]
  %v669 = vld [vmem:[%s1 + $0x638] sm:$0xf]
  %v670 = vld [vmem:[%s1 + $0x63c] sm:$0xf]
  %v671 = vld [vmem:[%s1 + $0x640] sm:$0xf]
  %v672 = vld [vmem:[%s1 + $0x644] sm:$0xf]
  %v673 = vld [vmem:[%s1 + $0x648] sm:$0xf]
  %v674 = vld [vmem:[%s1 + $0x64c] sm:$0xf]
  %v675 = vld [vmem:[%s1 + $0x650] sm:$0xf]
  %v676 = vld [vmem:[%s1 + $0x654] sm:$0xf]
  %v677 = vld [vmem:[%s1 + $0x658] sm:$0xf]
  %v678 = vld [vmem:[%s1 + $0x65c] sm:$0xf]
  %v679 = vld [vmem:[%s1 + $0x660] sm:$0xf]
  %v680 = vld [vmem:[%s1 + $0x664] sm:$0xf]
  %v681 = vld [vmem:[%s1 + $0x668] sm:$0xf]
  %v682 = vld [vmem:[%s1 + $0x66c] sm:$0xf]
  %v683 = vld [vmem:[%s1 + $0x670] sm:$0xf]
  %v684 = vld [vmem:[%s1 + $0x674] sm:$0xf]
  %v685 = vld [vmem:[%s1 + $0x678] sm:$0xf]
  %v686 = vld [vmem:[%s1 + $0x67c] sm:$0xf]
  %v687 = vld [vmem:[%s1 + $0x680] sm:$0xf]
  %v688 = vld [vmem:[%s1 + $0x684] sm:$0xf]
  %v689 = vld [vmem:[%s1 + $0x688] sm:$0xf]
  %v690 = vld [vmem:[%s1 + $0x68c] sm:$0xf]
  %v691 = vld [vmem:[%s1 + $0x690] sm:$0xf]
  %v692 = vld [vmem:[%s1 + $0x694] sm:$0xf]
  %v693 = vld [vmem:[%s1 + $0x698] sm:$0xf]
  %v694 = vld [vmem:[%s1 + $0x69c] sm:$0xf]
  %v695 = vld [vmem:[%s1 + $0x6a0] sm:$0xf]
  %v696 = vld [vmem:[%s1 + $0x6a4] sm:$0xf]
  %v697 = vld [vmem:[%s1 + $0x6a8] sm:$0xf]
  %v698 = vld [vmem:[%s1 + $0x6ac] sm:$0xf]
  %v699 = vld [vmem:[%s1 + $0x6b0] sm:$0xf]
  %v700 = vld [vmem:[%s1 + $0x6b4] sm:$0xf]
  %v701 = vld [vmem:[%s1 + $0x6b8] sm:$0xf]
  %v702 = vld [vmem:[%s1 + $0x6bc] sm:$0xf]
  %v703 = vld [vmem:[%s1 + $0x6c0] sm:$0xf]
  %v704 = vld [vmem:[%s1 + $0x6c4] sm:$0xf]
  %v705 = vld [vmem:[%s1 + $0x6c8] sm:$0xf]
  %v706 = vld [vmem:[%s1 + $0x6cc] sm:$0xf]
  %v707 = vld [vmem:[%s1 + $0x6d0] sm:$0xf]
  %v708 = vld [vmem:[%s1 + $0x6d4] sm:$0xf]
  %v709 = vld [vmem:[%s1 + $0x6d8] sm:$0xf]
  %v710 = vld [vmem:[%s1 + $0x6dc] sm:$0xf]
  %v711 = vld [vmem:[%s1 + $0x6e0] sm:$0xf]
  %v712 = vld [vmem:[%s1 + $0x6e4] sm:$0xf]
  %v713 = vld [vmem:[%s1 + $0x6e8] sm:$0xf]
  %v714 = vld [vmem:[%s1 + $0x6ec] sm:$0xf]
  %v715 = vld [vmem:[%s1 + $0x6f0] sm:$0xf]
  %v716 = vld [vmem:[%s1 + $0x6f4] sm:$0xf]
  %v717 = vld [vmem:[%s1 + $0x6f8] sm:$0xf]
  %v718 = vld [vmem:[%s1 + $0x6fc] sm:$0xf]
  %v719 = vld [vmem:[%s1 + $0x700] sm:$0xf]
  %v720 = vld [vmem:[%s1 + $0x704] sm:$0xf]
  %v721 = vld [vmem:[%s1 + $0x708] sm:$0xf]
  %v722 = vld [vmem:[%s1 + $0x70c] sm:$0xf]
  %v723 = vld [vmem:[%s1 + $0x710] sm:$0xf]
  %v724 = vld [vmem:[%s1 + $0x714] sm:$0xf]
  %v725 = vld [vmem:[%s1 + $0x718] sm:$0xf]
  %v726 = vld [vmem:[%s1 + $0x71c] sm:$0xf]
  %v727 = vld [vmem:[%s1 + $0x720] sm:$0xf]
  %v728 = vld [vmem:[%s1 + $0x724] sm:$0xf]
  %v729 = vld [vmem:[%s1 + $0x728] sm:$0xf]
  %v730 = vld [vmem:[%s1 + $0x72c] sm:$0xf]
  %v731 = vld [vmem:[%s1 + $0x730] sm:$0xf]
  %v732 = vld [vmem:[%s1 + $0x734] sm:$0xf]
  %v733 = vld [vmem:[%s1 + $0x738] sm:$0xf]
  %v734 = vld [vmem:[%s1 + $0x73c] sm:$0xf]
  %v735 = vld [vmem:[%s1 + $0x740] sm:$0xf]
  %v736 = vld [vmem:[%s1 + $0x744] sm:$0xf]
  %v737 = vld [vmem:[%s1 + $0x748] sm:$0xf]
  %v738 = vld [vmem:[%s1 + $0x74c] sm:$0xf]
  %v739 = vld [vmem:[%s1 + $0x750] sm:$0xf]
  %v740 = vld [vmem:[%s1 + $0x754] sm:$0xf]
  %v741 = vld [vmem:[%s1 + $0x758] sm:$0xf]
  %v742 = vld [vmem:[%s1 + $0x75c] sm:$0xf]
  %v743 = vld [vmem:[%s1 + $0x760] sm:$0xf]
  %v744 = vld [vmem:[%s1 + $0x764] sm:$0xf]
  %v745 = vld [vmem:[%s1 + $0x768] sm:$0xf]
  %v746 = vld [vmem:[%s1 + $0x76c] sm:$0xf]
  %v747 = vld [vmem:[%s1 + $0x770] sm:$0xf]
  %v748 = vld [vmem:[%s1 + $0x774] sm:$0xf]
  %v749 = vld [vmem:[%s1 + $0x778] sm:$0xf]
  %v750 = vld [vmem:[%s1 + $0x77c] sm:$0xf]
  %v751 = vld [vmem:[%s1 + $0x780] sm:$0xf]
  %v752 = vld [vmem:[%s1 + $0x784] sm:$0xf]
  %v753 = vld [vmem:[%s1 + $0x788] sm:$0xf]
  %v754 = vld [vmem:[%s1 + $0x78c] sm:$0xf]
  %v755 = vld [vmem:[%s1 + $0x790] sm:$0xf]
  %v756 = vld [vmem:[%s1 + $0x794] sm:$0xf]
  %v757 = vld [vmem:[%s1 + $0x798] sm:$0xf]
  %v758 = vld [vmem:[%s1 + $0x79c] sm:$0xf]
  %v759 = vld [vmem:[%s1 + $0x7a0] sm:$0xf]
  %v760 = vld [vmem:[%s1 + $0x7a4] sm:$0xf]
  %v761 = vld [vmem:[%s1 + $0x7a8] sm:$0xf]
  %v762 = vld [vmem:[%s1 + $0x7ac] sm:$0xf]
  %v763 = vld [vmem:[%s1 + $0x7b0] sm:$0xf]
  %v764 = vld [vmem:[%s1 + $0x7b4] sm:$0xf]
  %v765 = vld [vmem:[%s1 + $0x7b8] sm:$0xf]
  %v766 = vld [vmem:[%s1 + $0x7bc] sm:$0xf]
  %v767 = vld [vmem:[%s1 + $0x7c0] sm:$0xf]
  %v768 = vld [vmem:[%s1 + $0x7c4] sm:$0xf]
  %v769 = vld [vmem:[%s1 + $0x7c8] sm:$0xf]
  %v770 = vld [vmem:[%s1 + $0x7cc] sm:$0xf]
  %v771 = vld [vmem:[%s1 + $0x7d0] sm:$0xf]
  %v772 = vld [vmem:[%s1 + $0x7d4] sm:$0xf]
  %v773 = vld [vmem:[%s1 + $0x7d8] sm:$0xf]
  %v774 = vld [vmem:[%s1 + $0x7dc] sm:$0xf]
  %v775 = vld [vmem:[%s1 + $0x7e0] sm:$0xf]
  %v776 = vld [vmem:[%s1 + $0x7e4] sm:$0xf]
  %v777 = vld [vmem:[%s1 + $0x7e8] sm:$0xf]
  %v778 = vld [vmem:[%s1 + $0x7ec] sm:$0xf]
  %v779 = vld [vmem:[%s1 + $0x7f0] sm:$0xf]
  %v780 = vld [vmem:[%s1 + $0x7f4] sm:$0xf]
  %v781 = vld [vmem:[%s1 + $0x7f8] sm:$0xf]
  %v782 = vld [vmem:[%s1 + $0x7fc] sm:$0xf]
  %v783 = vld [vmem:[%s2] sm:$0x1]
  %v785 = vlaneseq
  %v786 = vshrl.u32 %v785, 7
  %v787 = vsub.s32 0, %v786
  %v788 = vrot.slane %v783, %v787
  %v1046 = vunpack.c.l.b16 %v15
  %v1047 = vunpack.c.h.b16 %v15
  %v1048 = vunpack.c.l.b16 %v16
  %v1049 = vunpack.c.h.b16 %v16
  %v1050 = vunpack.c.l.b16 %v17
  %v1051 = vunpack.c.h.b16 %v17
  %v1052 = vunpack.c.l.b16 %v18
  %v1053 = vunpack.c.h.b16 %v18
  %v1054 = vunpack.c.l.b16 %v19
  %v1055 = vunpack.c.h.b16 %v19
  %v1056 = vunpack.c.l.b16 %v20
  %v1057 = vunpack.c.h.b16 %v20
  %v1058 = vunpack.c.l.b16 %v21
  %v1059 = vunpack.c.h.b16 %v21
  %v1060 = vunpack.c.l.b16 %v22
  %v1061 = vunpack.c.h.b16 %v22
  %v1062 = vunpack.c.l.b16 %v23
  %v1063 = vunpack.c.h.b16 %v23
  %v1064 = vunpack.c.l.b16 %v24
  %v1065 = vunpack.c.h.b16 %v24
  %v1066 = vunpack.c.l.b16 %v25
  %v1067 = vunpack.c.h.b16 %v25
  %v1068 = vunpack.c.l.b16 %v26
  %v1069 = vunpack.c.h.b16 %v26
  %v1070 = vunpack.c.l.b16 %v27
  %v1071 = vunpack.c.h.b16 %v27
  %v1072 = vunpack.c.l.b16 %v28
  %v1073 = vunpack.c.h.b16 %v28
  %v1074 = vunpack.c.l.b16 %v29
  %v1075 = vunpack.c.h.b16 %v29
  %v1076 = vunpack.c.l.b16 %v30
  %v1077 = vunpack.c.h.b16 %v30
  %v1078 = vunpack.c.l.b16 %v31
  %v1079 = vunpack.c.h.b16 %v31
  %v1080 = vunpack.c.l.b16 %v32
  %v1081 = vunpack.c.h.b16 %v32
  %v1082 = vunpack.c.l.b16 %v33
  %v1083 = vunpack.c.h.b16 %v33
  %v1084 = vunpack.c.l.b16 %v34
  %v1085 = vunpack.c.h.b16 %v34
  %v1086 = vunpack.c.l.b16 %v35
  %v1087 = vunpack.c.h.b16 %v35
  %v1088 = vunpack.c.l.b16 %v36
  %v1089 = vunpack.c.h.b16 %v36
  %v1090 = vunpack.c.l.b16 %v37
  %v1091 = vunpack.c.h.b16 %v37
  %v1092 = vunpack.c.l.b16 %v38
  %v1093 = vunpack.c.h.b16 %v38
  %v1094 = vunpack.c.l.b16 %v39
  %v1095 = vunpack.c.h.b16 %v39
  %v1096 = vunpack.c.l.b16 %v40
  %v1097 = vunpack.c.h.b16 %v40
  %v1098 = vunpack.c.l.b16 %v41
  %v1099 = vunpack.c.h.b16 %v41
  %v1100 = vunpack.c.l.b16 %v42
  %v1101 = vunpack.c.h.b16 %v42
  %v1102 = vunpack.c.l.b16 %v43
  %v1103 = vunpack.c.h.b16 %v43
  %v1104 = vunpack.c.l.b16 %v44
  %v1105 = vunpack.c.h.b16 %v44
  %v1106 = vunpack.c.l.b16 %v45
  %v1107 = vunpack.c.h.b16 %v45
  %v1108 = vunpack.c.l.b16 %v46
  %v1109 = vunpack.c.h.b16 %v46
  %v1110 = vunpack.c.l.b16 %v47
  %v1111 = vunpack.c.h.b16 %v47
  %v1112 = vunpack.c.l.b16 %v48
  %v1113 = vunpack.c.h.b16 %v48
  %v1114 = vunpack.c.l.b16 %v49
  %v1115 = vunpack.c.h.b16 %v49
  %v1116 = vunpack.c.l.b16 %v50
  %v1117 = vunpack.c.h.b16 %v50
  %v1118 = vunpack.c.l.b16 %v51
  %v1119 = vunpack.c.h.b16 %v51
  %v1120 = vunpack.c.l.b16 %v52
  %v1121 = vunpack.c.h.b16 %v52
  %v1122 = vunpack.c.l.b16 %v53
  %v1123 = vunpack.c.h.b16 %v53
  %v1124 = vunpack.c.l.b16 %v54
  %v1125 = vunpack.c.h.b16 %v54
  %v1126 = vunpack.c.l.b16 %v55
  %v1127 = vunpack.c.h.b16 %v55
  %v1128 = vunpack.c.l.b16 %v56
  %v1129 = vunpack.c.h.b16 %v56
  %v1130 = vunpack.c.l.b16 %v57
  %v1131 = vunpack.c.h.b16 %v57
  %v1132 = vunpack.c.l.b16 %v58
  %v1133 = vunpack.c.h.b16 %v58
  %v1134 = vunpack.c.l.b16 %v59
  %v1135 = vunpack.c.h.b16 %v59
  %v1136 = vunpack.c.l.b16 %v60
  %v1137 = vunpack.c.h.b16 %v60
  %v1138 = vunpack.c.l.b16 %v61
  %v1139 = vunpack.c.h.b16 %v61
  %v1140 = vunpack.c.l.b16 %v62
  %v1141 = vunpack.c.h.b16 %v62
  %v1142 = vunpack.c.l.b16 %v63
  %v1143 = vunpack.c.h.b16 %v63
  %v1144 = vunpack.c.l.b16 %v64
  %v1145 = vunpack.c.h.b16 %v64
  %v1146 = vunpack.c.l.b16 %v65
  %v1147 = vunpack.c.h.b16 %v65
  %v1148 = vunpack.c.l.b16 %v66
  %v1149 = vunpack.c.h.b16 %v66
  %v1150 = vunpack.c.l.b16 %v67
  %v1151 = vunpack.c.h.b16 %v67
  %v1152 = vunpack.c.l.b16 %v68
  %v1153 = vunpack.c.h.b16 %v68
  %v1154 = vunpack.c.l.b16 %v69
  %v1155 = vunpack.c.h.b16 %v69
  %v1156 = vunpack.c.l.b16 %v70
  %v1157 = vunpack.c.h.b16 %v70
  %v1158 = vunpack.c.l.b16 %v71
  %v1159 = vunpack.c.h.b16 %v71
  %v1160 = vunpack.c.l.b16 %v72
  %v1161 = vunpack.c.h.b16 %v72
  %v1162 = vunpack.c.l.b16 %v73
  %v1163 = vunpack.c.h.b16 %v73
  %v1164 = vunpack.c.l.b16 %v74
  %v1165 = vunpack.c.h.b16 %v74
  %v1166 = vunpack.c.l.b16 %v75
  %v1167 = vunpack.c.h.b16 %v75
  %v1168 = vunpack.c.l.b16 %v76
  %v1169 = vunpack.c.h.b16 %v76
  %v1170 = vunpack.c.l.b16 %v77
  %v1171 = vunpack.c.h.b16 %v77
  %v1172 = vunpack.c.l.b16 %v78
  %v1173 = vunpack.c.h.b16 %v78
  %v1174 = vunpack.c.l.b16 %v79
  %v1175 = vunpack.c.h.b16 %v79
  %v1176 = vunpack.c.l.b16 %v80
  %v1177 = vunpack.c.h.b16 %v80
  %v1178 = vunpack.c.l.b16 %v81
  %v1179 = vunpack.c.h.b16 %v81
  %v1180 = vunpack.c.l.b16 %v82
  %v1181 = vunpack.c.h.b16 %v82
  %v1182 = vunpack.c.l.b16 %v83
  %v1183 = vunpack.c.h.b16 %v83
  %v1184 = vunpack.c.l.b16 %v84
  %v1185 = vunpack.c.h.b16 %v84
  %v1186 = vunpack.c.l.b16 %v85
  %v1187 = vunpack.c.h.b16 %v85
  %v1188 = vunpack.c.l.b16 %v86
  %v1189 = vunpack.c.h.b16 %v86
  %v1190 = vunpack.c.l.b16 %v87
  %v1191 = vunpack.c.h.b16 %v87
  %v1192 = vunpack.c.l.b16 %v88
  %v1193 = vunpack.c.h.b16 %v88
  %v1194 = vunpack.c.l.b16 %v89
  %v1195 = vunpack.c.h.b16 %v89
  %v1196 = vunpack.c.l.b16 %v90
  %v1197 = vunpack.c.h.b16 %v90
  %v1198 = vunpack.c.l.b16 %v91
  %v1199 = vunpack.c.h.b16 %v91
  %v1200 = vunpack.c.l.b16 %v92
  %v1201 = vunpack.c.h.b16 %v92
  %v1202 = vunpack.c.l.b16 %v93
  %v1203 = vunpack.c.h.b16 %v93
  %v1204 = vunpack.c.l.b16 %v94
  %v1205 = vunpack.c.h.b16 %v94
  %v1206 = vunpack.c.l.b16 %v95
  %v1207 = vunpack.c.h.b16 %v95
  %v1208 = vunpack.c.l.b16 %v96
  %v1209 = vunpack.c.h.b16 %v96
  %v1210 = vunpack.c.l.b16 %v97
  %v1211 = vunpack.c.h.b16 %v97
  %v1212 = vunpack.c.l.b16 %v98
  %v1213 = vunpack.c.h.b16 %v98
  %v1214 = vunpack.c.l.b16 %v99
  %v1215 = vunpack.c.h.b16 %v99
  %v1216 = vunpack.c.l.b16 %v100
  %v1217 = vunpack.c.h.b16 %v100
  %v1218 = vunpack.c.l.b16 %v101
  %v1219 = vunpack.c.h.b16 %v101
  %v1220 = vunpack.c.l.b16 %v102
  %v1221 = vunpack.c.h.b16 %v102
  %v1222 = vunpack.c.l.b16 %v103
  %v1223 = vunpack.c.h.b16 %v103
  %v1224 = vunpack.c.l.b16 %v104
  %v1225 = vunpack.c.h.b16 %v104
  %v1226 = vunpack.c.l.b16 %v105
  %v1227 = vunpack.c.h.b16 %v105
  %v1228 = vunpack.c.l.b16 %v106
  %v1229 = vunpack.c.h.b16 %v106
  %v1230 = vunpack.c.l.b16 %v107
  %v1231 = vunpack.c.h.b16 %v107
  %v1232 = vunpack.c.l.b16 %v108
  %v1233 = vunpack.c.h.b16 %v108
  %v1234 = vunpack.c.l.b16 %v109
  %v1235 = vunpack.c.h.b16 %v109
  %v1236 = vunpack.c.l.b16 %v110
  %v1237 = vunpack.c.h.b16 %v110
  %v1238 = vunpack.c.l.b16 %v111
  %v1239 = vunpack.c.h.b16 %v111
  %v1240 = vunpack.c.l.b16 %v112
  %v1241 = vunpack.c.h.b16 %v112
  %v1242 = vunpack.c.l.b16 %v113
  %v1243 = vunpack.c.h.b16 %v113
  %v1244 = vunpack.c.l.b16 %v114
  %v1245 = vunpack.c.h.b16 %v114
  %v1246 = vunpack.c.l.b16 %v115
  %v1247 = vunpack.c.h.b16 %v115
  %v1248 = vunpack.c.l.b16 %v116
  %v1249 = vunpack.c.h.b16 %v116
  %v1250 = vunpack.c.l.b16 %v117
  %v1251 = vunpack.c.h.b16 %v117
  %v1252 = vunpack.c.l.b16 %v118
  %v1253 = vunpack.c.h.b16 %v118
  %v1254 = vunpack.c.l.b16 %v119
  %v1255 = vunpack.c.h.b16 %v119
  %v1256 = vunpack.c.l.b16 %v120
  %v1257 = vunpack.c.h.b16 %v120
  %v1258 = vunpack.c.l.b16 %v121
  %v1259 = vunpack.c.h.b16 %v121
  %v1260 = vunpack.c.l.b16 %v122
  %v1261 = vunpack.c.h.b16 %v122
  %v1262 = vunpack.c.l.b16 %v123
  %v1263 = vunpack.c.h.b16 %v123
  %v1264 = vunpack.c.l.b16 %v124
  %v1265 = vunpack.c.h.b16 %v124
  %v1266 = vunpack.c.l.b16 %v125
  %v1267 = vunpack.c.h.b16 %v125
  %v1268 = vunpack.c.l.b16 %v126
  %v1269 = vunpack.c.h.b16 %v126
  %v1270 = vunpack.c.l.b16 %v127
  %v1271 = vunpack.c.h.b16 %v127
  %v1272 = vunpack.c.l.b16 %v128
  %v1273 = vunpack.c.h.b16 %v128
  %v1274 = vunpack.c.l.b16 %v129
  %v1275 = vunpack.c.h.b16 %v129
  %v1276 = vunpack.c.l.b16 %v130
  %v1277 = vunpack.c.h.b16 %v130
  %v1278 = vunpack.c.l.b16 %v131
  %v1279 = vunpack.c.h.b16 %v131
  %v1280 = vunpack.c.l.b16 %v132
  %v1281 = vunpack.c.h.b16 %v132
  %v1282 = vunpack.c.l.b16 %v133
  %v1283 = vunpack.c.h.b16 %v133
  %v1284 = vunpack.c.l.b16 %v134
  %v1285 = vunpack.c.h.b16 %v134
  %v1286 = vunpack.c.l.b16 %v135
  %v1287 = vunpack.c.h.b16 %v135
  %v1288 = vunpack.c.l.b16 %v136
  %v1289 = vunpack.c.h.b16 %v136
  %v1290 = vunpack.c.l.b16 %v137
  %v1291 = vunpack.c.h.b16 %v137
  %v1292 = vunpack.c.l.b16 %v138
  %v1293 = vunpack.c.h.b16 %v138
  %v1294 = vunpack.c.l.b16 %v139
  %v1295 = vunpack.c.h.b16 %v139
  %v1296 = vunpack.c.l.b16 %v140
  %v1297 = vunpack.c.h.b16 %v140
  %v1298 = vunpack.c.l.b16 %v141
  %v1299 = vunpack.c.h.b16 %v141
  %v1300 = vunpack.c.l.b16 %v142
  %v1301 = vunpack.c.h.b16 %v142
  %v1302 = vunpack.c.l.b16 %v143
  %v1303 = vunpack.c.h.b16 %v143
  %v1304 = vunpack.c.l.b16 %v144
  %v1305 = vunpack.c.h.b16 %v144
  %v1306 = vunpack.c.l.b16 %v145
  %v1307 = vunpack.c.h.b16 %v145
  %v1308 = vunpack.c.l.b16 %v146
  %v1309 = vunpack.c.h.b16 %v146
  %v1310 = vunpack.c.l.b16 %v147
  %v1311 = vunpack.c.h.b16 %v147
  %v1312 = vunpack.c.l.b16 %v148
  %v1313 = vunpack.c.h.b16 %v148
  %v1314 = vunpack.c.l.b16 %v149
  %v1315 = vunpack.c.h.b16 %v149
  %v1316 = vunpack.c.l.b16 %v150
  %v1317 = vunpack.c.h.b16 %v150
  %v1318 = vunpack.c.l.b16 %v151
  %v1319 = vunpack.c.h.b16 %v151
  %v1320 = vunpack.c.l.b16 %v152
  %v1321 = vunpack.c.h.b16 %v152
  %v1322 = vunpack.c.l.b16 %v153
  %v1323 = vunpack.c.h.b16 %v153
  %v1324 = vunpack.c.l.b16 %v154
  %v1325 = vunpack.c.h.b16 %v154
  %v1326 = vunpack.c.l.b16 %v155
  %v1327 = vunpack.c.h.b16 %v155
  %v1328 = vunpack.c.l.b16 %v156
  %v1329 = vunpack.c.h.b16 %v156
  %v1330 = vunpack.c.l.b16 %v157
  %v1331 = vunpack.c.h.b16 %v157
  %v1332 = vunpack.c.l.b16 %v158
  %v1333 = vunpack.c.h.b16 %v158
  %v1334 = vunpack.c.l.b16 %v159
  %v1335 = vunpack.c.h.b16 %v159
  %v1336 = vunpack.c.l.b16 %v160
  %v1337 = vunpack.c.h.b16 %v160
  %v1338 = vunpack.c.l.b16 %v161
  %v1339 = vunpack.c.h.b16 %v161
  %v1340 = vunpack.c.l.b16 %v162
  %v1341 = vunpack.c.h.b16 %v162
  %v1342 = vunpack.c.l.b16 %v163
  %v1343 = vunpack.c.h.b16 %v163
  %v1344 = vunpack.c.l.b16 %v164
  %v1345 = vunpack.c.h.b16 %v164
  %v1346 = vunpack.c.l.b16 %v165
  %v1347 = vunpack.c.h.b16 %v165
  %v1348 = vunpack.c.l.b16 %v166
  %v1349 = vunpack.c.h.b16 %v166
  %v1350 = vunpack.c.l.b16 %v167
  %v1351 = vunpack.c.h.b16 %v167
  %v1352 = vunpack.c.l.b16 %v168
  %v1353 = vunpack.c.h.b16 %v168
  %v1354 = vunpack.c.l.b16 %v169
  %v1355 = vunpack.c.h.b16 %v169
  %v1356 = vunpack.c.l.b16 %v170
  %v1357 = vunpack.c.h.b16 %v170
  %v1358 = vunpack.c.l.b16 %v171
  %v1359 = vunpack.c.h.b16 %v171
  %v1360 = vunpack.c.l.b16 %v172
  %v1361 = vunpack.c.h.b16 %v172
  %v1362 = vunpack.c.l.b16 %v173
  %v1363 = vunpack.c.h.b16 %v173
  %v1364 = vunpack.c.l.b16 %v174
  %v1365 = vunpack.c.h.b16 %v174
  %v1366 = vunpack.c.l.b16 %v175
  %v1367 = vunpack.c.h.b16 %v175
  %v1368 = vunpack.c.l.b16 %v176
  %v1369 = vunpack.c.h.b16 %v176
  %v1370 = vunpack.c.l.b16 %v177
  %v1371 = vunpack.c.h.b16 %v177
  %v1372 = vunpack.c.l.b16 %v178
  %v1373 = vunpack.c.h.b16 %v178
  %v1374 = vunpack.c.l.b16 %v179
  %v1375 = vunpack.c.h.b16 %v179
  %v1376 = vunpack.c.l.b16 %v180
  %v1377 = vunpack.c.h.b16 %v180
  %v1378 = vunpack.c.l.b16 %v181
  %v1379 = vunpack.c.h.b16 %v181
  %v1380 = vunpack.c.l.b16 %v182
  %v1381 = vunpack.c.h.b16 %v182
  %v1382 = vunpack.c.l.b16 %v183
  %v1383 = vunpack.c.h.b16 %v183
  %v1384 = vunpack.c.l.b16 %v184
  %v1385 = vunpack.c.h.b16 %v184
  %v1386 = vunpack.c.l.b16 %v185
  %v1387 = vunpack.c.h.b16 %v185
  %v1388 = vunpack.c.l.b16 %v186
  %v1389 = vunpack.c.h.b16 %v186
  %v1390 = vunpack.c.l.b16 %v187
  %v1391 = vunpack.c.h.b16 %v187
  %v1392 = vunpack.c.l.b16 %v188
  %v1393 = vunpack.c.h.b16 %v188
  %v1394 = vunpack.c.l.b16 %v189
  %v1395 = vunpack.c.h.b16 %v189
  %v1396 = vunpack.c.l.b16 %v190
  %v1397 = vunpack.c.h.b16 %v190
  %v1398 = vunpack.c.l.b16 %v191
  %v1399 = vunpack.c.h.b16 %v191
  %v1400 = vunpack.c.l.b16 %v192
  %v1401 = vunpack.c.h.b16 %v192
  %v1402 = vunpack.c.l.b16 %v193
  %v1403 = vunpack.c.h.b16 %v193
  %v1404 = vunpack.c.l.b16 %v194
  %v1405 = vunpack.c.h.b16 %v194
  %v1406 = vunpack.c.l.b16 %v195
  %v1407 = vunpack.c.h.b16 %v195
  %v1408 = vunpack.c.l.b16 %v196
  %v1409 = vunpack.c.h.b16 %v196
  %v1410 = vunpack.c.l.b16 %v197
  %v1411 = vunpack.c.h.b16 %v197
  %v1412 = vunpack.c.l.b16 %v198
  %v1413 = vunpack.c.h.b16 %v198
  %v1414 = vunpack.c.l.b16 %v199
  %v1415 = vunpack.c.h.b16 %v199
  %v1416 = vunpack.c.l.b16 %v200
  %v1417 = vunpack.c.h.b16 %v200
  %v1418 = vunpack.c.l.b16 %v201
  %v1419 = vunpack.c.h.b16 %v201
  %v1420 = vunpack.c.l.b16 %v202
  %v1421 = vunpack.c.h.b16 %v202
  %v1422 = vunpack.c.l.b16 %v203
  %v1423 = vunpack.c.h.b16 %v203
  %v1424 = vunpack.c.l.b16 %v204
  %v1425 = vunpack.c.h.b16 %v204
  %v1426 = vunpack.c.l.b16 %v205
  %v1427 = vunpack.c.h.b16 %v205
  %v1428 = vunpack.c.l.b16 %v206
  %v1429 = vunpack.c.h.b16 %v206
  %v1430 = vunpack.c.l.b16 %v207
  %v1431 = vunpack.c.h.b16 %v207
  %v1432 = vunpack.c.l.b16 %v208
  %v1433 = vunpack.c.h.b16 %v208
  %v1434 = vunpack.c.l.b16 %v209
  %v1435 = vunpack.c.h.b16 %v209
  %v1436 = vunpack.c.l.b16 %v210
  %v1437 = vunpack.c.h.b16 %v210
  %v1438 = vunpack.c.l.b16 %v211
  %v1439 = vunpack.c.h.b16 %v211
  %v1440 = vunpack.c.l.b16 %v212
  %v1441 = vunpack.c.h.b16 %v212
  %v1442 = vunpack.c.l.b16 %v213
  %v1443 = vunpack.c.h.b16 %v213
  %v1444 = vunpack.c.l.b16 %v214
  %v1445 = vunpack.c.h.b16 %v214
  %v1446 = vunpack.c.l.b16 %v215
  %v1447 = vunpack.c.h.b16 %v215
  %v1448 = vunpack.c.l.b16 %v216
  %v1449 = vunpack.c.h.b16 %v216
  %v1450 = vunpack.c.l.b16 %v217
  %v1451 = vunpack.c.h.b16 %v217
  %v1452 = vunpack.c.l.b16 %v218
  %v1453 = vunpack.c.h.b16 %v218
  %v1454 = vunpack.c.l.b16 %v219
  %v1455 = vunpack.c.h.b16 %v219
  %v1456 = vunpack.c.l.b16 %v220
  %v1457 = vunpack.c.h.b16 %v220
  %v1458 = vunpack.c.l.b16 %v221
  %v1459 = vunpack.c.h.b16 %v221
  %v1460 = vunpack.c.l.b16 %v222
  %v1461 = vunpack.c.h.b16 %v222
  %v1462 = vunpack.c.l.b16 %v223
  %v1463 = vunpack.c.h.b16 %v223
  %v1464 = vunpack.c.l.b16 %v224
  %v1465 = vunpack.c.h.b16 %v224
  %v1466 = vunpack.c.l.b16 %v225
  %v1467 = vunpack.c.h.b16 %v225
  %v1468 = vunpack.c.l.b16 %v226
  %v1469 = vunpack.c.h.b16 %v226
  %v1470 = vunpack.c.l.b16 %v227
  %v1471 = vunpack.c.h.b16 %v227
  %v1472 = vunpack.c.l.b16 %v228
  %v1473 = vunpack.c.h.b16 %v228
  %v1474 = vunpack.c.l.b16 %v229
  %v1475 = vunpack.c.h.b16 %v229
  %v1476 = vunpack.c.l.b16 %v230
  %v1477 = vunpack.c.h.b16 %v230
  %v1478 = vunpack.c.l.b16 %v231
  %v1479 = vunpack.c.h.b16 %v231
  %v1480 = vunpack.c.l.b16 %v232
  %v1481 = vunpack.c.h.b16 %v232
  %v1482 = vunpack.c.l.b16 %v233
  %v1483 = vunpack.c.h.b16 %v233
  %v1484 = vunpack.c.l.b16 %v234
  %v1485 = vunpack.c.h.b16 %v234
  %v1486 = vunpack.c.l.b16 %v235
  %v1487 = vunpack.c.h.b16 %v235
  %v1488 = vunpack.c.l.b16 %v236
  %v1489 = vunpack.c.h.b16 %v236
  %v1490 = vunpack.c.l.b16 %v237
  %v1491 = vunpack.c.h.b16 %v237
  %v1492 = vunpack.c.l.b16 %v238
  %v1493 = vunpack.c.h.b16 %v238
  %v1494 = vunpack.c.l.b16 %v239
  %v1495 = vunpack.c.h.b16 %v239
  %v1496 = vunpack.c.l.b16 %v240
  %v1497 = vunpack.c.h.b16 %v240
  %v1498 = vunpack.c.l.b16 %v241
  %v1499 = vunpack.c.h.b16 %v241
  %v1500 = vunpack.c.l.b16 %v242
  %v1501 = vunpack.c.h.b16 %v242
  %v1502 = vunpack.c.l.b16 %v243
  %v1503 = vunpack.c.h.b16 %v243
  %v1504 = vunpack.c.l.b16 %v244
  %v1505 = vunpack.c.h.b16 %v244
  %v1506 = vunpack.c.l.b16 %v245
  %v1507 = vunpack.c.h.b16 %v245
  %v1508 = vunpack.c.l.b16 %v246
  %v1509 = vunpack.c.h.b16 %v246
  %v1510 = vunpack.c.l.b16 %v247
  %v1511 = vunpack.c.h.b16 %v247
  %v1512 = vunpack.c.l.b16 %v248
  %v1513 = vunpack.c.h.b16 %v248
  %v1514 = vunpack.c.l.b16 %v249
  %v1515 = vunpack.c.h.b16 %v249
  %v1516 = vunpack.c.l.b16 %v250
  %v1517 = vunpack.c.h.b16 %v250
  %v1518 = vunpack.c.l.b16 %v251
  %v1519 = vunpack.c.h.b16 %v251
  %v1520 = vunpack.c.l.b16 %v252
  %v1521 = vunpack.c.h.b16 %v252
  %v1522 = vunpack.c.l.b16 %v253
  %v1523 = vunpack.c.h.b16 %v253
  %v1524 = vunpack.c.l.b16 %v254
  %v1525 = vunpack.c.h.b16 %v254
  %v1526 = vunpack.c.l.b16 %v255
  %v1527 = vunpack.c.h.b16 %v255
  %v1528 = vunpack.c.l.b16 %v256
  %v1529 = vunpack.c.h.b16 %v256
  %v1530 = vunpack.c.l.b16 %v257
  %v1531 = vunpack.c.h.b16 %v257
  %v1532 = vunpack.c.l.b16 %v258
  %v1533 = vunpack.c.h.b16 %v258
  %v1534 = vunpack.c.l.b16 %v259
  %v1535 = vunpack.c.h.b16 %v259
  %v1536 = vunpack.c.l.b16 %v260
  %v1537 = vunpack.c.h.b16 %v260
  %v1538 = vunpack.c.l.b16 %v261
  %v1539 = vunpack.c.h.b16 %v261
  %v1540 = vunpack.c.l.b16 %v262
  %v1541 = vunpack.c.h.b16 %v262
  %v1542 = vunpack.c.l.b16 %v263
  %v1543 = vunpack.c.h.b16 %v263
  %v1544 = vunpack.c.l.b16 %v264
  %v1545 = vunpack.c.h.b16 %v264
  %v1546 = vunpack.c.l.b16 %v265
  %v1547 = vunpack.c.h.b16 %v265
  %v1548 = vunpack.c.l.b16 %v266
  %v1549 = vunpack.c.h.b16 %v266
  %v1550 = vunpack.c.l.b16 %v267
  %v1551 = vunpack.c.h.b16 %v267
  %v1552 = vunpack.c.l.b16 %v268
  %v1553 = vunpack.c.h.b16 %v268
  %v1554 = vunpack.c.l.b16 %v269
  %v1555 = vunpack.c.h.b16 %v269
  %v1556 = vunpack.c.l.b16 %v270
  %v1557 = vunpack.c.h.b16 %v270
  %v1558 = vpack.c.b16 %v1078, %v1046
  %v1559 = vpack.c.b16 %v1079, %v1047
  %v1560 = vpack.c.b16 %v1080, %v1048
  %v1561 = vpack.c.b16 %v1081, %v1049
  %v1562 = vpack.c.b16 %v1082, %v1050
  %v1563 = vpack.c.b16 %v1083, %v1051
  %v1564 = vpack.c.b16 %v1084, %v1052
  %v1565 = vpack.c.b16 %v1085, %v1053
  %v1566 = vpack.c.b16 %v1086, %v1054
  %v1567 = vpack.c.b16 %v1087, %v1055
  %v1568 = vpack.c.b16 %v1088, %v1056
  %v1569 = vpack.c.b16 %v1089, %v1057
  %v1570 = vpack.c.b16 %v1090, %v1058
  %v1571 = vpack.c.b16 %v1091, %v1059
  %v1572 = vpack.c.b16 %v1092, %v1060
  %v1573 = vpack.c.b16 %v1093, %v1061
  %v1574 = vpack.c.b16 %v1094, %v1062
  %v1575 = vpack.c.b16 %v1095, %v1063
  %v1576 = vpack.c.b16 %v1096, %v1064
  %v1577 = vpack.c.b16 %v1097, %v1065
  %v1578 = vpack.c.b16 %v1098, %v1066
  %v1579 = vpack.c.b16 %v1099, %v1067
  %v1580 = vpack.c.b16 %v1100, %v1068
  %v1581 = vpack.c.b16 %v1101, %v1069
  %v1582 = vpack.c.b16 %v1102, %v1070
  %v1583 = vpack.c.b16 %v1103, %v1071
  %v1584 = vpack.c.b16 %v1104, %v1072
  %v1585 = vpack.c.b16 %v1105, %v1073
  %v1586 = vpack.c.b16 %v1106, %v1074
  %v1587 = vpack.c.b16 %v1107, %v1075
  %v1588 = vpack.c.b16 %v1108, %v1076
  %v1589 = vpack.c.b16 %v1109, %v1077
  %v1590 = vpack.c.b16 %v1142, %v1110
  %v1591 = vpack.c.b16 %v1143, %v1111
  %v1592 = vpack.c.b16 %v1144, %v1112
  %v1593 = vpack.c.b16 %v1145, %v1113
  %v1594 = vpack.c.b16 %v1146, %v1114
  %v1595 = vpack.c.b16 %v1147, %v1115
  %v1596 = vpack.c.b16 %v1148, %v1116
  %v1597 = vpack.c.b16 %v1149, %v1117
  %v1598 = vpack.c.b16 %v1150, %v1118
  %v1599 = vpack.c.b16 %v1151, %v1119
  %v1600 = vpack.c.b16 %v1152, %v1120
  %v1601 = vpack.c.b16 %v1153, %v1121
  %v1602 = vpack.c.b16 %v1154, %v1122
  %v1603 = vpack.c.b16 %v1155, %v1123
  %v1604 = vpack.c.b16 %v1156, %v1124
  %v1605 = vpack.c.b16 %v1157, %v1125
  %v1606 = vpack.c.b16 %v1158, %v1126
  %v1607 = vpack.c.b16 %v1159, %v1127
  %v1608 = vpack.c.b16 %v1160, %v1128
  %v1609 = vpack.c.b16 %v1161, %v1129
  %v1610 = vpack.c.b16 %v1162, %v1130
  %v1611 = vpack.c.b16 %v1163, %v1131
  %v1612 = vpack.c.b16 %v1164, %v1132
  %v1613 = vpack.c.b16 %v1165, %v1133
  %v1614 = vpack.c.b16 %v1166, %v1134
  %v1615 = vpack.c.b16 %v1167, %v1135
  %v1616 = vpack.c.b16 %v1168, %v1136
  %v1617 = vpack.c.b16 %v1169, %v1137
  %v1618 = vpack.c.b16 %v1170, %v1138
  %v1619 = vpack.c.b16 %v1171, %v1139
  %v1620 = vpack.c.b16 %v1172, %v1140
  %v1621 = vpack.c.b16 %v1173, %v1141
  %v1622 = vpack.c.b16 %v1206, %v1174
  %v1623 = vpack.c.b16 %v1207, %v1175
  %v1624 = vpack.c.b16 %v1208, %v1176
  %v1625 = vpack.c.b16 %v1209, %v1177
  %v1626 = vpack.c.b16 %v1210, %v1178
  %v1627 = vpack.c.b16 %v1211, %v1179
  %v1628 = vpack.c.b16 %v1212, %v1180
  %v1629 = vpack.c.b16 %v1213, %v1181
  %v1630 = vpack.c.b16 %v1214, %v1182
  %v1631 = vpack.c.b16 %v1215, %v1183
  %v1632 = vpack.c.b16 %v1216, %v1184
  %v1633 = vpack.c.b16 %v1217, %v1185
  %v1634 = vpack.c.b16 %v1218, %v1186
  %v1635 = vpack.c.b16 %v1219, %v1187
  %v1636 = vpack.c.b16 %v1220, %v1188
  %v1637 = vpack.c.b16 %v1221, %v1189
  %v1638 = vpack.c.b16 %v1222, %v1190
  %v1639 = vpack.c.b16 %v1223, %v1191
  %v1640 = vpack.c.b16 %v1224, %v1192
  %v1641 = vpack.c.b16 %v1225, %v1193
  %v1642 = vpack.c.b16 %v1226, %v1194
  %v1643 = vpack.c.b16 %v1227, %v1195
  %v1644 = vpack.c.b16 %v1228, %v1196
  %v1645 = vpack.c.b16 %v1229, %v1197
  %v1646 = vpack.c.b16 %v1230, %v1198
  %v1647 = vpack.c.b16 %v1231, %v1199
  %v1648 = vpack.c.b16 %v1232, %v1200
  %v1649 = vpack.c.b16 %v1233, %v1201
  %v1650 = vpack.c.b16 %v1234, %v1202
  %v1651 = vpack.c.b16 %v1235, %v1203
  %v1652 = vpack.c.b16 %v1236, %v1204
  %v1653 = vpack.c.b16 %v1237, %v1205
  %v1654 = vpack.c.b16 %v1270, %v1238
  %v1655 = vpack.c.b16 %v1271, %v1239
  %v1656 = vpack.c.b16 %v1272, %v1240
  %v1657 = vpack.c.b16 %v1273, %v1241
  %v1658 = vpack.c.b16 %v1274, %v1242
  %v1659 = vpack.c.b16 %v1275, %v1243
  %v1660 = vpack.c.b16 %v1276, %v1244
  %v1661 = vpack.c.b16 %v1277, %v1245
  %v1662 = vpack.c.b16 %v1278, %v1246
  %v1663 = vpack.c.b16 %v1279, %v1247
  %v1664 = vpack.c.b16 %v1280, %v1248
  %v1665 = vpack.c.b16 %v1281, %v1249
  %v1666 = vpack.c.b16 %v1282, %v1250
  %v1667 = vpack.c.b16 %v1283, %v1251
  %v1668 = vpack.c.b16 %v1284, %v1252
  %v1669 = vpack.c.b16 %v1285, %v1253
  %v1670 = vpack.c.b16 %v1286, %v1254
  %v1671 = vpack.c.b16 %v1287, %v1255
  %v1672 = vpack.c.b16 %v1288, %v1256
  %v1673 = vpack.c.b16 %v1289, %v1257
  %v1674 = vpack.c.b16 %v1290, %v1258
  %v1675 = vpack.c.b16 %v1291, %v1259
  %v1676 = vpack.c.b16 %v1292, %v1260
  %v1677 = vpack.c.b16 %v1293, %v1261
  %v1678 = vpack.c.b16 %v1294, %v1262
  %v1679 = vpack.c.b16 %v1295, %v1263
  %v1680 = vpack.c.b16 %v1296, %v1264
  %v1681 = vpack.c.b16 %v1297, %v1265
  %v1682 = vpack.c.b16 %v1298, %v1266
  %v1683 = vpack.c.b16 %v1299, %v1267
  %v1684 = vpack.c.b16 %v1300, %v1268
  %v1685 = vpack.c.b16 %v1301, %v1269
  %v1686 = vpack.c.b16 %v1334, %v1302
  %v1687 = vpack.c.b16 %v1335, %v1303
  %v1688 = vpack.c.b16 %v1336, %v1304
  %v1689 = vpack.c.b16 %v1337, %v1305
  %v1690 = vpack.c.b16 %v1338, %v1306
  %v1691 = vpack.c.b16 %v1339, %v1307
  %v1692 = vpack.c.b16 %v1340, %v1308
  %v1693 = vpack.c.b16 %v1341, %v1309
  %v1694 = vpack.c.b16 %v1342, %v1310
  %v1695 = vpack.c.b16 %v1343, %v1311
  %v1696 = vpack.c.b16 %v1344, %v1312
  %v1697 = vpack.c.b16 %v1345, %v1313
  %v1698 = vpack.c.b16 %v1346, %v1314
  %v1699 = vpack.c.b16 %v1347, %v1315
  %v1700 = vpack.c.b16 %v1348, %v1316
  %v1701 = vpack.c.b16 %v1349, %v1317
  %v1702 = vpack.c.b16 %v1350, %v1318
  %v1703 = vpack.c.b16 %v1351, %v1319
  %v1704 = vpack.c.b16 %v1352, %v1320
  %v1705 = vpack.c.b16 %v1353, %v1321
  %v1706 = vpack.c.b16 %v1354, %v1322
  %v1707 = vpack.c.b16 %v1355, %v1323
  %v1708 = vpack.c.b16 %v1356, %v1324
  %v1709 = vpack.c.b16 %v1357, %v1325
  %v1710 = vpack.c.b16 %v1358, %v1326
  %v1711 = vpack.c.b16 %v1359, %v1327
  %v1712 = vpack.c.b16 %v1360, %v1328
  %v1713 = vpack.c.b16 %v1361, %v1329
  %v1714 = vpack.c.b16 %v1362, %v1330
  %v1715 = vpack.c.b16 %v1363, %v1331
  %v1716 = vpack.c.b16 %v1364, %v1332
  %v1717 = vpack.c.b16 %v1365, %v1333
  %v1718 = vpack.c.b16 %v1398, %v1366
  %v1719 = vpack.c.b16 %v1399, %v1367
  %v1720 = vpack.c.b16 %v1400, %v1368
  %v1721 = vpack.c.b16 %v1401, %v1369
  %v1722 = vpack.c.b16 %v1402, %v1370
  %v1723 = vpack.c.b16 %v1403, %v1371
  %v1724 = vpack.c.b16 %v1404, %v1372
  %v1725 = vpack.c.b16 %v1405, %v1373
  %v1726 = vpack.c.b16 %v1406, %v1374
  %v1727 = vpack.c.b16 %v1407, %v1375
  %v1728 = vpack.c.b16 %v1408, %v1376
  %v1729 = vpack.c.b16 %v1409, %v1377
  %v1730 = vpack.c.b16 %v1410, %v1378
  %v1731 = vpack.c.b16 %v1411, %v1379
  %v1732 = vpack.c.b16 %v1412, %v1380
  %v1733 = vpack.c.b16 %v1413, %v1381
  %v1734 = vpack.c.b16 %v1414, %v1382
  %v1735 = vpack.c.b16 %v1415, %v1383
  %v1736 = vpack.c.b16 %v1416, %v1384
  %v1737 = vpack.c.b16 %v1417, %v1385
  %v1738 = vpack.c.b16 %v1418, %v1386
  %v1739 = vpack.c.b16 %v1419, %v1387
  %v1740 = vpack.c.b16 %v1420, %v1388
  %v1741 = vpack.c.b16 %v1421, %v1389
  %v1742 = vpack.c.b16 %v1422, %v1390
  %v1743 = vpack.c.b16 %v1423, %v1391
  %v1744 = vpack.c.b16 %v1424, %v1392
  %v1745 = vpack.c.b16 %v1425, %v1393
  %v1746 = vpack.c.b16 %v1426, %v1394
  %v1747 = vpack.c.b16 %v1427, %v1395
  %v1748 = vpack.c.b16 %v1428, %v1396
  %v1749 = vpack.c.b16 %v1429, %v1397
  %v1750 = vpack.c.b16 %v1462, %v1430
  %v1751 = vpack.c.b16 %v1463, %v1431
  %v1752 = vpack.c.b16 %v1464, %v1432
  %v1753 = vpack.c.b16 %v1465, %v1433
  %v1754 = vpack.c.b16 %v1466, %v1434
  %v1755 = vpack.c.b16 %v1467, %v1435
  %v1756 = vpack.c.b16 %v1468, %v1436
  %v1757 = vpack.c.b16 %v1469, %v1437
  %v1758 = vpack.c.b16 %v1470, %v1438
  %v1759 = vpack.c.b16 %v1471, %v1439
  %v1760 = vpack.c.b16 %v1472, %v1440
  %v1761 = vpack.c.b16 %v1473, %v1441
  %v1762 = vpack.c.b16 %v1474, %v1442
  %v1763 = vpack.c.b16 %v1475, %v1443
  %v1764 = vpack.c.b16 %v1476, %v1444
  %v1765 = vpack.c.b16 %v1477, %v1445
  %v1766 = vpack.c.b16 %v1478, %v1446
  %v1767 = vpack.c.b16 %v1479, %v1447
  %v1768 = vpack.c.b16 %v1480, %v1448
  %v1769 = vpack.c.b16 %v1481, %v1449
  %v1770 = vpack.c.b16 %v1482, %v1450
  %v1771 = vpack.c.b16 %v1483, %v1451
  %v1772 = vpack.c.b16 %v1484, %v1452
  %v1773 = vpack.c.b16 %v1485, %v1453
  %v1774 = vpack.c.b16 %v1486, %v1454
  %v1775 = vpack.c.b16 %v1487, %v1455
  %v1776 = vpack.c.b16 %v1488, %v1456
  %v1777 = vpack.c.b16 %v1489, %v1457
  %v1778 = vpack.c.b16 %v1490, %v1458
  %v1779 = vpack.c.b16 %v1491, %v1459
  %v1780 = vpack.c.b16 %v1492, %v1460
  %v1781 = vpack.c.b16 %v1493, %v1461
  %v1782 = vpack.c.b16 %v1526, %v1494
  %v1783 = vpack.c.b16 %v1527, %v1495
  %v1784 = vpack.c.b16 %v1528, %v1496
  %v1785 = vpack.c.b16 %v1529, %v1497
  %v1786 = vpack.c.b16 %v1530, %v1498
  %v1787 = vpack.c.b16 %v1531, %v1499
  %v1788 = vpack.c.b16 %v1532, %v1500
  %v1789 = vpack.c.b16 %v1533, %v1501
  %v1790 = vpack.c.b16 %v1534, %v1502
  %v1791 = vpack.c.b16 %v1535, %v1503
  %v1792 = vpack.c.b16 %v1536, %v1504
  %v1793 = vpack.c.b16 %v1537, %v1505
  %v1794 = vpack.c.b16 %v1538, %v1506
  %v1795 = vpack.c.b16 %v1539, %v1507
  %v1796 = vpack.c.b16 %v1540, %v1508
  %v1797 = vpack.c.b16 %v1541, %v1509
  %v1798 = vpack.c.b16 %v1542, %v1510
  %v1799 = vpack.c.b16 %v1543, %v1511
  %v1800 = vpack.c.b16 %v1544, %v1512
  %v1801 = vpack.c.b16 %v1545, %v1513
  %v1802 = vpack.c.b16 %v1546, %v1514
  %v1803 = vpack.c.b16 %v1547, %v1515
  %v1804 = vpack.c.b16 %v1548, %v1516
  %v1805 = vpack.c.b16 %v1549, %v1517
  %v1806 = vpack.c.b16 %v1550, %v1518
  %v1807 = vpack.c.b16 %v1551, %v1519
  %v1808 = vpack.c.b16 %v1552, %v1520
  %v1809 = vpack.c.b16 %v1553, %v1521
  %v1810 = vpack.c.b16 %v1554, %v1522
  %v1811 = vpack.c.b16 %v1555, %v1523
  %v1812 = vpack.c.b16 %v1556, %v1524
  %v1813 = vpack.c.b16 %v1557, %v1525
  %v2582 = vunpack.c.l.b16 %v271
  %v2583 = vunpack.c.l.b16 %v272
  %v2584 = vunpack.c.l.b16 %v273
  %v2585 = vunpack.c.l.b16 %v274
  %v2586 = vunpack.c.l.b16 %v275
  %v2587 = vunpack.c.l.b16 %v276
  %v2588 = vunpack.c.l.b16 %v277
  %v2589 = vunpack.c.l.b16 %v278
  %v2590 = vunpack.c.l.b16 %v279
  %v2591 = vunpack.c.l.b16 %v280
  %v2592 = vunpack.c.l.b16 %v281
  %v2593 = vunpack.c.l.b16 %v282
  %v2594 = vunpack.c.l.b16 %v283
  %v2595 = vunpack.c.l.b16 %v284
  %v2596 = vunpack.c.l.b16 %v285
  %v2597 = vunpack.c.l.b16 %v286
  %v2598 = vunpack.c.l.b16 %v287
  %v2599 = vunpack.c.l.b16 %v288
  %v2600 = vunpack.c.l.b16 %v289
  %v2601 = vunpack.c.l.b16 %v290
  %v2602 = vunpack.c.l.b16 %v291
  %v2603 = vunpack.c.l.b16 %v292
  %v2604 = vunpack.c.l.b16 %v293
  %v2605 = vunpack.c.l.b16 %v294
  %v2606 = vunpack.c.l.b16 %v295
  %v2607 = vunpack.c.l.b16 %v296
  %v2608 = vunpack.c.l.b16 %v297
  %v2609 = vunpack.c.l.b16 %v298
  %v2610 = vunpack.c.l.b16 %v299
  %v2611 = vunpack.c.l.b16 %v300
  %v2612 = vunpack.c.l.b16 %v301
  %v2613 = vunpack.c.l.b16 %v302
  %v2614 = vunpack.c.l.b16 %v303
  %v2615 = vunpack.c.l.b16 %v304
  %v2616 = vunpack.c.l.b16 %v305
  %v2617 = vunpack.c.l.b16 %v306
  %v2618 = vunpack.c.l.b16 %v307
  %v2619 = vunpack.c.l.b16 %v308
  %v2620 = vunpack.c.l.b16 %v309
  %v2621 = vunpack.c.l.b16 %v310
  %v2622 = vunpack.c.l.b16 %v311
  %v2623 = vunpack.c.l.b16 %v312
  %v2624 = vunpack.c.l.b16 %v313
  %v2625 = vunpack.c.l.b16 %v314
  %v2626 = vunpack.c.l.b16 %v315
  %v2627 = vunpack.c.l.b16 %v316
  %v2628 = vunpack.c.l.b16 %v317
  %v2629 = vunpack.c.l.b16 %v318
  %v2630 = vunpack.c.l.b16 %v319
  %v2631 = vunpack.c.l.b16 %v320
  %v2632 = vunpack.c.l.b16 %v321
  %v2633 = vunpack.c.l.b16 %v322
  %v2634 = vunpack.c.l.b16 %v323
  %v2635 = vunpack.c.l.b16 %v324
  %v2636 = vunpack.c.l.b16 %v325
  %v2637 = vunpack.c.l.b16 %v326
  %v2638 = vunpack.c.l.b16 %v327
  %v2639 = vunpack.c.l.b16 %v328
  %v2640 = vunpack.c.l.b16 %v329
  %v2641 = vunpack.c.l.b16 %v330
  %v2642 = vunpack.c.l.b16 %v331
  %v2643 = vunpack.c.l.b16 %v332
  %v2644 = vunpack.c.l.b16 %v333
  %v2645 = vunpack.c.l.b16 %v334
  %v2646 = vunpack.c.l.b16 %v335
  %v2647 = vunpack.c.l.b16 %v336
  %v2648 = vunpack.c.l.b16 %v337
  %v2649 = vunpack.c.l.b16 %v338
  %v2650 = vunpack.c.l.b16 %v339
  %v2651 = vunpack.c.l.b16 %v340
  %v2652 = vunpack.c.l.b16 %v341
  %v2653 = vunpack.c.l.b16 %v342
  %v2654 = vunpack.c.l.b16 %v343
  %v2655 = vunpack.c.l.b16 %v344
  %v2656 = vunpack.c.l.b16 %v345
  %v2657 = vunpack.c.l.b16 %v346
  %v2658 = vunpack.c.l.b16 %v347
  %v2659 = vunpack.c.l.b16 %v348
  %v2660 = vunpack.c.l.b16 %v349
  %v2661 = vunpack.c.l.b16 %v350
  %v2662 = vunpack.c.l.b16 %v351
  %v2663 = vunpack.c.l.b16 %v352
  %v2664 = vunpack.c.l.b16 %v353
  %v2665 = vunpack.c.l.b16 %v354
  %v2666 = vunpack.c.l.b16 %v355
  %v2667 = vunpack.c.l.b16 %v356
  %v2668 = vunpack.c.l.b16 %v357
  %v2669 = vunpack.c.l.b16 %v358
  %v2670 = vunpack.c.l.b16 %v359
  %v2671 = vunpack.c.l.b16 %v360
  %v2672 = vunpack.c.l.b16 %v361
  %v2673 = vunpack.c.l.b16 %v362
  %v2674 = vunpack.c.l.b16 %v363
  %v2675 = vunpack.c.l.b16 %v364
  %v2676 = vunpack.c.l.b16 %v365
  %v2677 = vunpack.c.l.b16 %v366
  %v2678 = vunpack.c.l.b16 %v367
  %v2679 = vunpack.c.l.b16 %v368
  %v2680 = vunpack.c.l.b16 %v369
  %v2681 = vunpack.c.l.b16 %v370
  %v2682 = vunpack.c.l.b16 %v371
  %v2683 = vunpack.c.l.b16 %v372
  %v2684 = vunpack.c.l.b16 %v373
  %v2685 = vunpack.c.l.b16 %v374
  %v2686 = vunpack.c.l.b16 %v375
  %v2687 = vunpack.c.l.b16 %v376
  %v2688 = vunpack.c.l.b16 %v377
  %v2689 = vunpack.c.l.b16 %v378
  %v2690 = vunpack.c.l.b16 %v379
  %v2691 = vunpack.c.l.b16 %v380
  %v2692 = vunpack.c.l.b16 %v381
  %v2693 = vunpack.c.l.b16 %v382
  %v2694 = vunpack.c.l.b16 %v383
  %v2695 = vunpack.c.l.b16 %v384
  %v2696 = vunpack.c.l.b16 %v385
  %v2697 = vunpack.c.l.b16 %v386
  %v2698 = vunpack.c.l.b16 %v387
  %v2699 = vunpack.c.l.b16 %v388
  %v2700 = vunpack.c.l.b16 %v389
  %v2701 = vunpack.c.l.b16 %v390
  %v2702 = vunpack.c.l.b16 %v391
  %v2703 = vunpack.c.l.b16 %v392
  %v2704 = vunpack.c.l.b16 %v393
  %v2705 = vunpack.c.l.b16 %v394
  %v2706 = vunpack.c.l.b16 %v395
  %v2707 = vunpack.c.l.b16 %v396
  %v2708 = vunpack.c.l.b16 %v397
  %v2709 = vunpack.c.l.b16 %v398
  %v2710 = vunpack.c.l.b16 %v399
  %v2711 = vunpack.c.l.b16 %v400
  %v2712 = vunpack.c.l.b16 %v401
  %v2713 = vunpack.c.l.b16 %v402
  %v2714 = vunpack.c.l.b16 %v403
  %v2715 = vunpack.c.l.b16 %v404
  %v2716 = vunpack.c.l.b16 %v405
  %v2717 = vunpack.c.l.b16 %v406
  %v2718 = vunpack.c.l.b16 %v407
  %v2719 = vunpack.c.l.b16 %v408
  %v2720 = vunpack.c.l.b16 %v409
  %v2721 = vunpack.c.l.b16 %v410
  %v2722 = vunpack.c.l.b16 %v411
  %v2723 = vunpack.c.l.b16 %v412
  %v2724 = vunpack.c.l.b16 %v413
  %v2725 = vunpack.c.l.b16 %v414
  %v2726 = vunpack.c.l.b16 %v415
  %v2727 = vunpack.c.l.b16 %v416
  %v2728 = vunpack.c.l.b16 %v417
  %v2729 = vunpack.c.l.b16 %v418
  %v2730 = vunpack.c.l.b16 %v419
  %v2731 = vunpack.c.l.b16 %v420
  %v2732 = vunpack.c.l.b16 %v421
  %v2733 = vunpack.c.l.b16 %v422
  %v2734 = vunpack.c.l.b16 %v423
  %v2735 = vunpack.c.l.b16 %v424
  %v2736 = vunpack.c.l.b16 %v425
  %v2737 = vunpack.c.l.b16 %v426
  %v2738 = vunpack.c.l.b16 %v427
  %v2739 = vunpack.c.l.b16 %v428
  %v2740 = vunpack.c.l.b16 %v429
  %v2741 = vunpack.c.l.b16 %v430
  %v2742 = vunpack.c.l.b16 %v431
  %v2743 = vunpack.c.l.b16 %v432
  %v2744 = vunpack.c.l.b16 %v433
  %v2745 = vunpack.c.l.b16 %v434
  %v2746 = vunpack.c.l.b16 %v435
  %v2747 = vunpack.c.l.b16 %v436
  %v2748 = vunpack.c.l.b16 %v437
  %v2749 = vunpack.c.l.b16 %v438
  %v2750 = vunpack.c.l.b16 %v439
  %v2751 = vunpack.c.l.b16 %v440
  %v2752 = vunpack.c.l.b16 %v441
  %v2753 = vunpack.c.l.b16 %v442
  %v2754 = vunpack.c.l.b16 %v443
  %v2755 = vunpack.c.l.b16 %v444
  %v2756 = vunpack.c.l.b16 %v445
  %v2757 = vunpack.c.l.b16 %v446
  %v2758 = vunpack.c.l.b16 %v447
  %v2759 = vunpack.c.l.b16 %v448
  %v2760 = vunpack.c.l.b16 %v449
  %v2761 = vunpack.c.l.b16 %v450
  %v2762 = vunpack.c.l.b16 %v451
  %v2763 = vunpack.c.l.b16 %v452
  %v2764 = vunpack.c.l.b16 %v453
  %v2765 = vunpack.c.l.b16 %v454
  %v2766 = vunpack.c.l.b16 %v455
  %v2767 = vunpack.c.l.b16 %v456
  %v2768 = vunpack.c.l.b16 %v457
  %v2769 = vunpack.c.l.b16 %v458
  %v2770 = vunpack.c.l.b16 %v459
  %v2771 = vunpack.c.l.b16 %v460
  %v2772 = vunpack.c.l.b16 %v461
  %v2773 = vunpack.c.l.b16 %v462
  %v2774 = vunpack.c.l.b16 %v463
  %v2775 = vunpack.c.l.b16 %v464
  %v2776 = vunpack.c.l.b16 %v465
  %v2777 = vunpack.c.l.b16 %v466
  %v2778 = vunpack.c.l.b16 %v467
  %v2779 = vunpack.c.l.b16 %v468
  %v2780 = vunpack.c.l.b16 %v469
  %v2781 = vunpack.c.l.b16 %v470
  %v2782 = vunpack.c.l.b16 %v471
  %v2783 = vunpack.c.l.b16 %v472
  %v2784 = vunpack.c.l.b16 %v473
  %v2785 = vunpack.c.l.b16 %v474
  %v2786 = vunpack.c.l.b16 %v475
  %v2787 = vunpack.c.l.b16 %v476
  %v2788 = vunpack.c.l.b16 %v477
  %v2789 = vunpack.c.l.b16 %v478
  %v2790 = vunpack.c.l.b16 %v479
  %v2791 = vunpack.c.l.b16 %v480
  %v2792 = vunpack.c.l.b16 %v481
  %v2793 = vunpack.c.l.b16 %v482
  %v2794 = vunpack.c.l.b16 %v483
  %v2795 = vunpack.c.l.b16 %v484
  %v2796 = vunpack.c.l.b16 %v485
  %v2797 = vunpack.c.l.b16 %v486
  %v2798 = vunpack.c.l.b16 %v487
  %v2799 = vunpack.c.l.b16 %v488
  %v2800 = vunpack.c.l.b16 %v489
  %v2801 = vunpack.c.l.b16 %v490
  %v2802 = vunpack.c.l.b16 %v491
  %v2803 = vunpack.c.l.b16 %v492
  %v2804 = vunpack.c.l.b16 %v493
  %v2805 = vunpack.c.l.b16 %v494
  %v2806 = vunpack.c.l.b16 %v495
  %v2807 = vunpack.c.l.b16 %v496
  %v2808 = vunpack.c.l.b16 %v497
  %v2809 = vunpack.c.l.b16 %v498
  %v2810 = vunpack.c.l.b16 %v499
  %v2811 = vunpack.c.l.b16 %v500
  %v2812 = vunpack.c.l.b16 %v501
  %v2813 = vunpack.c.l.b16 %v502
  %v2814 = vunpack.c.l.b16 %v503
  %v2815 = vunpack.c.l.b16 %v504
  %v2816 = vunpack.c.l.b16 %v505
  %v2817 = vunpack.c.l.b16 %v506
  %v2818 = vunpack.c.l.b16 %v507
  %v2819 = vunpack.c.l.b16 %v508
  %v2820 = vunpack.c.l.b16 %v509
  %v2821 = vunpack.c.l.b16 %v510
  %v2822 = vunpack.c.l.b16 %v511
  %v2823 = vunpack.c.l.b16 %v512
  %v2824 = vunpack.c.l.b16 %v513
  %v2825 = vunpack.c.l.b16 %v514
  %v2826 = vunpack.c.l.b16 %v515
  %v2827 = vunpack.c.l.b16 %v516
  %v2828 = vunpack.c.l.b16 %v517
  %v2829 = vunpack.c.l.b16 %v518
  %v2830 = vunpack.c.l.b16 %v519
  %v2831 = vunpack.c.l.b16 %v520
  %v2832 = vunpack.c.l.b16 %v521
  %v2833 = vunpack.c.l.b16 %v522
  %v2834 = vunpack.c.l.b16 %v523
  %v2835 = vunpack.c.l.b16 %v524
  %v2836 = vunpack.c.l.b16 %v525
  %v2837 = vunpack.c.l.b16 %v526
  %v2838 = vunpack.c.l.b16 %v527
  %v2839 = vunpack.c.l.b16 %v528
  %v2840 = vunpack.c.l.b16 %v529
  %v2841 = vunpack.c.l.b16 %v530
  %v2842 = vunpack.c.l.b16 %v531
  %v2843 = vunpack.c.l.b16 %v532
  %v2844 = vunpack.c.l.b16 %v533
  %v2845 = vunpack.c.l.b16 %v534
  %v2846 = vunpack.c.l.b16 %v535
  %v2847 = vunpack.c.l.b16 %v536
  %v2848 = vunpack.c.l.b16 %v537
  %v2849 = vunpack.c.l.b16 %v538
  %v2850 = vunpack.c.l.b16 %v539
  %v2851 = vunpack.c.l.b16 %v540
  %v2852 = vunpack.c.l.b16 %v541
  %v2853 = vunpack.c.l.b16 %v542
  %v2854 = vunpack.c.l.b16 %v543
  %v2855 = vunpack.c.l.b16 %v544
  %v2856 = vunpack.c.l.b16 %v545
  %v2857 = vunpack.c.l.b16 %v546
  %v2858 = vunpack.c.l.b16 %v547
  %v2859 = vunpack.c.l.b16 %v548
  %v2860 = vunpack.c.l.b16 %v549
  %v2861 = vunpack.c.l.b16 %v550
  %v2862 = vunpack.c.l.b16 %v551
  %v2863 = vunpack.c.l.b16 %v552
  %v2864 = vunpack.c.l.b16 %v553
  %v2865 = vunpack.c.l.b16 %v554
  %v2866 = vunpack.c.l.b16 %v555
  %v2867 = vunpack.c.l.b16 %v556
  %v2868 = vunpack.c.l.b16 %v557
  %v2869 = vunpack.c.l.b16 %v558
  %v2870 = vunpack.c.l.b16 %v559
  %v2871 = vunpack.c.l.b16 %v560
  %v2872 = vunpack.c.l.b16 %v561
  %v2873 = vunpack.c.l.b16 %v562
  %v2874 = vunpack.c.l.b16 %v563
  %v2875 = vunpack.c.l.b16 %v564
  %v2876 = vunpack.c.l.b16 %v565
  %v2877 = vunpack.c.l.b16 %v566
  %v2878 = vunpack.c.l.b16 %v567
  %v2879 = vunpack.c.l.b16 %v568
  %v2880 = vunpack.c.l.b16 %v569
  %v2881 = vunpack.c.l.b16 %v570
  %v2882 = vunpack.c.l.b16 %v571
  %v2883 = vunpack.c.l.b16 %v572
  %v2884 = vunpack.c.l.b16 %v573
  %v2885 = vunpack.c.l.b16 %v574
  %v2886 = vunpack.c.l.b16 %v575
  %v2887 = vunpack.c.l.b16 %v576
  %v2888 = vunpack.c.l.b16 %v577
  %v2889 = vunpack.c.l.b16 %v578
  %v2890 = vunpack.c.l.b16 %v579
  %v2891 = vunpack.c.l.b16 %v580
  %v2892 = vunpack.c.l.b16 %v581
  %v2893 = vunpack.c.l.b16 %v582
  %v2894 = vunpack.c.l.b16 %v583
  %v2895 = vunpack.c.l.b16 %v584
  %v2896 = vunpack.c.l.b16 %v585
  %v2897 = vunpack.c.l.b16 %v586
  %v2898 = vunpack.c.l.b16 %v587
  %v2899 = vunpack.c.l.b16 %v588
  %v2900 = vunpack.c.l.b16 %v589
  %v2901 = vunpack.c.l.b16 %v590
  %v2902 = vunpack.c.l.b16 %v591
  %v2903 = vunpack.c.l.b16 %v592
  %v2904 = vunpack.c.l.b16 %v593
  %v2905 = vunpack.c.l.b16 %v594
  %v2906 = vunpack.c.l.b16 %v595
  %v2907 = vunpack.c.l.b16 %v596
  %v2908 = vunpack.c.l.b16 %v597
  %v2909 = vunpack.c.l.b16 %v598
  %v2910 = vunpack.c.l.b16 %v599
  %v2911 = vunpack.c.l.b16 %v600
  %v2912 = vunpack.c.l.b16 %v601
  %v2913 = vunpack.c.l.b16 %v602
  %v2914 = vunpack.c.l.b16 %v603
  %v2915 = vunpack.c.l.b16 %v604
  %v2916 = vunpack.c.l.b16 %v605
  %v2917 = vunpack.c.l.b16 %v606
  %v2918 = vunpack.c.l.b16 %v607
  %v2919 = vunpack.c.l.b16 %v608
  %v2920 = vunpack.c.l.b16 %v609
  %v2921 = vunpack.c.l.b16 %v610
  %v2922 = vunpack.c.l.b16 %v611
  %v2923 = vunpack.c.l.b16 %v612
  %v2924 = vunpack.c.l.b16 %v613
  %v2925 = vunpack.c.l.b16 %v614
  %v2926 = vunpack.c.l.b16 %v615
  %v2927 = vunpack.c.l.b16 %v616
  %v2928 = vunpack.c.l.b16 %v617
  %v2929 = vunpack.c.l.b16 %v618
  %v2930 = vunpack.c.l.b16 %v619
  %v2931 = vunpack.c.l.b16 %v620
  %v2932 = vunpack.c.l.b16 %v621
  %v2933 = vunpack.c.l.b16 %v622
  %v2934 = vunpack.c.l.b16 %v623
  %v2935 = vunpack.c.l.b16 %v624
  %v2936 = vunpack.c.l.b16 %v625
  %v2937 = vunpack.c.l.b16 %v626
  %v2938 = vunpack.c.l.b16 %v627
  %v2939 = vunpack.c.l.b16 %v628
  %v2940 = vunpack.c.l.b16 %v629
  %v2941 = vunpack.c.l.b16 %v630
  %v2942 = vunpack.c.l.b16 %v631
  %v2943 = vunpack.c.l.b16 %v632
  %v2944 = vunpack.c.l.b16 %v633
  %v2945 = vunpack.c.l.b16 %v634
  %v2946 = vunpack.c.l.b16 %v635
  %v2947 = vunpack.c.l.b16 %v636
  %v2948 = vunpack.c.l.b16 %v637
  %v2949 = vunpack.c.l.b16 %v638
  %v2950 = vunpack.c.l.b16 %v639
  %v2951 = vunpack.c.l.b16 %v640
  %v2952 = vunpack.c.l.b16 %v641
  %v2953 = vunpack.c.l.b16 %v642
  %v2954 = vunpack.c.l.b16 %v643
  %v2955 = vunpack.c.l.b16 %v644
  %v2956 = vunpack.c.l.b16 %v645
  %v2957 = vunpack.c.l.b16 %v646
  %v2958 = vunpack.c.l.b16 %v647
  %v2959 = vunpack.c.l.b16 %v648
  %v2960 = vunpack.c.l.b16 %v649
  %v2961 = vunpack.c.l.b16 %v650
  %v2962 = vunpack.c.l.b16 %v651
  %v2963 = vunpack.c.l.b16 %v652
  %v2964 = vunpack.c.l.b16 %v653
  %v2965 = vunpack.c.l.b16 %v654
  %v2966 = vunpack.c.l.b16 %v655
  %v2967 = vunpack.c.l.b16 %v656
  %v2968 = vunpack.c.l.b16 %v657
  %v2969 = vunpack.c.l.b16 %v658
  %v2970 = vunpack.c.l.b16 %v659
  %v2971 = vunpack.c.l.b16 %v660
  %v2972 = vunpack.c.l.b16 %v661
  %v2973 = vunpack.c.l.b16 %v662
  %v2974 = vunpack.c.l.b16 %v663
  %v2975 = vunpack.c.l.b16 %v664
  %v2976 = vunpack.c.l.b16 %v665
  %v2977 = vunpack.c.l.b16 %v666
  %v2978 = vunpack.c.l.b16 %v667
  %v2979 = vunpack.c.l.b16 %v668
  %v2980 = vunpack.c.l.b16 %v669
  %v2981 = vunpack.c.l.b16 %v670
  %v2982 = vunpack.c.l.b16 %v671
  %v2983 = vunpack.c.l.b16 %v672
  %v2984 = vunpack.c.l.b16 %v673
  %v2985 = vunpack.c.l.b16 %v674
  %v2986 = vunpack.c.l.b16 %v675
  %v2987 = vunpack.c.l.b16 %v676
  %v2988 = vunpack.c.l.b16 %v677
  %v2989 = vunpack.c.l.b16 %v678
  %v2990 = vunpack.c.l.b16 %v679
  %v2991 = vunpack.c.l.b16 %v680
  %v2992 = vunpack.c.l.b16 %v681
  %v2993 = vunpack.c.l.b16 %v682
  %v2994 = vunpack.c.l.b16 %v683
  %v2995 = vunpack.c.l.b16 %v684
  %v2996 = vunpack.c.l.b16 %v685
  %v2997 = vunpack.c.l.b16 %v686
  %v2998 = vunpack.c.l.b16 %v687
  %v2999 = vunpack.c.l.b16 %v688
  %v3000 = vunpack.c.l.b16 %v689
  %v3001 = vunpack.c.l.b16 %v690
  %v3002 = vunpack.c.l.b16 %v691
  %v3003 = vunpack.c.l.b16 %v692
  %v3004 = vunpack.c.l.b16 %v693
  %v3005 = vunpack.c.l.b16 %v694
  %v3006 = vunpack.c.l.b16 %v695
  %v3007 = vunpack.c.l.b16 %v696
  %v3008 = vunpack.c.l.b16 %v697
  %v3009 = vunpack.c.l.b16 %v698
  %v3010 = vunpack.c.l.b16 %v699
  %v3011 = vunpack.c.l.b16 %v700
  %v3012 = vunpack.c.l.b16 %v701
  %v3013 = vunpack.c.l.b16 %v702
  %v3014 = vunpack.c.l.b16 %v703
  %v3015 = vunpack.c.l.b16 %v704
  %v3016 = vunpack.c.l.b16 %v705
  %v3017 = vunpack.c.l.b16 %v706
  %v3018 = vunpack.c.l.b16 %v707
  %v3019 = vunpack.c.l.b16 %v708
  %v3020 = vunpack.c.l.b16 %v709
  %v3021 = vunpack.c.l.b16 %v710
  %v3022 = vunpack.c.l.b16 %v711
  %v3023 = vunpack.c.l.b16 %v712
  %v3024 = vunpack.c.l.b16 %v713
  %v3025 = vunpack.c.l.b16 %v714
  %v3026 = vunpack.c.l.b16 %v715
  %v3027 = vunpack.c.l.b16 %v716
  %v3028 = vunpack.c.l.b16 %v717
  %v3029 = vunpack.c.l.b16 %v718
  %v3030 = vunpack.c.l.b16 %v719
  %v3031 = vunpack.c.l.b16 %v720
  %v3032 = vunpack.c.l.b16 %v721
  %v3033 = vunpack.c.l.b16 %v722
  %v3034 = vunpack.c.l.b16 %v723
  %v3035 = vunpack.c.l.b16 %v724
  %v3036 = vunpack.c.l.b16 %v725
  %v3037 = vunpack.c.l.b16 %v726
  %v3038 = vunpack.c.l.b16 %v727
  %v3039 = vunpack.c.l.b16 %v728
  %v3040 = vunpack.c.l.b16 %v729
  %v3041 = vunpack.c.l.b16 %v730
  %v3042 = vunpack.c.l.b16 %v731
  %v3043 = vunpack.c.l.b16 %v732
  %v3044 = vunpack.c.l.b16 %v733
  %v3045 = vunpack.c.l.b16 %v734
  %v3046 = vunpack.c.l.b16 %v735
  %v3047 = vunpack.c.l.b16 %v736
  %v3048 = vunpack.c.l.b16 %v737
  %v3049 = vunpack.c.l.b16 %v738
  %v3050 = vunpack.c.l.b16 %v739
  %v3051 = vunpack.c.l.b16 %v740
  %v3052 = vunpack.c.l.b16 %v741
  %v3053 = vunpack.c.l.b16 %v742
  %v3054 = vunpack.c.l.b16 %v743
  %v3055 = vunpack.c.l.b16 %v744
  %v3056 = vunpack.c.l.b16 %v745
  %v3057 = vunpack.c.l.b16 %v746
  %v3058 = vunpack.c.l.b16 %v747
  %v3059 = vunpack.c.l.b16 %v748
  %v3060 = vunpack.c.l.b16 %v749
  %v3061 = vunpack.c.l.b16 %v750
  %v3062 = vunpack.c.l.b16 %v751
  %v3063 = vunpack.c.l.b16 %v752
  %v3064 = vunpack.c.l.b16 %v753
  %v3065 = vunpack.c.l.b16 %v754
  %v3066 = vunpack.c.l.b16 %v755
  %v3067 = vunpack.c.l.b16 %v756
  %v3068 = vunpack.c.l.b16 %v757
  %v3069 = vunpack.c.l.b16 %v758
  %v3070 = vunpack.c.l.b16 %v759
  %v3071 = vunpack.c.l.b16 %v760
  %v3072 = vunpack.c.l.b16 %v761
  %v3073 = vunpack.c.l.b16 %v762
  %v3074 = vunpack.c.l.b16 %v763
  %v3075 = vunpack.c.l.b16 %v764
  %v3076 = vunpack.c.l.b16 %v765
  %v3077 = vunpack.c.l.b16 %v766
  %v3078 = vunpack.c.l.b16 %v767
  %v3079 = vunpack.c.l.b16 %v768
  %v3080 = vunpack.c.l.b16 %v769
  %v3081 = vunpack.c.l.b16 %v770
  %v3082 = vunpack.c.l.b16 %v771
  %v3083 = vunpack.c.l.b16 %v772
  %v3084 = vunpack.c.l.b16 %v773
  %v3085 = vunpack.c.l.b16 %v774
  %v3086 = vunpack.c.l.b16 %v775
  %v3087 = vunpack.c.l.b16 %v776
  %v3088 = vunpack.c.l.b16 %v777
  %v3089 = vunpack.c.l.b16 %v778
  %v3090 = vunpack.c.l.b16 %v779
  %v3091 = vunpack.c.l.b16 %v780
  %v3092 = vunpack.c.l.b16 %v781
  %v3093 = vunpack.c.l.b16 %v782
  %v3094 = vpack.c.b16 %v2583, %v2582
  %v3095 = vpack.c.b16 %v2585, %v2584
  %v3096 = vpack.c.b16 %v2587, %v2586
  %v3097 = vpack.c.b16 %v2589, %v2588
  %v3098 = vpack.c.b16 %v2591, %v2590
  %v3099 = vpack.c.b16 %v2593, %v2592
  %v3100 = vpack.c.b16 %v2595, %v2594
  %v3101 = vpack.c.b16 %v2597, %v2596
  %v3102 = vpack.c.b16 %v2599, %v2598
  %v3103 = vpack.c.b16 %v2601, %v2600
  %v3104 = vpack.c.b16 %v2603, %v2602
  %v3105 = vpack.c.b16 %v2605, %v2604
  %v3106 = vpack.c.b16 %v2607, %v2606
  %v3107 = vpack.c.b16 %v2609, %v2608
  %v3108 = vpack.c.b16 %v2611, %v2610
  %v3109 = vpack.c.b16 %v2613, %v2612
  %v3110 = vpack.c.b16 %v2615, %v2614
  %v3111 = vpack.c.b16 %v2617, %v2616
  %v3112 = vpack.c.b16 %v2619, %v2618
  %v3113 = vpack.c.b16 %v2621, %v2620
  %v3114 = vpack.c.b16 %v2623, %v2622
  %v3115 = vpack.c.b16 %v2625, %v2624
  %v3116 = vpack.c.b16 %v2627, %v2626
  %v3117 = vpack.c.b16 %v2629, %v2628
  %v3118 = vpack.c.b16 %v2631, %v2630
  %v3119 = vpack.c.b16 %v2633, %v2632
  %v3120 = vpack.c.b16 %v2635, %v2634
  %v3121 = vpack.c.b16 %v2637, %v2636
  %v3122 = vpack.c.b16 %v2639, %v2638
  %v3123 = vpack.c.b16 %v2641, %v2640
  %v3124 = vpack.c.b16 %v2643, %v2642
  %v3125 = vpack.c.b16 %v2645, %v2644
  %v3126 = vpack.c.b16 %v2647, %v2646
  %v3127 = vpack.c.b16 %v2649, %v2648
  %v3128 = vpack.c.b16 %v2651, %v2650
  %v3129 = vpack.c.b16 %v2653, %v2652
  %v3130 = vpack.c.b16 %v2655, %v2654
  %v3131 = vpack.c.b16 %v2657, %v2656
  %v3132 = vpack.c.b16 %v2659, %v2658
  %v3133 = vpack.c.b16 %v2661, %v2660
  %v3134 = vpack.c.b16 %v2663, %v2662
  %v3135 = vpack.c.b16 %v2665, %v2664
  %v3136 = vpack.c.b16 %v2667, %v2666
  %v3137 = vpack.c.b16 %v2669, %v2668
  %v3138 = vpack.c.b16 %v2671, %v2670
  %v3139 = vpack.c.b16 %v2673, %v2672
  %v3140 = vpack.c.b16 %v2675, %v2674
  %v3141 = vpack.c.b16 %v2677, %v2676
  %v3142 = vpack.c.b16 %v2679, %v2678
  %v3143 = vpack.c.b16 %v2681, %v2680
  %v3144 = vpack.c.b16 %v2683, %v2682
  %v3145 = vpack.c.b16 %v2685, %v2684
  %v3146 = vpack.c.b16 %v2687, %v2686
  %v3147 = vpack.c.b16 %v2689, %v2688
  %v3148 = vpack.c.b16 %v2691, %v2690
  %v3149 = vpack.c.b16 %v2693, %v2692
  %v3150 = vpack.c.b16 %v2695, %v2694
  %v3151 = vpack.c.b16 %v2697, %v2696
  %v3152 = vpack.c.b16 %v2699, %v2698
  %v3153 = vpack.c.b16 %v2701, %v2700
  %v3154 = vpack.c.b16 %v2703, %v2702
  %v3155 = vpack.c.b16 %v2705, %v2704
  %v3156 = vpack.c.b16 %v2707, %v2706
  %v3157 = vpack.c.b16 %v2709, %v2708
  %v3158 = vpack.c.b16 %v2711, %v2710
  %v3159 = vpack.c.b16 %v2713, %v2712
  %v3160 = vpack.c.b16 %v2715, %v2714
  %v3161 = vpack.c.b16 %v2717, %v2716
  %v3162 = vpack.c.b16 %v2719, %v2718
  %v3163 = vpack.c.b16 %v2721, %v2720
  %v3164 = vpack.c.b16 %v2723, %v2722
  %v3165 = vpack.c.b16 %v2725, %v2724
  %v3166 = vpack.c.b16 %v2727, %v2726
  %v3167 = vpack.c.b16 %v2729, %v2728
  %v3168 = vpack.c.b16 %v2731, %v2730
  %v3169 = vpack.c.b16 %v2733, %v2732
  %v3170 = vpack.c.b16 %v2735, %v2734
  %v3171 = vpack.c.b16 %v2737, %v2736
  %v3172 = vpack.c.b16 %v2739, %v2738
  %v3173 = vpack.c.b16 %v2741, %v2740
  %v3174 = vpack.c.b16 %v2743, %v2742
  %v3175 = vpack.c.b16 %v2745, %v2744
  %v3176 = vpack.c.b16 %v2747, %v2746
  %v3177 = vpack.c.b16 %v2749, %v2748
  %v3178 = vpack.c.b16 %v2751, %v2750
  %v3179 = vpack.c.b16 %v2753, %v2752
  %v3180 = vpack.c.b16 %v2755, %v2754
  %v3181 = vpack.c.b16 %v2757, %v2756
  %v3182 = vpack.c.b16 %v2759, %v2758
  %v3183 = vpack.c.b16 %v2761, %v2760
  %v3184 = vpack.c.b16 %v2763, %v2762
  %v3185 = vpack.c.b16 %v2765, %v2764
  %v3186 = vpack.c.b16 %v2767, %v2766
  %v3187 = vpack.c.b16 %v2769, %v2768
  %v3188 = vpack.c.b16 %v2771, %v2770
  %v3189 = vpack.c.b16 %v2773, %v2772
  %v3190 = vpack.c.b16 %v2775, %v2774
  %v3191 = vpack.c.b16 %v2777, %v2776
  %v3192 = vpack.c.b16 %v2779, %v2778
  %v3193 = vpack.c.b16 %v2781, %v2780
  %v3194 = vpack.c.b16 %v2783, %v2782
  %v3195 = vpack.c.b16 %v2785, %v2784
  %v3196 = vpack.c.b16 %v2787, %v2786
  %v3197 = vpack.c.b16 %v2789, %v2788
  %v3198 = vpack.c.b16 %v2791, %v2790
  %v3199 = vpack.c.b16 %v2793, %v2792
  %v3200 = vpack.c.b16 %v2795, %v2794
  %v3201 = vpack.c.b16 %v2797, %v2796
  %v3202 = vpack.c.b16 %v2799, %v2798
  %v3203 = vpack.c.b16 %v2801, %v2800
  %v3204 = vpack.c.b16 %v2803, %v2802
  %v3205 = vpack.c.b16 %v2805, %v2804
  %v3206 = vpack.c.b16 %v2807, %v2806
  %v3207 = vpack.c.b16 %v2809, %v2808
  %v3208 = vpack.c.b16 %v2811, %v2810
  %v3209 = vpack.c.b16 %v2813, %v2812
  %v3210 = vpack.c.b16 %v2815, %v2814
  %v3211 = vpack.c.b16 %v2817, %v2816
  %v3212 = vpack.c.b16 %v2819, %v2818
  %v3213 = vpack.c.b16 %v2821, %v2820
  %v3214 = vpack.c.b16 %v2823, %v2822
  %v3215 = vpack.c.b16 %v2825, %v2824
  %v3216 = vpack.c.b16 %v2827, %v2826
  %v3217 = vpack.c.b16 %v2829, %v2828
  %v3218 = vpack.c.b16 %v2831, %v2830
  %v3219 = vpack.c.b16 %v2833, %v2832
  %v3220 = vpack.c.b16 %v2835, %v2834
  %v3221 = vpack.c.b16 %v2837, %v2836
  %v3222 = vpack.c.b16 %v2839, %v2838
  %v3223 = vpack.c.b16 %v2841, %v2840
  %v3224 = vpack.c.b16 %v2843, %v2842
  %v3225 = vpack.c.b16 %v2845, %v2844
  %v3226 = vpack.c.b16 %v2847, %v2846
  %v3227 = vpack.c.b16 %v2849, %v2848
  %v3228 = vpack.c.b16 %v2851, %v2850
  %v3229 = vpack.c.b16 %v2853, %v2852
  %v3230 = vpack.c.b16 %v2855, %v2854
  %v3231 = vpack.c.b16 %v2857, %v2856
  %v3232 = vpack.c.b16 %v2859, %v2858
  %v3233 = vpack.c.b16 %v2861, %v2860
  %v3234 = vpack.c.b16 %v2863, %v2862
  %v3235 = vpack.c.b16 %v2865, %v2864
  %v3236 = vpack.c.b16 %v2867, %v2866
  %v3237 = vpack.c.b16 %v2869, %v2868
  %v3238 = vpack.c.b16 %v2871, %v2870
  %v3239 = vpack.c.b16 %v2873, %v2872
  %v3240 = vpack.c.b16 %v2875, %v2874
  %v3241 = vpack.c.b16 %v2877, %v2876
  %v3242 = vpack.c.b16 %v2879, %v2878
  %v3243 = vpack.c.b16 %v2881, %v2880
  %v3244 = vpack.c.b16 %v2883, %v2882
  %v3245 = vpack.c.b16 %v2885, %v2884
  %v3246 = vpack.c.b16 %v2887, %v2886
  %v3247 = vpack.c.b16 %v2889, %v2888
  %v3248 = vpack.c.b16 %v2891, %v2890
  %v3249 = vpack.c.b16 %v2893, %v2892
  %v3250 = vpack.c.b16 %v2895, %v2894
  %v3251 = vpack.c.b16 %v2897, %v2896
  %v3252 = vpack.c.b16 %v2899, %v2898
  %v3253 = vpack.c.b16 %v2901, %v2900
  %v3254 = vpack.c.b16 %v2903, %v2902
  %v3255 = vpack.c.b16 %v2905, %v2904
  %v3256 = vpack.c.b16 %v2907, %v2906
  %v3257 = vpack.c.b16 %v2909, %v2908
  %v3258 = vpack.c.b16 %v2911, %v2910
  %v3259 = vpack.c.b16 %v2913, %v2912
  %v3260 = vpack.c.b16 %v2915, %v2914
  %v3261 = vpack.c.b16 %v2917, %v2916
  %v3262 = vpack.c.b16 %v2919, %v2918
  %v3263 = vpack.c.b16 %v2921, %v2920
  %v3264 = vpack.c.b16 %v2923, %v2922
  %v3265 = vpack.c.b16 %v2925, %v2924
  %v3266 = vpack.c.b16 %v2927, %v2926
  %v3267 = vpack.c.b16 %v2929, %v2928
  %v3268 = vpack.c.b16 %v2931, %v2930
  %v3269 = vpack.c.b16 %v2933, %v2932
  %v3270 = vpack.c.b16 %v2935, %v2934
  %v3271 = vpack.c.b16 %v2937, %v2936
  %v3272 = vpack.c.b16 %v2939, %v2938
  %v3273 = vpack.c.b16 %v2941, %v2940
  %v3274 = vpack.c.b16 %v2943, %v2942
  %v3275 = vpack.c.b16 %v2945, %v2944
  %v3276 = vpack.c.b16 %v2947, %v2946
  %v3277 = vpack.c.b16 %v2949, %v2948
  %v3278 = vpack.c.b16 %v2951, %v2950
  %v3279 = vpack.c.b16 %v2953, %v2952
  %v3280 = vpack.c.b16 %v2955, %v2954
  %v3281 = vpack.c.b16 %v2957, %v2956
  %v3282 = vpack.c.b16 %v2959, %v2958
  %v3283 = vpack.c.b16 %v2961, %v2960
  %v3284 = vpack.c.b16 %v2963, %v2962
  %v3285 = vpack.c.b16 %v2965, %v2964
  %v3286 = vpack.c.b16 %v2967, %v2966
  %v3287 = vpack.c.b16 %v2969, %v2968
  %v3288 = vpack.c.b16 %v2971, %v2970
  %v3289 = vpack.c.b16 %v2973, %v2972
  %v3290 = vpack.c.b16 %v2975, %v2974
  %v3291 = vpack.c.b16 %v2977, %v2976
  %v3292 = vpack.c.b16 %v2979, %v2978
  %v3293 = vpack.c.b16 %v2981, %v2980
  %v3294 = vpack.c.b16 %v2983, %v2982
  %v3295 = vpack.c.b16 %v2985, %v2984
  %v3296 = vpack.c.b16 %v2987, %v2986
  %v3297 = vpack.c.b16 %v2989, %v2988
  %v3298 = vpack.c.b16 %v2991, %v2990
  %v3299 = vpack.c.b16 %v2993, %v2992
  %v3300 = vpack.c.b16 %v2995, %v2994
  %v3301 = vpack.c.b16 %v2997, %v2996
  %v3302 = vpack.c.b16 %v2999, %v2998
  %v3303 = vpack.c.b16 %v3001, %v3000
  %v3304 = vpack.c.b16 %v3003, %v3002
  %v3305 = vpack.c.b16 %v3005, %v3004
  %v3306 = vpack.c.b16 %v3007, %v3006
  %v3307 = vpack.c.b16 %v3009, %v3008
  %v3308 = vpack.c.b16 %v3011, %v3010
  %v3309 = vpack.c.b16 %v3013, %v3012
  %v3310 = vpack.c.b16 %v3015, %v3014
  %v3311 = vpack.c.b16 %v3017, %v3016
  %v3312 = vpack.c.b16 %v3019, %v3018
  %v3313 = vpack.c.b16 %v3021, %v3020
  %v3314 = vpack.c.b16 %v3023, %v3022
  %v3315 = vpack.c.b16 %v3025, %v3024
  %v3316 = vpack.c.b16 %v3027, %v3026
  %v3317 = vpack.c.b16 %v3029, %v3028
  %v3318 = vpack.c.b16 %v3031, %v3030
  %v3319 = vpack.c.b16 %v3033, %v3032
  %v3320 = vpack.c.b16 %v3035, %v3034
  %v3321 = vpack.c.b16 %v3037, %v3036
  %v3322 = vpack.c.b16 %v3039, %v3038
  %v3323 = vpack.c.b16 %v3041, %v3040
  %v3324 = vpack.c.b16 %v3043, %v3042
  %v3325 = vpack.c.b16 %v3045, %v3044
  %v3326 = vpack.c.b16 %v3047, %v3046
  %v3327 = vpack.c.b16 %v3049, %v3048
  %v3328 = vpack.c.b16 %v3051, %v3050
  %v3329 = vpack.c.b16 %v3053, %v3052
  %v3330 = vpack.c.b16 %v3055, %v3054
  %v3331 = vpack.c.b16 %v3057, %v3056
  %v3332 = vpack.c.b16 %v3059, %v3058
  %v3333 = vpack.c.b16 %v3061, %v3060
  %v3334 = vpack.c.b16 %v3063, %v3062
  %v3335 = vpack.c.b16 %v3065, %v3064
  %v3336 = vpack.c.b16 %v3067, %v3066
  %v3337 = vpack.c.b16 %v3069, %v3068
  %v3338 = vpack.c.b16 %v3071, %v3070
  %v3339 = vpack.c.b16 %v3073, %v3072
  %v3340 = vpack.c.b16 %v3075, %v3074
  %v3341 = vpack.c.b16 %v3077, %v3076
  %v3342 = vpack.c.b16 %v3079, %v3078
  %v3343 = vpack.c.b16 %v3081, %v3080
  %v3344 = vpack.c.b16 %v3083, %v3082
  %v3345 = vpack.c.b16 %v3085, %v3084
  %v3346 = vpack.c.b16 %v3087, %v3086
  %v3347 = vpack.c.b16 %v3089, %v3088
  %v3348 = vpack.c.b16 %v3091, %v3090
  %v3349 = vpack.c.b16 %v3093, %v3092
  %3606 = vmatprep.subr.bf16.mxu0 0
  %3607 = vmatpush1.bf16.msra.mxu0 %v3094
  %3608 = vmatprep.subr.bf16.mxu0 0
  %3609 = vmatpush1.bf16.msra.mxu0 %v3095
  %3610 = vmatprep.subr.bf16.mxu0 0
  %3611 = vmatpush1.bf16.msra.mxu0 %v3096
  %3612 = vmatprep.subr.bf16.mxu0 0
  %3613 = vmatpush1.bf16.msra.mxu0 %v3097
  %3614 = vmatprep.subr.bf16.mxu0 0
  %3615 = vmatpush1.bf16.msra.mxu0 %v3098
  %3616 = vmatprep.subr.bf16.mxu0 0
  %3617 = vmatpush1.bf16.msra.mxu0 %v3099
  %3618 = vmatprep.subr.bf16.mxu0 0
  %3619 = vmatpush1.bf16.msra.mxu0 %v3100
  %3620 = vmatprep.subr.bf16.mxu0 0
  %3621 = vmatpush1.bf16.msra.mxu0 %v3101
  %3622 = vmatprep.subr.bf16.mxu0 0
  %3623 = vmatpush1.bf16.msra.mxu0 %v3102
  %3624 = vmatprep.subr.bf16.mxu0 0
  %3625 = vmatpush1.bf16.msra.mxu0 %v3103
  %3626 = vmatprep.subr.bf16.mxu0 0
  %3627 = vmatpush1.bf16.msra.mxu0 %v3104
  %3628 = vmatprep.subr.bf16.mxu0 0
  %3629 = vmatpush1.bf16.msra.mxu0 %v3105
  %3630 = vmatprep.subr.bf16.mxu0 0
  %3631 = vmatpush1.bf16.msra.mxu0 %v3106
  %3632 = vmatprep.subr.bf16.mxu0 0
  %3633 = vmatpush1.bf16.msra.mxu0 %v3107
  %3634 = vmatprep.subr.bf16.mxu0 0
  %3635 = vmatpush1.bf16.msra.mxu0 %v3108
  %3636 = vmatprep.subr.bf16.mxu0 0
  %3637 = vmatpush1.bf16.msra.mxu0 %v3109
  %3638 = vmatprep.mubr.bf16.mxu0 %v1559
  %3639 = vmatmul.mubr.bf16.gmra.mrb[0].mxu0 %v1558
  %v3640 = vpop.f32.mrb[0].mxu0
  %v3641 = vadd.f32 %v788, %v3640
  %v3642 = vpop.f32.mrb[0].mxu0
  %v3643 = vpop.f32.mrb[0].mxu0
  %v3644 = vadd.f32 %v788, %v3643
  %v3645 = vpop.f32.mrb[0].mxu0
  %3646 = vmatprep.mubr.bf16.mxu0 %v1591
  %3647 = vmatmul.mubr.bf16.gmra.mrb[0].mxu0 %v1590
  %v3648 = vpop.f32.mrb[0].mxu0
  %v3649 = vadd.f32 %v788, %v3648
  %v3650 = vpop.f32.mrb[0].mxu0
  %v3651 = vpop.f32.mrb[0].mxu0
  %v3652 = vadd.f32 %v788, %v3651
  %v3653 = vpop.f32.mrb[0].mxu0
  %3654 = vmatprep.mubr.bf16.mxu0 %v1623
  %3655 = vmatmul.mubr.bf16.gmra.mrb[0].mxu0 %v1622
  %v3656 = vpop.f32.mrb[0].mxu0
  %v3657 = vadd.f32 %v788, %v3656
  %v3658 = vpop.f32.mrb[0].mxu0
  %v3659 = vpop.f32.mrb[0].mxu0
  %v3660 = vadd.f32 %v788, %v3659
  %v3661 = vpop.f32.mrb[0].mxu0
  %3662 = vmatprep.mubr.bf16.mxu0 %v1655
  %3663 = vmatmul.mubr.bf16.gmra.mrb[0].mxu0 %v1654
  %v3664 = vpop.f32.mrb[0].mxu0
  %v3665 = vadd.f32 %v788, %v3664
  %v3666 = vpop.f32.mrb[0].mxu0
  %v3667 = vpop.f32.mrb[0].mxu0
  %v3668 = vadd.f32 %v788, %v3667
  %v3669 = vpop.f32.mrb[0].mxu0
  %3670 = vmatprep.mubr.bf16.mxu0 %v1687
  %3671 = vmatmul.mubr.bf16.gmra.mrb[0].mxu0 %v1686
  %v3672 = vpop.f32.mrb[0].mxu0
  %v3673 = vadd.f32 %v788, %v3672
  %v3674 = vpop.f32.mrb[0].mxu0
  %v3675 = vpop.f32.mrb[0].mxu0
  %v3676 = vadd.f32 %v788, %v3675
  %v3677 = vpop.f32.mrb[0].mxu0
  %3678 = vmatprep.mubr.bf16.mxu0 %v1719
  %3679 = vmatmul.mubr.bf16.gmra.mrb[0].mxu0 %v1718
  %v3680 = vpop.f32.mrb[0].mxu0
  %v3681 = vadd.f32 %v788, %v3680
  %v3682 = vpop.f32.mrb[0].mxu0
  %v3683 = vpop.f32.mrb[0].mxu0
  %v3684 = vadd.f32 %v788, %v3683
  %v3685 = vpop.f32.mrb[0].mxu0
  %3686 = vmatprep.mubr.bf16.mxu0 %v1751
  %3687 = vmatmul.mubr.bf16.gmra.mrb[0].mxu0 %v1750
  %v3688 = vpop.f32.mrb[0].mxu0
  %v3689 = vadd.f32 %v788, %v3688
  %v3690 = vpop.f32.mrb[0].mxu0
  %v3691 = vpop.f32.mrb[0].mxu0
  %v3692 = vadd.f32 %v788, %v3691
  %v3693 = vpop.f32.mrb[0].mxu0
  %3694 = vmatprep.mubr.bf16.mxu0 %v1783
  %3695 = vmatmul.mubr.bf16.gmra.mrb[0].mxu0 %v1782
  %v3696 = vpop.f32.mrb[0].mxu0
  %v3697 = vadd.f32 %v788, %v3696
  %v3698 = vpop.f32.mrb[0].mxu0
  %v3699 = vpop.f32.mrb[0].mxu0
  %v3700 = vadd.f32 %v788, %v3699
  %v3701 = vpop.f32.mrb[0].mxu0
  %3702 = vdwg.mxu0
  %3703 = vmatprep.subr.bf16.mxu0 0
  %3704 = vmatpush1.bf16.msra.mxu0 %v3110
  %3705 = vmatprep.subr.bf16.mxu0 0
  %3706 = vmatpush1.bf16.msra.mxu0 %v3111
  %3707 = vmatprep.subr.bf16.mxu0 0
  %3708 = vmatpush1.bf16.msra.mxu0 %v3112
  %3709 = vmatprep.subr.bf16.mxu0 0
  %3710 = vmatpush1.bf16.msra.mxu0 %v3113
  %3711 = vmatprep.subr.bf16.mxu0 0
  %3712 = vmatpush1.bf16.msra.mxu0 %v3114
  %3713 = vmatprep.subr.bf16.mxu0 0
  %3714 = vmatpush1.bf16.msra.mxu0 %v3115
  %3715 = vmatprep.subr.bf16.mxu0 0
  %3716 = vmatpush1.bf16.msra.mxu0 %v3116
  %3717 = vmatprep.subr.bf16.mxu0 0
  %3718 = vmatpush1.bf16.msra.mxu0 %v3117
  %3719 = vmatprep.subr.bf16.mxu0 0
  %3720 = vmatpush1.bf16.msra.mxu0 %v3118
  %3721 = vmatprep.subr.bf16.mxu0 0
  %3722 = vmatpush1.bf16.msra.mxu0 %v3119
  %3723 = vmatprep.subr.bf16.mxu0 0
  %3724 = vmatpush1.bf16.msra.mxu0 %v3120
  %3725 = vmatprep.subr.bf16.mxu0 0
  %3726 = vmatpush1.bf16.msra.mxu0 %v3121
  %3727 = vmatprep.subr.bf16.mxu0 0
  %3728 = vmatpush1.bf16.msra.mxu0 %v3122
  %3729 = vmatprep.subr.bf16.mxu0 0
  %3730 = vmatpush1.bf16.msra.mxu0 %v3123
  %3731 = vmatprep.subr.bf16.mxu0 0
  %3732 = vmatpush1.bf16.msra.mxu0 %v3124
  %3733 = vmatprep.subr.bf16.mxu0 0
  %3734 = vmatpush1.bf16.msra.mxu0 %v3125
  %3735 = vmatprep.mubr.bf16.mxu0 %v1561
  %3736 = vmatmul.mubr.bf16.gmra.mrb[0].mxu0 %v1560
  %v3737 = vpop.f32.mrb[0].mxu0
  %v3738 = vadd.f32 %v3641, %v3737
  %v3739 = vpop.f32.mrb[0].mxu0
  %v3740 = vpop.f32.mrb[0].mxu0
  %v3741 = vadd.f32 %v3644, %v3740
  %v3742 = vpop.f32.mrb[0].mxu0
  %3743 = vmatprep.mubr.bf16.mxu0 %v1593
  %3744 = vmatmul.mubr.bf16.gmra.mrb[0].mxu0 %v1592
  %v3745 = vpop.f32.mrb[0].mxu0
  %v3746 = vadd.f32 %v3649, %v3745
  %v3747 = vpop.f32.mrb[0].mxu0
  %v3748 = vpop.f32.mrb[0].mxu0
  %v3749 = vadd.f32 %v3652, %v3748
  %v3750 = vpop.f32.mrb[0].mxu0
  %3751 = vmatprep.mubr.bf16.mxu0 %v1625
  %3752 = vmatmul.mubr.bf16.gmra.mrb[0].mxu0 %v1624
  %v3753 = vpop.f32.mrb[0].mxu0
  %v3754 = vadd.f32 %v3657, %v3753
  %v3755 = vpop.f32.mrb[0].mxu0
  %v3756 = vpop.f32.mrb[0].mxu0
  %v3757 = vadd.f32 %v3660, %v3756
  %v3758 = vpop.f32.mrb[0].mxu0
  %3759 = vmatprep.mubr.bf16.mxu0 %v1657
  %3760 = vmatmul.mubr.bf16.gmra.mrb[0].mxu0 %v1656
  %v3761 = vpop.f32.mrb[0].mxu0
  %v3762 = vadd.f32 %v3665, %v3761
  %v3763 = vpop.f32.mrb[0].mxu0
  %v3764 = vpop.f32.mrb[0].mxu0
  %v3765 = vadd.f32 %v3668, %v3764
  %v3766 = vpop.f32.mrb[0].mxu0
  %3767 = vmatprep.mubr.bf16.mxu0 %v1689
  %3768 = vmatmul.mubr.bf16.gmra.mrb[0].mxu0 %v1688
  %v3769 = vpop.f32.mrb[0].mxu0
  %v3770 = vadd.f32 %v3673, %v3769
  %v3771 = vpop.f32.mrb[0].mxu0
  %v3772 = vpop.f32.mrb[0].mxu0
  %v3773 = vadd.f32 %v3676, %v3772
  %v3774 = vpop.f32.mrb[0].mxu0
  %3775 = vmatprep.mubr.bf16.mxu0 %v1721
  %3776 = vmatmul.mubr.bf16.gmra.mrb[0].mxu0 %v1720
  %v3777 = vpop.f32.mrb[0].mxu0
  %v3778 = vadd.f32 %v3681, %v3777
  %v3779 = vpop.f32.mrb[0].mxu0
  %v3780 = vpop.f32.mrb[0].mxu0
  %v3781 = vadd.f32 %v3684, %v3780
  %v3782 = vpop.f32.mrb[0].mxu0
  %3783 = vmatprep.mubr.bf16.mxu0 %v1753
  %3784 = vmatmul.mubr.bf16.gmra.mrb[0].mxu0 %v1752
  %v3785 = vpop.f32.mrb[0].mxu0
  %v3786 = vadd.f32 %v3689, %v3785
  %v3787 = vpop.f32.mrb[0].mxu0
  %v3788 = vpop.f32.mrb[0].mxu0
  %v3789 = vadd.f32 %v3692, %v3788
  %v3790 = vpop.f32.mrb[0].mxu0
  %3791 = vmatprep.mubr.bf16.mxu0 %v1785
  %3792 = vmatmul.mubr.bf16.gmra.mrb[0].mxu0 %v1784
  %v3793 = vpop.f32.mrb[0].mxu0
  %v3794 = vadd.f32 %v3697, %v3793
  %v3795 = vpop.f32.mrb[0].mxu0
  %v3796 = vpop.f32.mrb[0].mxu0
  %v3797 = vadd.f32 %v3700, %v3796
  %v3798 = vpop.f32.mrb[0].mxu0
  %3799 = vdwg.mxu0
  %3800 = vmatprep.subr.bf16.mxu0 0
  %3801 = vmatpush1.bf16.msra.mxu0 %v3126
  %3802 = vmatprep.subr.bf16.mxu0 0
  %3803 = vmatpush1.bf16.msra.mxu0 %v3127
  %3804 = vmatprep.subr.bf16.mxu0 0
  %3805 = vmatpush1.bf16.msra.mxu0 %v3128
  %3806 = vmatprep.subr.bf16.mxu0 0
  %3807 = vmatpush1.bf16.msra.mxu0 %v3129
  %3808 = vmatprep.subr.bf16.mxu0 0
  %3809 = vmatpush1.bf16.msra.mxu0 %v3130
  %3810 = vmatprep.subr.bf16.mxu0 0
  %3811 = vmatpush1.bf16.msra.mxu0 %v3131
  %3812 = vmatprep.subr.bf16.mxu0 0
  %3813 = vmatpush1.bf16.msra.mxu0 %v3132
  %3814 = vmatprep.subr.bf16.mxu0 0
  %3815 = vmatpush1.bf16.msra.mxu0 %v3133
  %3816 = vmatprep.subr.bf16.mxu0 0
  %3817 = vmatpush1.bf16.msra.mxu0 %v3134
  %3818 = vmatprep.subr.bf16.mxu0 0
  %3819 = vmatpush1.bf16.msra.mxu0 %v3135
  %3820 = vmatprep.subr.bf16.mxu0 0
  %3821 = vmatpush1.bf16.msra.mxu0 %v3136
  %3822 = vmatprep.subr.bf16.mxu0 0
  %3823 = vmatpush1.bf16.msra.mxu0 %v3137
  %3824 = vmatprep.subr.bf16.mxu0 0
  %3825 = vmatpush1.bf16.msra.mxu0 %v3138
  %3826 = vmatprep.subr.bf16.mxu0 0
  %3827 = vmatpush1.bf16.msra.mxu0 %v3139
  %3828 = vmatprep.subr.bf16.mxu0 0
  %3829 = vmatpush1.bf16.msra.mxu0 %v3140
  %3830 = vmatprep.subr.bf16.mxu0 0
  %3831 = vmatpush1.bf16.msra.mxu0 %v3141
  %3832 = vmatprep.mubr.bf16.mxu0 %v1563
  %3833 = vmatmul.mubr.bf16.gmra.mrb[0].mxu0 %v1562
  %v3834 = vpop.f32.mrb[0].mxu0
  %v3835 = vadd.f32 %v3738, %v3834
  %v3836 = vpop.f32.mrb[0].mxu0
  %v3837 = vpop.f32.mrb[0].mxu0
  %v3838 = vadd.f32 %v3741, %v3837
  %v3839 = vpop.f32.mrb[0].mxu0
  %3840 = vmatprep.mubr.bf16.mxu0 %v1595
  %3841 = vmatmul.mubr.bf16.gmra.mrb[0].mxu0 %v1594
  %v3842 = vpop.f32.mrb[0].mxu0
  %v3843 = vadd.f32 %v3746, %v3842
  %v3844 = vpop.f32.mrb[0].mxu0
  %v3845 = vpop.f32.mrb[0].mxu0
  %v3846 = vadd.f32 %v3749, %v3845
  %v3847 = vpop.f32.mrb[0].mxu0
  %3848 = vmatprep.mubr.bf16.mxu0 %v1627
  %3849 = vmatmul.mubr.bf16.gmra.mrb[0].mxu0 %v1626
  %v3850 = vpop.f32.mrb[0].mxu0
  %v3851 = vadd.f32 %v3754, %v3850
  %v3852 = vpop.f32.mrb[0].mxu0
  %v3853 = vpop.f32.mrb[0].mxu0
  %v3854 = vadd.f32 %v3757, %v3853
  %v3855 = vpop.f32.mrb[0].mxu0
  %3856 = vmatprep.mubr.bf16.mxu0 %v1659
  %3857 = vmatmul.mubr.bf16.gmra.mrb[0].mxu0 %v1658
  %v3858 = vpop.f32.mrb[0].mxu0
  %v3859 = vadd.f32 %v3762, %v3858
  %v3860 = vpop.f32.mrb[0].mxu0
  %v3861 = vpop.f32.mrb[0].mxu0
  %v3862 = vadd.f32 %v3765, %v3861
  %v3863 = vpop.f32.mrb[0].mxu0
  %3864 = vmatprep.mubr.bf16.mxu0 %v1691
  %3865 = vmatmul.mubr.bf16.gmra.mrb[0].mxu0 %v1690
  %v3866 = vpop.f32.mrb[0].mxu0
  %v3867 = vadd.f32 %v3770, %v3866
  %v3868 = vpop.f32.mrb[0].mxu0
  %v3869 = vpop.f32.mrb[0].mxu0
  %v3870 = vadd.f32 %v3773, %v3869
  %v3871 = vpop.f32.mrb[0].mxu0
  %3872 = vmatprep.mubr.bf16.mxu0 %v1723
  %3873 = vmatmul.mubr.bf16.gmra.mrb[0].mxu0 %v1722
  %v3874 = vpop.f32.mrb[0].mxu0
  %v3875 = vadd.f32 %v3778, %v3874
  %v3876 = vpop.f32.mrb[0].mxu0
  %v3877 = vpop.f32.mrb[0].mxu0
  %v3878 = vadd.f32 %v3781, %v3877
  %v3879 = vpop.f32.mrb[0].mxu0
  %3880 = vmatprep.mubr.bf16.mxu0 %v1755
  %3881 = vmatmul.mubr.bf16.gmra.mrb[0].mxu0 %v1754
  %v3882 = vpop.f32.mrb[0].mxu0
  %v3883 = vadd.f32 %v3786, %v3882
  %v3884 = vpop.f32.mrb[0].mxu0
  %v3885 = vpop.f32.mrb[0].mxu0
  %v3886 = vadd.f32 %v3789, %v3885
  %v3887 = vpop.f32.mrb[0].mxu0
  %3888 = vmatprep.mubr.bf16.mxu0 %v1787
  %3889 = vmatmul.mubr.bf16.gmra.mrb[0].mxu0 %v1786
  %v3890 = vpop.f32.mrb[0].mxu0
  %v3891 = vadd.f32 %v3794, %v3890
  %v3892 = vpop.f32.mrb[0].mxu0
  %v3893 = vpop.f32.mrb[0].mxu0
  %v3894 = vadd.f32 %v3797, %v3893
  %v3895 = vpop.f32.mrb[0].mxu0
  %3896 = vdwg.mxu0
  %3897 = vmatprep.subr.bf16.mxu0 0
  %3898 = vmatpush1.bf16.msra.mxu0 %v3142
  %3899 = vmatprep.subr.bf16.mxu0 0
  %3900 = vmatpush1.bf16.msra.mxu0 %v3143
  %3901 = vmatprep.subr.bf16.mxu0 0
  %3902 = vmatpush1.bf16.msra.mxu0 %v3144
  %3903 = vmatprep.subr.bf16.mxu0 0
  %3904 = vmatpush1.bf16.msra.mxu0 %v3145
  %3905 = vmatprep.subr.bf16.mxu0 0
  %3906 = vmatpush1.bf16.msra.mxu0 %v3146
  %3907 = vmatprep.subr.bf16.mxu0 0
  %3908 = vmatpush1.bf16.msra.mxu0 %v3147
  %3909 = vmatprep.subr.bf16.mxu0 0
  %3910 = vmatpush1.bf16.msra.mxu0 %v3148
  %3911 = vmatprep.subr.bf16.mxu0 0
  %3912 = vmatpush1.bf16.msra.mxu0 %v3149
  %3913 = vmatprep.subr.bf16.mxu0 0
  %3914 = vmatpush1.bf16.msra.mxu0 %v3150
  %3915 = vmatprep.subr.bf16.mxu0 0
  %3916 = vmatpush1.bf16.msra.mxu0 %v3151
  %3917 = vmatprep.subr.bf16.mxu0 0
  %3918 = vmatpush1.bf16.msra.mxu0 %v3152
  %3919 = vmatprep.subr.bf16.mxu0 0
  %3920 = vmatpush1.bf16.msra.mxu0 %v3153
  %3921 = vmatprep.subr.bf16.mxu0 0
  %3922 = vmatpush1.bf16.msra.mxu0 %v3154
  %3923 = vmatprep.subr.bf16.mxu0 0
  %3924 = vmatpush1.bf16.msra.mxu0 %v3155
  %3925 = vmatprep.subr.bf16.mxu0 0
  %3926 = vmatpush1.bf16.msra.mxu0 %v3156
  %3927 = vmatprep.subr.bf16.mxu0 0
  %3928 = vmatpush1.bf16.msra.mxu0 %v3157
  %3929 = vmatprep.mubr.bf16.mxu0 %v1565
  %3930 = vmatmul.mubr.bf16.gmra.mrb[0].mxu0 %v1564
  %v3931 = vpop.f32.mrb[0].mxu0
  %v3932 = vadd.f32 %v3835, %v3931
  %v3933 = vpop.f32.mrb[0].mxu0
  %v3934 = vpop.f32.mrb[0].mxu0
  %v3935 = vadd.f32 %v3838, %v3934
  %v3936 = vpop.f32.mrb[0].mxu0
  %3937 = vmatprep.mubr.bf16.mxu0 %v1597
  %3938 = vmatmul.mubr.bf16.gmra.mrb[0].mxu0 %v1596
  %v3939 = vpop.f32.mrb[0].mxu0
  %v3940 = vadd.f32 %v3843, %v3939
  %v3941 = vpop.f32.mrb[0].mxu0
  %v3942 = vpop.f32.mrb[0].mxu0
  %v3943 = vadd.f32 %v3846, %v3942
  %v3944 = vpop.f32.mrb[0].mxu0
  %3945 = vmatprep.mubr.bf16.mxu0 %v1629
  %3946 = vmatmul.mubr.bf16.gmra.mrb[0].mxu0 %v1628
  %v3947 = vpop.f32.mrb[0].mxu0
  %v3948 = vadd.f32 %v3851, %v3947
  %v3949 = vpop.f32.mrb[0].mxu0
  %v3950 = vpop.f32.mrb[0].mxu0
  %v3951 = vadd.f32 %v3854, %v3950
  %v3952 = vpop.f32.mrb[0].mxu0
  %3953 = vmatprep.mubr.bf16.mxu0 %v1661
  %3954 = vmatmul.mubr.bf16.gmra.mrb[0].mxu0 %v1660
  %v3955 = vpop.f32.mrb[0].mxu0
  %v3956 = vadd.f32 %v3859, %v3955
  %v3957 = vpop.f32.mrb[0].mxu0
  %v3958 = vpop.f32.mrb[0].mxu0
  %v3959 = vadd.f32 %v3862, %v3958
  %v3960 = vpop.f32.mrb[0].mxu0
  %3961 = vmatprep.mubr.bf16.mxu0 %v1693
  %3962 = vmatmul.mubr.bf16.gmra.mrb[0].mxu0 %v1692
  %v3963 = vpop.f32.mrb[0].mxu0
  %v3964 = vadd.f32 %v3867, %v3963
  %v3965 = vpop.f32.mrb[0].mxu0
  %v3966 = vpop.f32.mrb[0].mxu0
  %v3967 = vadd.f32 %v3870, %v3966
  %v3968 = vpop.f32.mrb[0].mxu0
  %3969 = vmatprep.mubr.bf16.mxu0 %v1725
  %3970 = vmatmul.mubr.bf16.gmra.mrb[0].mxu0 %v1724
  %v3971 = vpop.f32.mrb[0].mxu0
  %v3972 = vadd.f32 %v3875, %v3971
  %v3973 = vpop.f32.mrb[0].mxu0
  %v3974 = vpop.f32.mrb[0].mxu0
  %v3975 = vadd.f32 %v3878, %v3974
  %v3976 = vpop.f32.mrb[0].mxu0
  %3977 = vmatprep.mubr.bf16.mxu0 %v1757
  %3978 = vmatmul.mubr.bf16.gmra.mrb[0].mxu0 %v1756
  %v3979 = vpop.f32.mrb[0].mxu0
  %v3980 = vadd.f32 %v3883, %v3979
  %v3981 = vpop.f32.mrb[0].mxu0
  %v3982 = vpop.f32.mrb[0].mxu0
  %v3983 = vadd.f32 %v3886, %v3982
  %v3984 = vpop.f32.mrb[0].mxu0
  %3985 = vmatprep.mubr.bf16.mxu0 %v1789
  %3986 = vmatmul.mubr.bf16.gmra.mrb[0].mxu0 %v1788
  %v3987 = vpop.f32.mrb[0].mxu0
  %v3988 = vadd.f32 %v3891, %v3987
  %v3989 = vpop.f32.mrb[0].mxu0
  %v3990 = vpop.f32.mrb[0].mxu0
  %v3991 = vadd.f32 %v3894, %v3990
  %v3992 = vpop.f32.mrb[0].mxu0
  %3993 = vdwg.mxu0
  %3994 = vmatprep.subr.bf16.mxu0 0
  %3995 = vmatpush1.bf16.msra.mxu0 %v3158
  %3996 = vmatprep.subr.bf16.mxu0 0
  %3997 = vmatpush1.bf16.msra.mxu0 %v3159
  %3998 = vmatprep.subr.bf16.mxu0 0
  %3999 = vmatpush1.bf16.msra.mxu0 %v3160
  %4000 = vmatprep.subr.bf16.mxu0 0
  %4001 = vmatpush1.bf16.msra.mxu0 %v3161
  %4002 = vmatprep.subr.bf16.mxu0 0
  %4003 = vmatpush1.bf16.msra.mxu0 %v3162
  %4004 = vmatprep.subr.bf16.mxu0 0
  %4005 = vmatpush1.bf16.msra.mxu0 %v3163
  %4006 = vmatprep.subr.bf16.mxu0 0
  %4007 = vmatpush1.bf16.msra.mxu0 %v3164
  %4008 = vmatprep.subr.bf16.mxu0 0
  %4009 = vmatpush1.bf16.msra.mxu0 %v3165
  %4010 = vmatprep.subr.bf16.mxu0 0
  %4011 = vmatpush1.bf16.msra.mxu0 %v3166
  %4012 = vmatprep.subr.bf16.mxu0 0
  %4013 = vmatpush1.bf16.msra.mxu0 %v3167
  %4014 = vmatprep.subr.bf16.mxu0 0
  %4015 = vmatpush1.bf16.msra.mxu0 %v3168
  %4016 = vmatprep.subr.bf16.mxu0 0
  %4017 = vmatpush1.bf16.msra.mxu0 %v3169
  %4018 = vmatprep.subr.bf16.mxu0 0
  %4019 = vmatpush1.bf16.msra.mxu0 %v3170
  %4020 = vmatprep.subr.bf16.mxu0 0
  %4021 = vmatpush1.bf16.msra.mxu0 %v3171
  %4022 = vmatprep.subr.bf16.mxu0 0
  %4023 = vmatpush1.bf16.msra.mxu0 %v3172
  %4024 = vmatprep.subr.bf16.mxu0 0
  %4025 = vmatpush1.bf16.msra.mxu0 %v3173
  %4026 = vmatprep.mubr.bf16.mxu0 %v1567
  %4027 = vmatmul.mubr.bf16.gmra.mrb[0].mxu0 %v1566
  %v4028 = vpop.f32.mrb[0].mxu0
  %v4029 = vadd.f32 %v3932, %v4028
  %v4030 = vpop.f32.mrb[0].mxu0
  %v4031 = vpop.f32.mrb[0].mxu0
  %v4032 = vadd.f32 %v3935, %v4031
  %v4033 = vpop.f32.mrb[0].mxu0
  %4034 = vmatprep.mubr.bf16.mxu0 %v1599
  %4035 = vmatmul.mubr.bf16.gmra.mrb[0].mxu0 %v1598
  %v4036 = vpop.f32.mrb[0].mxu0
  %v4037 = vadd.f32 %v3940, %v4036
  %v4038 = vpop.f32.mrb[0].mxu0
  %v4039 = vpop.f32.mrb[0].mxu0
  %v4040 = vadd.f32 %v3943, %v4039
  %v4041 = vpop.f32.mrb[0].mxu0
  %4042 = vmatprep.mubr.bf16.mxu0 %v1631
  %4043 = vmatmul.mubr.bf16.gmra.mrb[0].mxu0 %v1630
  %v4044 = vpop.f32.mrb[0].mxu0
  %v4045 = vadd.f32 %v3948, %v4044
  %v4046 = vpop.f32.mrb[0].mxu0
  %v4047 = vpop.f32.mrb[0].mxu0
  %v4048 = vadd.f32 %v3951, %v4047
  %v4049 = vpop.f32.mrb[0].mxu0
  %4050 = vmatprep.mubr.bf16.mxu0 %v1663
  %4051 = vmatmul.mubr.bf16.gmra.mrb[0].mxu0 %v1662
  %v4052 = vpop.f32.mrb[0].mxu0
  %v4053 = vadd.f32 %v3956, %v4052
  %v4054 = vpop.f32.mrb[0].mxu0
  %v4055 = vpop.f32.mrb[0].mxu0
  %v4056 = vadd.f32 %v3959, %v4055
  %v4057 = vpop.f32.mrb[0].mxu0
  %4058 = vmatprep.mubr.bf16.mxu0 %v1695
  %4059 = vmatmul.mubr.bf16.gmra.mrb[0].mxu0 %v1694
  %v4060 = vpop.f32.mrb[0].mxu0
  %v4061 = vadd.f32 %v3964, %v4060
  %v4062 = vpop.f32.mrb[0].mxu0
  %v4063 = vpop.f32.mrb[0].mxu0
  %v4064 = vadd.f32 %v3967, %v4063
  %v4065 = vpop.f32.mrb[0].mxu0
  %4066 = vmatprep.mubr.bf16.mxu0 %v1727
  %4067 = vmatmul.mubr.bf16.gmra.mrb[0].mxu0 %v1726
  %v4068 = vpop.f32.mrb[0].mxu0
  %v4069 = vadd.f32 %v3972, %v4068
  %v4070 = vpop.f32.mrb[0].mxu0
  %v4071 = vpop.f32.mrb[0].mxu0
  %v4072 = vadd.f32 %v3975, %v4071
  %v4073 = vpop.f32.mrb[0].mxu0
  %4074 = vmatprep.mubr.bf16.mxu0 %v1759
  %4075 = vmatmul.mubr.bf16.gmra.mrb[0].mxu0 %v1758
  %v4076 = vpop.f32.mrb[0].mxu0
  %v4077 = vadd.f32 %v3980, %v4076
  %v4078 = vpop.f32.mrb[0].mxu0
  %v4079 = vpop.f32.mrb[0].mxu0
  %v4080 = vadd.f32 %v3983, %v4079
  %v4081 = vpop.f32.mrb[0].mxu0
  %4082 = vmatprep.mubr.bf16.mxu0 %v1791
  %4083 = vmatmul.mubr.bf16.gmra.mrb[0].mxu0 %v1790
  %v4084 = vpop.f32.mrb[0].mxu0
  %v4085 = vadd.f32 %v3988, %v4084
  %v4086 = vpop.f32.mrb[0].mxu0
  %v4087 = vpop.f32.mrb[0].mxu0
  %v4088 = vadd.f32 %v3991, %v4087
  %v4089 = vpop.f32.mrb[0].mxu0
  %4090 = vdwg.mxu0
  %4091 = vmatprep.subr.bf16.mxu0 0
  %4092 = vmatpush1.bf16.msra.mxu0 %v3174
  %4093 = vmatprep.subr.bf16.mxu0 0
  %4094 = vmatpush1.bf16.msra.mxu0 %v3175
  %4095 = vmatprep.subr.bf16.mxu0 0
  %4096 = vmatpush1.bf16.msra.mxu0 %v3176
  %4097 = vmatprep.subr.bf16.mxu0 0
  %4098 = vmatpush1.bf16.msra.mxu0 %v3177
  %4099 = vmatprep.subr.bf16.mxu0 0
  %4100 = vmatpush1.bf16.msra.mxu0 %v3178
  %4101 = vmatprep.subr.bf16.mxu0 0
  %4102 = vmatpush1.bf16.msra.mxu0 %v3179
  %4103 = vmatprep.subr.bf16.mxu0 0
  %4104 = vmatpush1.bf16.msra.mxu0 %v3180
  %4105 = vmatprep.subr.bf16.mxu0 0
  %4106 = vmatpush1.bf16.msra.mxu0 %v3181
  %4107 = vmatprep.subr.bf16.mxu0 0
  %4108 = vmatpush1.bf16.msra.mxu0 %v3182
  %4109 = vmatprep.subr.bf16.mxu0 0
  %4110 = vmatpush1.bf16.msra.mxu0 %v3183
  %4111 = vmatprep.subr.bf16.mxu0 0
  %4112 = vmatpush1.bf16.msra.mxu0 %v3184
  %4113 = vmatprep.subr.bf16.mxu0 0
  %4114 = vmatpush1.bf16.msra.mxu0 %v3185
  %4115 = vmatprep.subr.bf16.mxu0 0
  %4116 = vmatpush1.bf16.msra.mxu0 %v3186
  %4117 = vmatprep.subr.bf16.mxu0 0
  %4118 = vmatpush1.bf16.msra.mxu0 %v3187
  %4119 = vmatprep.subr.bf16.mxu0 0
  %4120 = vmatpush1.bf16.msra.mxu0 %v3188
  %4121 = vmatprep.subr.bf16.mxu0 0
  %4122 = vmatpush1.bf16.msra.mxu0 %v3189
  %4123 = vmatprep.mubr.bf16.mxu0 %v1569
  %4124 = vmatmul.mubr.bf16.gmra.mrb[0].mxu0 %v1568
  %v4125 = vpop.f32.mrb[0].mxu0
  %v4126 = vadd.f32 %v4029, %v4125
  %v4127 = vpop.f32.mrb[0].mxu0
  %v4128 = vpop.f32.mrb[0].mxu0
  %v4129 = vadd.f32 %v4032, %v4128
  %v4130 = vpop.f32.mrb[0].mxu0
  %4131 = vmatprep.mubr.bf16.mxu0 %v1601
  %4132 = vmatmul.mubr.bf16.gmra.mrb[0].mxu0 %v1600
  %v4133 = vpop.f32.mrb[0].mxu0
  %v4134 = vadd.f32 %v4037, %v4133
  %v4135 = vpop.f32.mrb[0].mxu0
  %v4136 = vpop.f32.mrb[0].mxu0
  %v4137 = vadd.f32 %v4040, %v4136
  %v4138 = vpop.f32.mrb[0].mxu0
  %4139 = vmatprep.mubr.bf16.mxu0 %v1633
  %4140 = vmatmul.mubr.bf16.gmra.mrb[0].mxu0 %v1632
  %v4141 = vpop.f32.mrb[0].mxu0
  %v4142 = vadd.f32 %v4045, %v4141
  %v4143 = vpop.f32.mrb[0].mxu0
  %v4144 = vpop.f32.mrb[0].mxu0
  %v4145 = vadd.f32 %v4048, %v4144
  %v4146 = vpop.f32.mrb[0].mxu0
  %4147 = vmatprep.mubr.bf16.mxu0 %v1665
  %4148 = vmatmul.mubr.bf16.gmra.mrb[0].mxu0 %v1664
  %v4149 = vpop.f32.mrb[0].mxu0
  %v4150 = vadd.f32 %v4053, %v4149
  %v4151 = vpop.f32.mrb[0].mxu0
  %v4152 = vpop.f32.mrb[0].mxu0
  %v4153 = vadd.f32 %v4056, %v4152
  %v4154 = vpop.f32.mrb[0].mxu0
  %4155 = vmatprep.mubr.bf16.mxu0 %v1697
  %4156 = vmatmul.mubr.bf16.gmra.mrb[0].mxu0 %v1696
  %v4157 = vpop.f32.mrb[0].mxu0
  %v4158 = vadd.f32 %v4061, %v4157
  %v4159 = vpop.f32.mrb[0].mxu0
  %v4160 = vpop.f32.mrb[0].mxu0
  %v4161 = vadd.f32 %v4064, %v4160
  %v4162 = vpop.f32.mrb[0].mxu0
  %4163 = vmatprep.mubr.bf16.mxu0 %v1729
  %4164 = vmatmul.mubr.bf16.gmra.mrb[0].mxu0 %v1728
  %v4165 = vpop.f32.mrb[0].mxu0
  %v4166 = vadd.f32 %v4069, %v4165
  %v4167 = vpop.f32.mrb[0].mxu0
  %v4168 = vpop.f32.mrb[0].mxu0
  %v4169 = vadd.f32 %v4072, %v4168
  %v4170 = vpop.f32.mrb[0].mxu0
  %4171 = vmatprep.mubr.bf16.mxu0 %v1761
  %4172 = vmatmul.mubr.bf16.gmra.mrb[0].mxu0 %v1760
  %v4173 = vpop.f32.mrb[0].mxu0
  %v4174 = vadd.f32 %v4077, %v4173
  %v4175 = vpop.f32.mrb[0].mxu0
  %v4176 = vpop.f32.mrb[0].mxu0
  %v4177 = vadd.f32 %v4080, %v4176
  %v4178 = vpop.f32.mrb[0].mxu0
  %4179 = vmatprep.mubr.bf16.mxu0 %v1793
  %4180 = vmatmul.mubr.bf16.gmra.mrb[0].mxu0 %v1792
  %v4181 = vpop.f32.mrb[0].mxu0
  %v4182 = vadd.f32 %v4085, %v4181
  %v4183 = vpop.f32.mrb[0].mxu0
  %v4184 = vpop.f32.mrb[0].mxu0
  %v4185 = vadd.f32 %v4088, %v4184
  %v4186 = vpop.f32.mrb[0].mxu0
  %4187 = vdwg.mxu0
  %4188 = vmatprep.subr.bf16.mxu0 0
  %4189 = vmatpush1.bf16.msra.mxu0 %v3190
  %4190 = vmatprep.subr.bf16.mxu0 0
  %4191 = vmatpush1.bf16.msra.mxu0 %v3191
  %4192 = vmatprep.subr.bf16.mxu0 0
  %4193 = vmatpush1.bf16.msra.mxu0 %v3192
  %4194 = vmatprep.subr.bf16.mxu0 0
  %4195 = vmatpush1.bf16.msra.mxu0 %v3193
  %4196 = vmatprep.subr.bf16.mxu0 0
  %4197 = vmatpush1.bf16.msra.mxu0 %v3194
  %4198 = vmatprep.subr.bf16.mxu0 0
  %4199 = vmatpush1.bf16.msra.mxu0 %v3195
  %4200 = vmatprep.subr.bf16.mxu0 0
  %4201 = vmatpush1.bf16.msra.mxu0 %v3196
  %4202 = vmatprep.subr.bf16.mxu0 0
  %4203 = vmatpush1.bf16.msra.mxu0 %v3197
  %4204 = vmatprep.subr.bf16.mxu0 0
  %4205 = vmatpush1.bf16.msra.mxu0 %v3198
  %4206 = vmatprep.subr.bf16.mxu0 0
  %4207 = vmatpush1.bf16.msra.mxu0 %v3199
  %4208 = vmatprep.subr.bf16.mxu0 0
  %4209 = vmatpush1.bf16.msra.mxu0 %v3200
  %4210 = vmatprep.subr.bf16.mxu0 0
  %4211 = vmatpush1.bf16.msra.mxu0 %v3201
  %4212 = vmatprep.subr.bf16.mxu0 0
  %4213 = vmatpush1.bf16.msra.mxu0 %v3202
  %4214 = vmatprep.subr.bf16.mxu0 0
  %4215 = vmatpush1.bf16.msra.mxu0 %v3203
  %4216 = vmatprep.subr.bf16.mxu0 0
  %4217 = vmatpush1.bf16.msra.mxu0 %v3204
  %4218 = vmatprep.subr.bf16.mxu0 0
  %4219 = vmatpush1.bf16.msra.mxu0 %v3205
  %4220 = vmatprep.mubr.bf16.mxu0 %v1571
  %4221 = vmatmul.mubr.bf16.gmra.mrb[0].mxu0 %v1570
  %v4222 = vpop.f32.mrb[0].mxu0
  %v4223 = vadd.f32 %v4126, %v4222
  %v4224 = vpop.f32.mrb[0].mxu0
  %v4225 = vpop.f32.mrb[0].mxu0
  %v4226 = vadd.f32 %v4129, %v4225
  %v4227 = vpop.f32.mrb[0].mxu0
  %4228 = vmatprep.mubr.bf16.mxu0 %v1603
  %4229 = vmatmul.mubr.bf16.gmra.mrb[0].mxu0 %v1602
  %v4230 = vpop.f32.mrb[0].mxu0
  %v4231 = vadd.f32 %v4134, %v4230
  %v4232 = vpop.f32.mrb[0].mxu0
  %v4233 = vpop.f32.mrb[0].mxu0
  %v4234 = vadd.f32 %v4137, %v4233
  %v4235 = vpop.f32.mrb[0].mxu0
  %4236 = vmatprep.mubr.bf16.mxu0 %v1635
  %4237 = vmatmul.mubr.bf16.gmra.mrb[0].mxu0 %v1634
  %v4238 = vpop.f32.mrb[0].mxu0
  %v4239 = vadd.f32 %v4142, %v4238
  %v4240 = vpop.f32.mrb[0].mxu0
  %v4241 = vpop.f32.mrb[0].mxu0
  %v4242 = vadd.f32 %v4145, %v4241
  %v4243 = vpop.f32.mrb[0].mxu0
  %4244 = vmatprep.mubr.bf16.mxu0 %v1667
  %4245 = vmatmul.mubr.bf16.gmra.mrb[0].mxu0 %v1666
  %v4246 = vpop.f32.mrb[0].mxu0
  %v4247 = vadd.f32 %v4150, %v4246
  %v4248 = vpop.f32.mrb[0].mxu0
  %v4249 = vpop.f32.mrb[0].mxu0
  %v4250 = vadd.f32 %v4153, %v4249
  %v4251 = vpop.f32.mrb[0].mxu0
  %4252 = vmatprep.mubr.bf16.mxu0 %v1699
  %4253 = vmatmul.mubr.bf16.gmra.mrb[0].mxu0 %v1698
  %v4254 = vpop.f32.mrb[0].mxu0
  %v4255 = vadd.f32 %v4158, %v4254
  %v4256 = vpop.f32.mrb[0].mxu0
  %v4257 = vpop.f32.mrb[0].mxu0
  %v4258 = vadd.f32 %v4161, %v4257
  %v4259 = vpop.f32.mrb[0].mxu0
  %4260 = vmatprep.mubr.bf16.mxu0 %v1731
  %4261 = vmatmul.mubr.bf16.gmra.mrb[0].mxu0 %v1730
  %v4262 = vpop.f32.mrb[0].mxu0
  %v4263 = vadd.f32 %v4166, %v4262
  %v4264 = vpop.f32.mrb[0].mxu0
  %v4265 = vpop.f32.mrb[0].mxu0
  %v4266 = vadd.f32 %v4169, %v4265
  %v4267 = vpop.f32.mrb[0].mxu0
  %4268 = vmatprep.mubr.bf16.mxu0 %v1763
  %4269 = vmatmul.mubr.bf16.gmra.mrb[0].mxu0 %v1762
  %v4270 = vpop.f32.mrb[0].mxu0
  %v4271 = vadd.f32 %v4174, %v4270
  %v4272 = vpop.f32.mrb[0].mxu0
  %v4273 = vpop.f32.mrb[0].mxu0
  %v4274 = vadd.f32 %v4177, %v4273
  %v4275 = vpop.f32.mrb[0].mxu0
  %4276 = vmatprep.mubr.bf16.mxu0 %v1795
  %4277 = vmatmul.mubr.bf16.gmra.mrb[0].mxu0 %v1794
  %v4278 = vpop.f32.mrb[0].mxu0
  %v4279 = vadd.f32 %v4182, %v4278
  %v4280 = vpop.f32.mrb[0].mxu0
  %v4281 = vpop.f32.mrb[0].mxu0
  %v4282 = vadd.f32 %v4185, %v4281
  %v4283 = vpop.f32.mrb[0].mxu0
  %4284 = vdwg.mxu0
  %4285 = vmatprep.subr.bf16.mxu0 0
  %4286 = vmatpush1.bf16.msra.mxu0 %v3206
  %4287 = vmatprep.subr.bf16.mxu0 0
  %4288 = vmatpush1.bf16.msra.mxu0 %v3207
  %4289 = vmatprep.subr.bf16.mxu0 0
  %4290 = vmatpush1.bf16.msra.mxu0 %v3208
  %4291 = vmatprep.subr.bf16.mxu0 0
  %4292 = vmatpush1.bf16.msra.mxu0 %v3209
  %4293 = vmatprep.subr.bf16.mxu0 0
  %4294 = vmatpush1.bf16.msra.mxu0 %v3210
  %4295 = vmatprep.subr.bf16.mxu0 0
  %4296 = vmatpush1.bf16.msra.mxu0 %v3211
  %4297 = vmatprep.subr.bf16.mxu0 0
  %4298 = vmatpush1.bf16.msra.mxu0 %v3212
  %4299 = vmatprep.subr.bf16.mxu0 0
  %4300 = vmatpush1.bf16.msra.mxu0 %v3213
  %4301 = vmatprep.subr.bf16.mxu0 0
  %4302 = vmatpush1.bf16.msra.mxu0 %v3214
  %4303 = vmatprep.subr.bf16.mxu0 0
  %4304 = vmatpush1.bf16.msra.mxu0 %v3215
  %4305 = vmatprep.subr.bf16.mxu0 0
  %4306 = vmatpush1.bf16.msra.mxu0 %v3216
  %4307 = vmatprep.subr.bf16.mxu0 0
  %4308 = vmatpush1.bf16.msra.mxu0 %v3217
  %4309 = vmatprep.subr.bf16.mxu0 0
  %4310 = vmatpush1.bf16.msra.mxu0 %v3218
  %4311 = vmatprep.subr.bf16.mxu0 0
  %4312 = vmatpush1.bf16.msra.mxu0 %v3219
  %4313 = vmatprep.subr.bf16.mxu0 0
  %4314 = vmatpush1.bf16.msra.mxu0 %v3220
  %4315 = vmatprep.subr.bf16.mxu0 0
  %4316 = vmatpush1.bf16.msra.mxu0 %v3221
  %4317 = vmatprep.mubr.bf16.mxu0 %v1573
  %4318 = vmatmul.mubr.bf16.gmra.mrb[0].mxu0 %v1572
  %v4319 = vpop.f32.mrb[0].mxu0
  %v4320 = vadd.f32 %v4223, %v4319
  %v4321 = vpop.f32.mrb[0].mxu0
  %v4322 = vpop.f32.mrb[0].mxu0
  %v4323 = vadd.f32 %v4226, %v4322
  %v4324 = vpop.f32.mrb[0].mxu0
  %4325 = vmatprep.mubr.bf16.mxu0 %v1605
  %4326 = vmatmul.mubr.bf16.gmra.mrb[0].mxu0 %v1604
  %v4327 = vpop.f32.mrb[0].mxu0
  %v4328 = vadd.f32 %v4231, %v4327
  %v4329 = vpop.f32.mrb[0].mxu0
  %v4330 = vpop.f32.mrb[0].mxu0
  %v4331 = vadd.f32 %v4234, %v4330
  %v4332 = vpop.f32.mrb[0].mxu0
  %4333 = vmatprep.mubr.bf16.mxu0 %v1637
  %4334 = vmatmul.mubr.bf16.gmra.mrb[0].mxu0 %v1636
  %v4335 = vpop.f32.mrb[0].mxu0
  %v4336 = vadd.f32 %v4239, %v4335
  %v4337 = vpop.f32.mrb[0].mxu0
  %v4338 = vpop.f32.mrb[0].mxu0
  %v4339 = vadd.f32 %v4242, %v4338
  %v4340 = vpop.f32.mrb[0].mxu0
  %4341 = vmatprep.mubr.bf16.mxu0 %v1669
  %4342 = vmatmul.mubr.bf16.gmra.mrb[0].mxu0 %v1668
  %v4343 = vpop.f32.mrb[0].mxu0
  %v4344 = vadd.f32 %v4247, %v4343
  %v4345 = vpop.f32.mrb[0].mxu0
  %v4346 = vpop.f32.mrb[0].mxu0
  %v4347 = vadd.f32 %v4250, %v4346
  %v4348 = vpop.f32.mrb[0].mxu0
  %4349 = vmatprep.mubr.bf16.mxu0 %v1701
  %4350 = vmatmul.mubr.bf16.gmra.mrb[0].mxu0 %v1700
  %v4351 = vpop.f32.mrb[0].mxu0
  %v4352 = vadd.f32 %v4255, %v4351
  %v4353 = vpop.f32.mrb[0].mxu0
  %v4354 = vpop.f32.mrb[0].mxu0
  %v4355 = vadd.f32 %v4258, %v4354
  %v4356 = vpop.f32.mrb[0].mxu0
  %4357 = vmatprep.mubr.bf16.mxu0 %v1733
  %4358 = vmatmul.mubr.bf16.gmra.mrb[0].mxu0 %v1732
  %v4359 = vpop.f32.mrb[0].mxu0
  %v4360 = vadd.f32 %v4263, %v4359
  %v4361 = vpop.f32.mrb[0].mxu0
  %v4362 = vpop.f32.mrb[0].mxu0
  %v4363 = vadd.f32 %v4266, %v4362
  %v4364 = vpop.f32.mrb[0].mxu0
  %4365 = vmatprep.mubr.bf16.mxu0 %v1765
  %4366 = vmatmul.mubr.bf16.gmra.mrb[0].mxu0 %v1764
  %v4367 = vpop.f32.mrb[0].mxu0
  %v4368 = vadd.f32 %v4271, %v4367
  %v4369 = vpop.f32.mrb[0].mxu0
  %v4370 = vpop.f32.mrb[0].mxu0
  %v4371 = vadd.f32 %v4274, %v4370
  %v4372 = vpop.f32.mrb[0].mxu0
  %4373 = vmatprep.mubr.bf16.mxu0 %v1797
  %4374 = vmatmul.mubr.bf16.gmra.mrb[0].mxu0 %v1796
  %v4375 = vpop.f32.mrb[0].mxu0
  %v4376 = vadd.f32 %v4279, %v4375
  %v4377 = vpop.f32.mrb[0].mxu0
  %v4378 = vpop.f32.mrb[0].mxu0
  %v4379 = vadd.f32 %v4282, %v4378
  %v4380 = vpop.f32.mrb[0].mxu0
  %4381 = vdwg.mxu0
  %4382 = vmatprep.subr.bf16.mxu0 0
  %4383 = vmatpush1.bf16.msra.mxu0 %v3222
  %4384 = vmatprep.subr.bf16.mxu0 0
  %4385 = vmatpush1.bf16.msra.mxu0 %v3223
  %4386 = vmatprep.subr.bf16.mxu0 0
  %4387 = vmatpush1.bf16.msra.mxu0 %v3224
  %4388 = vmatprep.subr.bf16.mxu0 0
  %4389 = vmatpush1.bf16.msra.mxu0 %v3225
  %4390 = vmatprep.subr.bf16.mxu0 0
  %4391 = vmatpush1.bf16.msra.mxu0 %v3226
  %4392 = vmatprep.subr.bf16.mxu0 0
  %4393 = vmatpush1.bf16.msra.mxu0 %v3227
  %4394 = vmatprep.subr.bf16.mxu0 0
  %4395 = vmatpush1.bf16.msra.mxu0 %v3228
  %4396 = vmatprep.subr.bf16.mxu0 0
  %4397 = vmatpush1.bf16.msra.mxu0 %v3229
  %4398 = vmatprep.subr.bf16.mxu0 0
  %4399 = vmatpush1.bf16.msra.mxu0 %v3230
  %4400 = vmatprep.subr.bf16.mxu0 0
  %4401 = vmatpush1.bf16.msra.mxu0 %v3231
  %4402 = vmatprep.subr.bf16.mxu0 0
  %4403 = vmatpush1.bf16.msra.mxu0 %v3232
  %4404 = vmatprep.subr.bf16.mxu0 0
  %4405 = vmatpush1.bf16.msra.mxu0 %v3233
  %4406 = vmatprep.subr.bf16.mxu0 0
  %4407 = vmatpush1.bf16.msra.mxu0 %v3234
  %4408 = vmatprep.subr.bf16.mxu0 0
  %4409 = vmatpush1.bf16.msra.mxu0 %v3235
  %4410 = vmatprep.subr.bf16.mxu0 0
  %4411 = vmatpush1.bf16.msra.mxu0 %v3236
  %4412 = vmatprep.subr.bf16.mxu0 0
  %4413 = vmatpush1.bf16.msra.mxu0 %v3237
  %4414 = vmatprep.mubr.bf16.mxu0 %v1575
  %4415 = vmatmul.mubr.bf16.gmra.mrb[0].mxu0 %v1574
  %v4416 = vpop.f32.mrb[0].mxu0
  %v4417 = vadd.f32 %v4320, %v4416
  %v4418 = vpop.f32.mrb[0].mxu0
  %v4419 = vpop.f32.mrb[0].mxu0
  %v4420 = vadd.f32 %v4323, %v4419
  %v4421 = vpop.f32.mrb[0].mxu0
  %4422 = vmatprep.mubr.bf16.mxu0 %v1607
  %4423 = vmatmul.mubr.bf16.gmra.mrb[0].mxu0 %v1606
  %v4424 = vpop.f32.mrb[0].mxu0
  %v4425 = vadd.f32 %v4328, %v4424
  %v4426 = vpop.f32.mrb[0].mxu0
  %v4427 = vpop.f32.mrb[0].mxu0
  %v4428 = vadd.f32 %v4331, %v4427
  %v4429 = vpop.f32.mrb[0].mxu0
  %4430 = vmatprep.mubr.bf16.mxu0 %v1639
  %4431 = vmatmul.mubr.bf16.gmra.mrb[0].mxu0 %v1638
  %v4432 = vpop.f32.mrb[0].mxu0
  %v4433 = vadd.f32 %v4336, %v4432
  %v4434 = vpop.f32.mrb[0].mxu0
  %v4435 = vpop.f32.mrb[0].mxu0
  %v4436 = vadd.f32 %v4339, %v4435
  %v4437 = vpop.f32.mrb[0].mxu0
  %4438 = vmatprep.mubr.bf16.mxu0 %v1671
  %4439 = vmatmul.mubr.bf16.gmra.mrb[0].mxu0 %v1670
  %v4440 = vpop.f32.mrb[0].mxu0
  %v4441 = vadd.f32 %v4344, %v4440
  %v4442 = vpop.f32.mrb[0].mxu0
  %v4443 = vpop.f32.mrb[0].mxu0
  %v4444 = vadd.f32 %v4347, %v4443
  %v4445 = vpop.f32.mrb[0].mxu0
  %4446 = vmatprep.mubr.bf16.mxu0 %v1703
  %4447 = vmatmul.mubr.bf16.gmra.mrb[0].mxu0 %v1702
  %v4448 = vpop.f32.mrb[0].mxu0
  %v4449 = vadd.f32 %v4352, %v4448
  %v4450 = vpop.f32.mrb[0].mxu0
  %v4451 = vpop.f32.mrb[0].mxu0
  %v4452 = vadd.f32 %v4355, %v4451
  %v4453 = vpop.f32.mrb[0].mxu0
  %4454 = vmatprep.mubr.bf16.mxu0 %v1735
  %4455 = vmatmul.mubr.bf16.gmra.mrb[0].mxu0 %v1734
  %v4456 = vpop.f32.mrb[0].mxu0
  %v4457 = vadd.f32 %v4360, %v4456
  %v4458 = vpop.f32.mrb[0].mxu0
  %v4459 = vpop.f32.mrb[0].mxu0
  %v4460 = vadd.f32 %v4363, %v4459
  %v4461 = vpop.f32.mrb[0].mxu0
  %4462 = vmatprep.mubr.bf16.mxu0 %v1767
  %4463 = vmatmul.mubr.bf16.gmra.mrb[0].mxu0 %v1766
  %v4464 = vpop.f32.mrb[0].mxu0
  %v4465 = vadd.f32 %v4368, %v4464
  %v4466 = vpop.f32.mrb[0].mxu0
  %v4467 = vpop.f32.mrb[0].mxu0
  %v4468 = vadd.f32 %v4371, %v4467
  %v4469 = vpop.f32.mrb[0].mxu0
  %4470 = vmatprep.mubr.bf16.mxu0 %v1799
  %4471 = vmatmul.mubr.bf16.gmra.mrb[0].mxu0 %v1798
  %v4472 = vpop.f32.mrb[0].mxu0
  %v4473 = vadd.f32 %v4376, %v4472
  %v4474 = vpop.f32.mrb[0].mxu0
  %v4475 = vpop.f32.mrb[0].mxu0
  %v4476 = vadd.f32 %v4379, %v4475
  %v4477 = vpop.f32.mrb[0].mxu0
  %4478 = vdwg.mxu0
  %4479 = vmatprep.subr.bf16.mxu0 0
  %4480 = vmatpush1.bf16.msra.mxu0 %v3238
  %4481 = vmatprep.subr.bf16.mxu0 0
  %4482 = vmatpush1.bf16.msra.mxu0 %v3239
  %4483 = vmatprep.subr.bf16.mxu0 0
  %4484 = vmatpush1.bf16.msra.mxu0 %v3240
  %4485 = vmatprep.subr.bf16.mxu0 0
  %4486 = vmatpush1.bf16.msra.mxu0 %v3241
  %4487 = vmatprep.subr.bf16.mxu0 0
  %4488 = vmatpush1.bf16.msra.mxu0 %v3242
  %4489 = vmatprep.subr.bf16.mxu0 0
  %4490 = vmatpush1.bf16.msra.mxu0 %v3243
  %4491 = vmatprep.subr.bf16.mxu0 0
  %4492 = vmatpush1.bf16.msra.mxu0 %v3244
  %4493 = vmatprep.subr.bf16.mxu0 0
  %4494 = vmatpush1.bf16.msra.mxu0 %v3245
  %4495 = vmatprep.subr.bf16.mxu0 0
  %4496 = vmatpush1.bf16.msra.mxu0 %v3246
  %4497 = vmatprep.subr.bf16.mxu0 0
  %4498 = vmatpush1.bf16.msra.mxu0 %v3247
  %4499 = vmatprep.subr.bf16.mxu0 0
  %4500 = vmatpush1.bf16.msra.mxu0 %v3248
  %4501 = vmatprep.subr.bf16.mxu0 0
  %4502 = vmatpush1.bf16.msra.mxu0 %v3249
  %4503 = vmatprep.subr.bf16.mxu0 0
  %4504 = vmatpush1.bf16.msra.mxu0 %v3250
  %4505 = vmatprep.subr.bf16.mxu0 0
  %4506 = vmatpush1.bf16.msra.mxu0 %v3251
  %4507 = vmatprep.subr.bf16.mxu0 0
  %4508 = vmatpush1.bf16.msra.mxu0 %v3252
  %4509 = vmatprep.subr.bf16.mxu0 0
  %4510 = vmatpush1.bf16.msra.mxu0 %v3253
  %4511 = vmatprep.mubr.bf16.mxu0 %v1577
  %4512 = vmatmul.mubr.bf16.gmra.mrb[0].mxu0 %v1576
  %v4513 = vpop.f32.mrb[0].mxu0
  %v4514 = vadd.f32 %v4417, %v4513
  %v4515 = vpop.f32.mrb[0].mxu0
  %v4516 = vpop.f32.mrb[0].mxu0
  %v4517 = vadd.f32 %v4420, %v4516
  %v4518 = vpop.f32.mrb[0].mxu0
  %4519 = vmatprep.mubr.bf16.mxu0 %v1609
  %4520 = vmatmul.mubr.bf16.gmra.mrb[0].mxu0 %v1608
  %v4521 = vpop.f32.mrb[0].mxu0
  %v4522 = vadd.f32 %v4425, %v4521
  %v4523 = vpop.f32.mrb[0].mxu0
  %v4524 = vpop.f32.mrb[0].mxu0
  %v4525 = vadd.f32 %v4428, %v4524
  %v4526 = vpop.f32.mrb[0].mxu0
  %4527 = vmatprep.mubr.bf16.mxu0 %v1641
  %4528 = vmatmul.mubr.bf16.gmra.mrb[0].mxu0 %v1640
  %v4529 = vpop.f32.mrb[0].mxu0
  %v4530 = vadd.f32 %v4433, %v4529
  %v4531 = vpop.f32.mrb[0].mxu0
  %v4532 = vpop.f32.mrb[0].mxu0
  %v4533 = vadd.f32 %v4436, %v4532
  %v4534 = vpop.f32.mrb[0].mxu0
  %4535 = vmatprep.mubr.bf16.mxu0 %v1673
  %4536 = vmatmul.mubr.bf16.gmra.mrb[0].mxu0 %v1672
  %v4537 = vpop.f32.mrb[0].mxu0
  %v4538 = vadd.f32 %v4441, %v4537
  %v4539 = vpop.f32.mrb[0].mxu0
  %v4540 = vpop.f32.mrb[0].mxu0
  %v4541 = vadd.f32 %v4444, %v4540
  %v4542 = vpop.f32.mrb[0].mxu0
  %4543 = vmatprep.mubr.bf16.mxu0 %v1705
  %4544 = vmatmul.mubr.bf16.gmra.mrb[0].mxu0 %v1704
  %v4545 = vpop.f32.mrb[0].mxu0
  %v4546 = vadd.f32 %v4449, %v4545
  %v4547 = vpop.f32.mrb[0].mxu0
  %v4548 = vpop.f32.mrb[0].mxu0
  %v4549 = vadd.f32 %v4452, %v4548
  %v4550 = vpop.f32.mrb[0].mxu0
  %4551 = vmatprep.mubr.bf16.mxu0 %v1737
  %4552 = vmatmul.mubr.bf16.gmra.mrb[0].mxu0 %v1736
  %v4553 = vpop.f32.mrb[0].mxu0
  %v4554 = vadd.f32 %v4457, %v4553
  %v4555 = vpop.f32.mrb[0].mxu0
  %v4556 = vpop.f32.mrb[0].mxu0
  %v4557 = vadd.f32 %v4460, %v4556
  %v4558 = vpop.f32.mrb[0].mxu0
  %4559 = vmatprep.mubr.bf16.mxu0 %v1769
  %4560 = vmatmul.mubr.bf16.gmra.mrb[0].mxu0 %v1768
  %v4561 = vpop.f32.mrb[0].mxu0
  %v4562 = vadd.f32 %v4465, %v4561
  %v4563 = vpop.f32.mrb[0].mxu0
  %v4564 = vpop.f32.mrb[0].mxu0
  %v4565 = vadd.f32 %v4468, %v4564
  %v4566 = vpop.f32.mrb[0].mxu0
  %4567 = vmatprep.mubr.bf16.mxu0 %v1801
  %4568 = vmatmul.mubr.bf16.gmra.mrb[0].mxu0 %v1800
  %v4569 = vpop.f32.mrb[0].mxu0
  %v4570 = vadd.f32 %v4473, %v4569
  %v4571 = vpop.f32.mrb[0].mxu0
  %v4572 = vpop.f32.mrb[0].mxu0
  %v4573 = vadd.f32 %v4476, %v4572
  %v4574 = vpop.f32.mrb[0].mxu0
  %4575 = vdwg.mxu0
  %4576 = vmatprep.subr.bf16.mxu0 0
  %4577 = vmatpush1.bf16.msra.mxu0 %v3254
  %4578 = vmatprep.subr.bf16.mxu0 0
  %4579 = vmatpush1.bf16.msra.mxu0 %v3255
  %4580 = vmatprep.subr.bf16.mxu0 0
  %4581 = vmatpush1.bf16.msra.mxu0 %v3256
  %4582 = vmatprep.subr.bf16.mxu0 0
  %4583 = vmatpush1.bf16.msra.mxu0 %v3257
  %4584 = vmatprep.subr.bf16.mxu0 0
  %4585 = vmatpush1.bf16.msra.mxu0 %v3258
  %4586 = vmatprep.subr.bf16.mxu0 0
  %4587 = vmatpush1.bf16.msra.mxu0 %v3259
  %4588 = vmatprep.subr.bf16.mxu0 0
  %4589 = vmatpush1.bf16.msra.mxu0 %v3260
  %4590 = vmatprep.subr.bf16.mxu0 0
  %4591 = vmatpush1.bf16.msra.mxu0 %v3261
  %4592 = vmatprep.subr.bf16.mxu0 0
  %4593 = vmatpush1.bf16.msra.mxu0 %v3262
  %4594 = vmatprep.subr.bf16.mxu0 0
  %4595 = vmatpush1.bf16.msra.mxu0 %v3263
  %4596 = vmatprep.subr.bf16.mxu0 0
  %4597 = vmatpush1.bf16.msra.mxu0 %v3264
  %4598 = vmatprep.subr.bf16.mxu0 0
  %4599 = vmatpush1.bf16.msra.mxu0 %v3265
  %4600 = vmatprep.subr.bf16.mxu0 0
  %4601 = vmatpush1.bf16.msra.mxu0 %v3266
  %4602 = vmatprep.subr.bf16.mxu0 0
  %4603 = vmatpush1.bf16.msra.mxu0 %v3267
  %4604 = vmatprep.subr.bf16.mxu0 0
  %4605 = vmatpush1.bf16.msra.mxu0 %v3268
  %4606 = vmatprep.subr.bf16.mxu0 0
  %4607 = vmatpush1.bf16.msra.mxu0 %v3269
  %4608 = vmatprep.mubr.bf16.mxu0 %v1579
  %4609 = vmatmul.mubr.bf16.gmra.mrb[0].mxu0 %v1578
  %v4610 = vpop.f32.mrb[0].mxu0
  %v4611 = vadd.f32 %v4514, %v4610
  %v4612 = vpop.f32.mrb[0].mxu0
  %v4613 = vpop.f32.mrb[0].mxu0
  %v4614 = vadd.f32 %v4517, %v4613
  %v4615 = vpop.f32.mrb[0].mxu0
  %4616 = vmatprep.mubr.bf16.mxu0 %v1611
  %4617 = vmatmul.mubr.bf16.gmra.mrb[0].mxu0 %v1610
  %v4618 = vpop.f32.mrb[0].mxu0
  %v4619 = vadd.f32 %v4522, %v4618
  %v4620 = vpop.f32.mrb[0].mxu0
  %v4621 = vpop.f32.mrb[0].mxu0
  %v4622 = vadd.f32 %v4525, %v4621
  %v4623 = vpop.f32.mrb[0].mxu0
  %4624 = vmatprep.mubr.bf16.mxu0 %v1643
  %4625 = vmatmul.mubr.bf16.gmra.mrb[0].mxu0 %v1642
  %v4626 = vpop.f32.mrb[0].mxu0
  %v4627 = vadd.f32 %v4530, %v4626
  %v4628 = vpop.f32.mrb[0].mxu0
  %v4629 = vpop.f32.mrb[0].mxu0
  %v4630 = vadd.f32 %v4533, %v4629
  %v4631 = vpop.f32.mrb[0].mxu0
  %4632 = vmatprep.mubr.bf16.mxu0 %v1675
  %4633 = vmatmul.mubr.bf16.gmra.mrb[0].mxu0 %v1674
  %v4634 = vpop.f32.mrb[0].mxu0
  %v4635 = vadd.f32 %v4538, %v4634
  %v4636 = vpop.f32.mrb[0].mxu0
  %v4637 = vpop.f32.mrb[0].mxu0
  %v4638 = vadd.f32 %v4541, %v4637
  %v4639 = vpop.f32.mrb[0].mxu0
  %4640 = vmatprep.mubr.bf16.mxu0 %v1707
  %4641 = vmatmul.mubr.bf16.gmra.mrb[0].mxu0 %v1706
  %v4642 = vpop.f32.mrb[0].mxu0
  %v4643 = vadd.f32 %v4546, %v4642
  %v4644 = vpop.f32.mrb[0].mxu0
  %v4645 = vpop.f32.mrb[0].mxu0
  %v4646 = vadd.f32 %v4549, %v4645
  %v4647 = vpop.f32.mrb[0].mxu0
  %4648 = vmatprep.mubr.bf16.mxu0 %v1739
  %4649 = vmatmul.mubr.bf16.gmra.mrb[0].mxu0 %v1738
  %v4650 = vpop.f32.mrb[0].mxu0
  %v4651 = vadd.f32 %v4554, %v4650
  %v4652 = vpop.f32.mrb[0].mxu0
  %v4653 = vpop.f32.mrb[0].mxu0
  %v4654 = vadd.f32 %v4557, %v4653
  %v4655 = vpop.f32.mrb[0].mxu0
  %4656 = vmatprep.mubr.bf16.mxu0 %v1771
  %4657 = vmatmul.mubr.bf16.gmra.mrb[0].mxu0 %v1770
  %v4658 = vpop.f32.mrb[0].mxu0
  %v4659 = vadd.f32 %v4562, %v4658
  %v4660 = vpop.f32.mrb[0].mxu0
  %v4661 = vpop.f32.mrb[0].mxu0
  %v4662 = vadd.f32 %v4565, %v4661
  %v4663 = vpop.f32.mrb[0].mxu0
  %4664 = vmatprep.mubr.bf16.mxu0 %v1803
  %4665 = vmatmul.mubr.bf16.gmra.mrb[0].mxu0 %v1802
  %v4666 = vpop.f32.mrb[0].mxu0
  %v4667 = vadd.f32 %v4570, %v4666
  %v4668 = vpop.f32.mrb[0].mxu0
  %v4669 = vpop.f32.mrb[0].mxu0
  %v4670 = vadd.f32 %v4573, %v4669
  %v4671 = vpop.f32.mrb[0].mxu0
  %4672 = vdwg.mxu0
  %4673 = vmatprep.subr.bf16.mxu0 0
  %4674 = vmatpush1.bf16.msra.mxu0 %v3270
  %4675 = vmatprep.subr.bf16.mxu0 0
  %4676 = vmatpush1.bf16.msra.mxu0 %v3271
  %4677 = vmatprep.subr.bf16.mxu0 0
  %4678 = vmatpush1.bf16.msra.mxu0 %v3272
  %4679 = vmatprep.subr.bf16.mxu0 0
  %4680 = vmatpush1.bf16.msra.mxu0 %v3273
  %4681 = vmatprep.subr.bf16.mxu0 0
  %4682 = vmatpush1.bf16.msra.mxu0 %v3274
  %4683 = vmatprep.subr.bf16.mxu0 0
  %4684 = vmatpush1.bf16.msra.mxu0 %v3275
  %4685 = vmatprep.subr.bf16.mxu0 0
  %4686 = vmatpush1.bf16.msra.mxu0 %v3276
  %4687 = vmatprep.subr.bf16.mxu0 0
  %4688 = vmatpush1.bf16.msra.mxu0 %v3277
  %4689 = vmatprep.subr.bf16.mxu0 0
  %4690 = vmatpush1.bf16.msra.mxu0 %v3278
  %4691 = vmatprep.subr.bf16.mxu0 0
  %4692 = vmatpush1.bf16.msra.mxu0 %v3279
  %4693 = vmatprep.subr.bf16.mxu0 0
  %4694 = vmatpush1.bf16.msra.mxu0 %v3280
  %4695 = vmatprep.subr.bf16.mxu0 0
  %4696 = vmatpush1.bf16.msra.mxu0 %v3281
  %4697 = vmatprep.subr.bf16.mxu0 0
  %4698 = vmatpush1.bf16.msra.mxu0 %v3282
  %4699 = vmatprep.subr.bf16.mxu0 0
  %4700 = vmatpush1.bf16.msra.mxu0 %v3283
  %4701 = vmatprep.subr.bf16.mxu0 0
  %4702 = vmatpush1.bf16.msra.mxu0 %v3284
  %4703 = vmatprep.subr.bf16.mxu0 0
  %4704 = vmatpush1.bf16.msra.mxu0 %v3285
  %4705 = vmatprep.mubr.bf16.mxu0 %v1581
  %4706 = vmatmul.mubr.bf16.gmra.mrb[0].mxu0 %v1580
  %v4707 = vpop.f32.mrb[0].mxu0
  %v4708 = vadd.f32 %v4611, %v4707
  %v4709 = vpop.f32.mrb[0].mxu0
  %v4710 = vpop.f32.mrb[0].mxu0
  %v4711 = vadd.f32 %v4614, %v4710
  %v4712 = vpop.f32.mrb[0].mxu0
  %4713 = vmatprep.mubr.bf16.mxu0 %v1613
  %4714 = vmatmul.mubr.bf16.gmra.mrb[0].mxu0 %v1612
  %v4715 = vpop.f32.mrb[0].mxu0
  %v4716 = vadd.f32 %v4619, %v4715
  %v4717 = vpop.f32.mrb[0].mxu0
  %v4718 = vpop.f32.mrb[0].mxu0
  %v4719 = vadd.f32 %v4622, %v4718
  %v4720 = vpop.f32.mrb[0].mxu0
  %4721 = vmatprep.mubr.bf16.mxu0 %v1645
  %4722 = vmatmul.mubr.bf16.gmra.mrb[0].mxu0 %v1644
  %v4723 = vpop.f32.mrb[0].mxu0
  %v4724 = vadd.f32 %v4627, %v4723
  %v4725 = vpop.f32.mrb[0].mxu0
  %v4726 = vpop.f32.mrb[0].mxu0
  %v4727 = vadd.f32 %v4630, %v4726
  %v4728 = vpop.f32.mrb[0].mxu0
  %4729 = vmatprep.mubr.bf16.mxu0 %v1677
  %4730 = vmatmul.mubr.bf16.gmra.mrb[0].mxu0 %v1676
  %v4731 = vpop.f32.mrb[0].mxu0
  %v4732 = vadd.f32 %v4635, %v4731
  %v4733 = vpop.f32.mrb[0].mxu0
  %v4734 = vpop.f32.mrb[0].mxu0
  %v4735 = vadd.f32 %v4638, %v4734
  %v4736 = vpop.f32.mrb[0].mxu0
  %4737 = vmatprep.mubr.bf16.mxu0 %v1709
  %4738 = vmatmul.mubr.bf16.gmra.mrb[0].mxu0 %v1708
  %v4739 = vpop.f32.mrb[0].mxu0
  %v4740 = vadd.f32 %v4643, %v4739
  %v4741 = vpop.f32.mrb[0].mxu0
  %v4742 = vpop.f32.mrb[0].mxu0
  %v4743 = vadd.f32 %v4646, %v4742
  %v4744 = vpop.f32.mrb[0].mxu0
  %4745 = vmatprep.mubr.bf16.mxu0 %v1741
  %4746 = vmatmul.mubr.bf16.gmra.mrb[0].mxu0 %v1740
  %v4747 = vpop.f32.mrb[0].mxu0
  %v4748 = vadd.f32 %v4651, %v4747
  %v4749 = vpop.f32.mrb[0].mxu0
  %v4750 = vpop.f32.mrb[0].mxu0
  %v4751 = vadd.f32 %v4654, %v4750
  %v4752 = vpop.f32.mrb[0].mxu0
  %4753 = vmatprep.mubr.bf16.mxu0 %v1773
  %4754 = vmatmul.mubr.bf16.gmra.mrb[0].mxu0 %v1772
  %v4755 = vpop.f32.mrb[0].mxu0
  %v4756 = vadd.f32 %v4659, %v4755
  %v4757 = vpop.f32.mrb[0].mxu0
  %v4758 = vpop.f32.mrb[0].mxu0
  %v4759 = vadd.f32 %v4662, %v4758
  %v4760 = vpop.f32.mrb[0].mxu0
  %4761 = vmatprep.mubr.bf16.mxu0 %v1805
  %4762 = vmatmul.mubr.bf16.gmra.mrb[0].mxu0 %v1804
  %v4763 = vpop.f32.mrb[0].mxu0
  %v4764 = vadd.f32 %v4667, %v4763
  %v4765 = vpop.f32.mrb[0].mxu0
  %v4766 = vpop.f32.mrb[0].mxu0
  %v4767 = vadd.f32 %v4670, %v4766
  %v4768 = vpop.f32.mrb[0].mxu0
  %4769 = vdwg.mxu0
  %4770 = vmatprep.subr.bf16.mxu0 0
  %4771 = vmatpush1.bf16.msra.mxu0 %v3286
  %4772 = vmatprep.subr.bf16.mxu0 0
  %4773 = vmatpush1.bf16.msra.mxu0 %v3287
  %4774 = vmatprep.subr.bf16.mxu0 0
  %4775 = vmatpush1.bf16.msra.mxu0 %v3288
  %4776 = vmatprep.subr.bf16.mxu0 0
  %4777 = vmatpush1.bf16.msra.mxu0 %v3289
  %4778 = vmatprep.subr.bf16.mxu0 0
  %4779 = vmatpush1.bf16.msra.mxu0 %v3290
  %4780 = vmatprep.subr.bf16.mxu0 0
  %4781 = vmatpush1.bf16.msra.mxu0 %v3291
  %4782 = vmatprep.subr.bf16.mxu0 0
  %4783 = vmatpush1.bf16.msra.mxu0 %v3292
  %4784 = vmatprep.subr.bf16.mxu0 0
  %4785 = vmatpush1.bf16.msra.mxu0 %v3293
  %4786 = vmatprep.subr.bf16.mxu0 0
  %4787 = vmatpush1.bf16.msra.mxu0 %v3294
  %4788 = vmatprep.subr.bf16.mxu0 0
  %4789 = vmatpush1.bf16.msra.mxu0 %v3295
  %4790 = vmatprep.subr.bf16.mxu0 0
  %4791 = vmatpush1.bf16.msra.mxu0 %v3296
  %4792 = vmatprep.subr.bf16.mxu0 0
  %4793 = vmatpush1.bf16.msra.mxu0 %v3297
  %4794 = vmatprep.subr.bf16.mxu0 0
  %4795 = vmatpush1.bf16.msra.mxu0 %v3298
  %4796 = vmatprep.subr.bf16.mxu0 0
  %4797 = vmatpush1.bf16.msra.mxu0 %v3299
  %4798 = vmatprep.subr.bf16.mxu0 0
  %4799 = vmatpush1.bf16.msra.mxu0 %v3300
  %4800 = vmatprep.subr.bf16.mxu0 0
  %4801 = vmatpush1.bf16.msra.mxu0 %v3301
  %4802 = vmatprep.mubr.bf16.mxu0 %v1583
  %4803 = vmatmul.mubr.bf16.gmra.mrb[0].mxu0 %v1582
  %v4804 = vpop.f32.mrb[0].mxu0
  %v4805 = vadd.f32 %v4708, %v4804
  %v4806 = vpop.f32.mrb[0].mxu0
  %v4807 = vpop.f32.mrb[0].mxu0
  %v4808 = vadd.f32 %v4711, %v4807
  %v4809 = vpop.f32.mrb[0].mxu0
  %4810 = vmatprep.mubr.bf16.mxu0 %v1615
  %4811 = vmatmul.mubr.bf16.gmra.mrb[0].mxu0 %v1614
  %v4812 = vpop.f32.mrb[0].mxu0
  %v4813 = vadd.f32 %v4716, %v4812
  %v4814 = vpop.f32.mrb[0].mxu0
  %v4815 = vpop.f32.mrb[0].mxu0
  %v4816 = vadd.f32 %v4719, %v4815
  %v4817 = vpop.f32.mrb[0].mxu0
  %4818 = vmatprep.mubr.bf16.mxu0 %v1647
  %4819 = vmatmul.mubr.bf16.gmra.mrb[0].mxu0 %v1646
  %v4820 = vpop.f32.mrb[0].mxu0
  %v4821 = vadd.f32 %v4724, %v4820
  %v4822 = vpop.f32.mrb[0].mxu0
  %v4823 = vpop.f32.mrb[0].mxu0
  %v4824 = vadd.f32 %v4727, %v4823
  %v4825 = vpop.f32.mrb[0].mxu0
  %4826 = vmatprep.mubr.bf16.mxu0 %v1679
  %4827 = vmatmul.mubr.bf16.gmra.mrb[0].mxu0 %v1678
  %v4828 = vpop.f32.mrb[0].mxu0
  %v4829 = vadd.f32 %v4732, %v4828
  %v4830 = vpop.f32.mrb[0].mxu0
  %v4831 = vpop.f32.mrb[0].mxu0
  %v4832 = vadd.f32 %v4735, %v4831
  %v4833 = vpop.f32.mrb[0].mxu0
  %4834 = vmatprep.mubr.bf16.mxu0 %v1711
  %4835 = vmatmul.mubr.bf16.gmra.mrb[0].mxu0 %v1710
  %v4836 = vpop.f32.mrb[0].mxu0
  %v4837 = vadd.f32 %v4740, %v4836
  %v4838 = vpop.f32.mrb[0].mxu0
  %v4839 = vpop.f32.mrb[0].mxu0
  %v4840 = vadd.f32 %v4743, %v4839
  %v4841 = vpop.f32.mrb[0].mxu0
  %4842 = vmatprep.mubr.bf16.mxu0 %v1743
  %4843 = vmatmul.mubr.bf16.gmra.mrb[0].mxu0 %v1742
  %v4844 = vpop.f32.mrb[0].mxu0
  %v4845 = vadd.f32 %v4748, %v4844
  %v4846 = vpop.f32.mrb[0].mxu0
  %v4847 = vpop.f32.mrb[0].mxu0
  %v4848 = vadd.f32 %v4751, %v4847
  %v4849 = vpop.f32.mrb[0].mxu0
  %4850 = vmatprep.mubr.bf16.mxu0 %v1775
  %4851 = vmatmul.mubr.bf16.gmra.mrb[0].mxu0 %v1774
  %v4852 = vpop.f32.mrb[0].mxu0
  %v4853 = vadd.f32 %v4756, %v4852
  %v4854 = vpop.f32.mrb[0].mxu0
  %v4855 = vpop.f32.mrb[0].mxu0
  %v4856 = vadd.f32 %v4759, %v4855
  %v4857 = vpop.f32.mrb[0].mxu0
  %4858 = vmatprep.mubr.bf16.mxu0 %v1807
  %4859 = vmatmul.mubr.bf16.gmra.mrb[0].mxu0 %v1806
  %v4860 = vpop.f32.mrb[0].mxu0
  %v4861 = vadd.f32 %v4764, %v4860
  %v4862 = vpop.f32.mrb[0].mxu0
  %v4863 = vpop.f32.mrb[0].mxu0
  %v4864 = vadd.f32 %v4767, %v4863
  %v4865 = vpop.f32.mrb[0].mxu0
  %4866 = vdwg.mxu0
  %4867 = vmatprep.subr.bf16.mxu0 0
  %4868 = vmatpush1.bf16.msra.mxu0 %v3302
  %4869 = vmatprep.subr.bf16.mxu0 0
  %4870 = vmatpush1.bf16.msra.mxu0 %v3303
  %4871 = vmatprep.subr.bf16.mxu0 0
  %4872 = vmatpush1.bf16.msra.mxu0 %v3304
  %4873 = vmatprep.subr.bf16.mxu0 0
  %4874 = vmatpush1.bf16.msra.mxu0 %v3305
  %4875 = vmatprep.subr.bf16.mxu0 0
  %4876 = vmatpush1.bf16.msra.mxu0 %v3306
  %4877 = vmatprep.subr.bf16.mxu0 0
  %4878 = vmatpush1.bf16.msra.mxu0 %v3307
  %4879 = vmatprep.subr.bf16.mxu0 0
  %4880 = vmatpush1.bf16.msra.mxu0 %v3308
  %4881 = vmatprep.subr.bf16.mxu0 0
  %4882 = vmatpush1.bf16.msra.mxu0 %v3309
  %4883 = vmatprep.subr.bf16.mxu0 0
  %4884 = vmatpush1.bf16.msra.mxu0 %v3310
  %4885 = vmatprep.subr.bf16.mxu0 0
  %4886 = vmatpush1.bf16.msra.mxu0 %v3311
  %4887 = vmatprep.subr.bf16.mxu0 0
  %4888 = vmatpush1.bf16.msra.mxu0 %v3312
  %4889 = vmatprep.subr.bf16.mxu0 0
  %4890 = vmatpush1.bf16.msra.mxu0 %v3313
  %4891 = vmatprep.subr.bf16.mxu0 0
  %4892 = vmatpush1.bf16.msra.mxu0 %v3314
  %4893 = vmatprep.subr.bf16.mxu0 0
  %4894 = vmatpush1.bf16.msra.mxu0 %v3315
  %4895 = vmatprep.subr.bf16.mxu0 0
  %4896 = vmatpush1.bf16.msra.mxu0 %v3316
  %4897 = vmatprep.subr.bf16.mxu0 0
  %4898 = vmatpush1.bf16.msra.mxu0 %v3317
  %4899 = vmatprep.mubr.bf16.mxu0 %v1585
  %4900 = vmatmul.mubr.bf16.gmra.mrb[0].mxu0 %v1584
  %v4901 = vpop.f32.mrb[0].mxu0
  %v4902 = vadd.f32 %v4805, %v4901
  %v4903 = vpop.f32.mrb[0].mxu0
  %v4904 = vpop.f32.mrb[0].mxu0
  %v4905 = vadd.f32 %v4808, %v4904
  %v4906 = vpop.f32.mrb[0].mxu0
  %4907 = vmatprep.mubr.bf16.mxu0 %v1617
  %4908 = vmatmul.mubr.bf16.gmra.mrb[0].mxu0 %v1616
  %v4909 = vpop.f32.mrb[0].mxu0
  %v4910 = vadd.f32 %v4813, %v4909
  %v4911 = vpop.f32.mrb[0].mxu0
  %v4912 = vpop.f32.mrb[0].mxu0
  %v4913 = vadd.f32 %v4816, %v4912
  %v4914 = vpop.f32.mrb[0].mxu0
  %4915 = vmatprep.mubr.bf16.mxu0 %v1649
  %4916 = vmatmul.mubr.bf16.gmra.mrb[0].mxu0 %v1648
  %v4917 = vpop.f32.mrb[0].mxu0
  %v4918 = vadd.f32 %v4821, %v4917
  %v4919 = vpop.f32.mrb[0].mxu0
  %v4920 = vpop.f32.mrb[0].mxu0
  %v4921 = vadd.f32 %v4824, %v4920
  %v4922 = vpop.f32.mrb[0].mxu0
  %4923 = vmatprep.mubr.bf16.mxu0 %v1681
  %4924 = vmatmul.mubr.bf16.gmra.mrb[0].mxu0 %v1680
  %v4925 = vpop.f32.mrb[0].mxu0
  %v4926 = vadd.f32 %v4829, %v4925
  %v4927 = vpop.f32.mrb[0].mxu0
  %v4928 = vpop.f32.mrb[0].mxu0
  %v4929 = vadd.f32 %v4832, %v4928
  %v4930 = vpop.f32.mrb[0].mxu0
  %4931 = vmatprep.mubr.bf16.mxu0 %v1713
  %4932 = vmatmul.mubr.bf16.gmra.mrb[0].mxu0 %v1712
  %v4933 = vpop.f32.mrb[0].mxu0
  %v4934 = vadd.f32 %v4837, %v4933
  %v4935 = vpop.f32.mrb[0].mxu0
  %v4936 = vpop.f32.mrb[0].mxu0
  %v4937 = vadd.f32 %v4840, %v4936
  %v4938 = vpop.f32.mrb[0].mxu0
  %4939 = vmatprep.mubr.bf16.mxu0 %v1745
  %4940 = vmatmul.mubr.bf16.gmra.mrb[0].mxu0 %v1744
  %v4941 = vpop.f32.mrb[0].mxu0
  %v4942 = vadd.f32 %v4845, %v4941
  %v4943 = vpop.f32.mrb[0].mxu0
  %v4944 = vpop.f32.mrb[0].mxu0
  %v4945 = vadd.f32 %v4848, %v4944
  %v4946 = vpop.f32.mrb[0].mxu0
  %4947 = vmatprep.mubr.bf16.mxu0 %v1777
  %4948 = vmatmul.mubr.bf16.gmra.mrb[0].mxu0 %v1776
  %v4949 = vpop.f32.mrb[0].mxu0
  %v4950 = vadd.f32 %v4853, %v4949
  %v4951 = vpop.f32.mrb[0].mxu0
  %v4952 = vpop.f32.mrb[0].mxu0
  %v4953 = vadd.f32 %v4856, %v4952
  %v4954 = vpop.f32.mrb[0].mxu0
  %4955 = vmatprep.mubr.bf16.mxu0 %v1809
  %4956 = vmatmul.mubr.bf16.gmra.mrb[0].mxu0 %v1808
  %v4957 = vpop.f32.mrb[0].mxu0
  %v4958 = vadd.f32 %v4861, %v4957
  %v4959 = vpop.f32.mrb[0].mxu0
  %v4960 = vpop.f32.mrb[0].mxu0
  %v4961 = vadd.f32 %v4864, %v4960
  %v4962 = vpop.f32.mrb[0].mxu0
  %4963 = vdwg.mxu0
  %4964 = vmatprep.subr.bf16.mxu0 0
  %4965 = vmatpush1.bf16.msra.mxu0 %v3318
  %4966 = vmatprep.subr.bf16.mxu0 0
  %4967 = vmatpush1.bf16.msra.mxu0 %v3319
  %4968 = vmatprep.subr.bf16.mxu0 0
  %4969 = vmatpush1.bf16.msra.mxu0 %v3320
  %4970 = vmatprep.subr.bf16.mxu0 0
  %4971 = vmatpush1.bf16.msra.mxu0 %v3321
  %4972 = vmatprep.subr.bf16.mxu0 0
  %4973 = vmatpush1.bf16.msra.mxu0 %v3322
  %4974 = vmatprep.subr.bf16.mxu0 0
  %4975 = vmatpush1.bf16.msra.mxu0 %v3323
  %4976 = vmatprep.subr.bf16.mxu0 0
  %4977 = vmatpush1.bf16.msra.mxu0 %v3324
  %4978 = vmatprep.subr.bf16.mxu0 0
  %4979 = vmatpush1.bf16.msra.mxu0 %v3325
  %4980 = vmatprep.subr.bf16.mxu0 0
  %4981 = vmatpush1.bf16.msra.mxu0 %v3326
  %4982 = vmatprep.subr.bf16.mxu0 0
  %4983 = vmatpush1.bf16.msra.mxu0 %v3327
  %4984 = vmatprep.subr.bf16.mxu0 0
  %4985 = vmatpush1.bf16.msra.mxu0 %v3328
  %4986 = vmatprep.subr.bf16.mxu0 0
  %4987 = vmatpush1.bf16.msra.mxu0 %v3329
  %4988 = vmatprep.subr.bf16.mxu0 0
  %4989 = vmatpush1.bf16.msra.mxu0 %v3330
  %4990 = vmatprep.subr.bf16.mxu0 0
  %4991 = vmatpush1.bf16.msra.mxu0 %v3331
  %4992 = vmatprep.subr.bf16.mxu0 0
  %4993 = vmatpush1.bf16.msra.mxu0 %v3332
  %4994 = vmatprep.subr.bf16.mxu0 0
  %4995 = vmatpush1.bf16.msra.mxu0 %v3333
  %4996 = vmatprep.mubr.bf16.mxu0 %v1587
  %4997 = vmatmul.mubr.bf16.gmra.mrb[0].mxu0 %v1586
  %v4998 = vpop.f32.mrb[0].mxu0
  %v4999 = vadd.f32 %v4902, %v4998
  %v5000 = vpop.f32.mrb[0].mxu0
  %v5001 = vpop.f32.mrb[0].mxu0
  %v5002 = vadd.f32 %v4905, %v5001
  %v5003 = vpop.f32.mrb[0].mxu0
  %5004 = vmatprep.mubr.bf16.mxu0 %v1619
  %5005 = vmatmul.mubr.bf16.gmra.mrb[0].mxu0 %v1618
  %v5006 = vpop.f32.mrb[0].mxu0
  %v5007 = vadd.f32 %v4910, %v5006
  %v5008 = vpop.f32.mrb[0].mxu0
  %v5009 = vpop.f32.mrb[0].mxu0
  %v5010 = vadd.f32 %v4913, %v5009
  %v5011 = vpop.f32.mrb[0].mxu0
  %5012 = vmatprep.mubr.bf16.mxu0 %v1651
  %5013 = vmatmul.mubr.bf16.gmra.mrb[0].mxu0 %v1650
  %v5014 = vpop.f32.mrb[0].mxu0
  %v5015 = vadd.f32 %v4918, %v5014
  %v5016 = vpop.f32.mrb[0].mxu0
  %v5017 = vpop.f32.mrb[0].mxu0
  %v5018 = vadd.f32 %v4921, %v5017
  %v5019 = vpop.f32.mrb[0].mxu0
  %5020 = vmatprep.mubr.bf16.mxu0 %v1683
  %5021 = vmatmul.mubr.bf16.gmra.mrb[0].mxu0 %v1682
  %v5022 = vpop.f32.mrb[0].mxu0
  %v5023 = vadd.f32 %v4926, %v5022
  %v5024 = vpop.f32.mrb[0].mxu0
  %v5025 = vpop.f32.mrb[0].mxu0
  %v5026 = vadd.f32 %v4929, %v5025
  %v5027 = vpop.f32.mrb[0].mxu0
  %5028 = vmatprep.mubr.bf16.mxu0 %v1715
  %5029 = vmatmul.mubr.bf16.gmra.mrb[0].mxu0 %v1714
  %v5030 = vpop.f32.mrb[0].mxu0
  %v5031 = vadd.f32 %v4934, %v5030
  %v5032 = vpop.f32.mrb[0].mxu0
  %v5033 = vpop.f32.mrb[0].mxu0
  %v5034 = vadd.f32 %v4937, %v5033
  %v5035 = vpop.f32.mrb[0].mxu0
  %5036 = vmatprep.mubr.bf16.mxu0 %v1747
  %5037 = vmatmul.mubr.bf16.gmra.mrb[0].mxu0 %v1746
  %v5038 = vpop.f32.mrb[0].mxu0
  %v5039 = vadd.f32 %v4942, %v5038
  %v5040 = vpop.f32.mrb[0].mxu0
  %v5041 = vpop.f32.mrb[0].mxu0
  %v5042 = vadd.f32 %v4945, %v5041
  %v5043 = vpop.f32.mrb[0].mxu0
  %5044 = vmatprep.mubr.bf16.mxu0 %v1779
  %5045 = vmatmul.mubr.bf16.gmra.mrb[0].mxu0 %v1778
  %v5046 = vpop.f32.mrb[0].mxu0
  %v5047 = vadd.f32 %v4950, %v5046
  %v5048 = vpop.f32.mrb[0].mxu0
  %v5049 = vpop.f32.mrb[0].mxu0
  %v5050 = vadd.f32 %v4953, %v5049
  %v5051 = vpop.f32.mrb[0].mxu0
  %5052 = vmatprep.mubr.bf16.mxu0 %v1811
  %5053 = vmatmul.mubr.bf16.gmra.mrb[0].mxu0 %v1810
  %v5054 = vpop.f32.mrb[0].mxu0
  %v5055 = vadd.f32 %v4958, %v5054
  %v5056 = vpop.f32.mrb[0].mxu0
  %v5057 = vpop.f32.mrb[0].mxu0
  %v5058 = vadd.f32 %v4961, %v5057
  %v5059 = vpop.f32.mrb[0].mxu0
  %5060 = vdwg.mxu0
  %5061 = vmatprep.subr.bf16.mxu0 0
  %5062 = vmatpush1.bf16.msra.mxu0 %v3334
  %5063 = vmatprep.subr.bf16.mxu0 0
  %5064 = vmatpush1.bf16.msra.mxu0 %v3335
  %5065 = vmatprep.subr.bf16.mxu0 0
  %5066 = vmatpush1.bf16.msra.mxu0 %v3336
  %5067 = vmatprep.subr.bf16.mxu0 0
  %5068 = vmatpush1.bf16.msra.mxu0 %v3337
  %5069 = vmatprep.subr.bf16.mxu0 0
  %5070 = vmatpush1.bf16.msra.mxu0 %v3338
  %5071 = vmatprep.subr.bf16.mxu0 0
  %5072 = vmatpush1.bf16.msra.mxu0 %v3339
  %5073 = vmatprep.subr.bf16.mxu0 0
  %5074 = vmatpush1.bf16.msra.mxu0 %v3340
  %5075 = vmatprep.subr.bf16.mxu0 0
  %5076 = vmatpush1.bf16.msra.mxu0 %v3341
  %5077 = vmatprep.subr.bf16.mxu0 0
  %5078 = vmatpush1.bf16.msra.mxu0 %v3342
  %5079 = vmatprep.subr.bf16.mxu0 0
  %5080 = vmatpush1.bf16.msra.mxu0 %v3343
  %5081 = vmatprep.subr.bf16.mxu0 0
  %5082 = vmatpush1.bf16.msra.mxu0 %v3344
  %5083 = vmatprep.subr.bf16.mxu0 0
  %5084 = vmatpush1.bf16.msra.mxu0 %v3345
  %5085 = vmatprep.subr.bf16.mxu0 0
  %5086 = vmatpush1.bf16.msra.mxu0 %v3346
  %5087 = vmatprep.subr.bf16.mxu0 0
  %5088 = vmatpush1.bf16.msra.mxu0 %v3347
  %5089 = vmatprep.subr.bf16.mxu0 0
  %5090 = vmatpush1.bf16.msra.mxu0 %v3348
  %5091 = vmatprep.subr.bf16.mxu0 0
  %5092 = vmatpush1.bf16.msra.mxu0 %v3349
  %5093 = vmatprep.mubr.bf16.mxu0 %v1589
  %5094 = vmatmul.mubr.bf16.gmra.mrb[0].mxu0 %v1588
  %v5095 = vpop.f32.mrb[0].mxu0
  %v5096 = vadd.f32 %v4999, %v5095
  %v5097 = vpop.f32.mrb[0].mxu0
  %v5098 = vpop.f32.mrb[0].mxu0
  %v5099 = vadd.f32 %v5002, %v5098
  %v5100 = vpop.f32.mrb[0].mxu0
  %5101 = vmatprep.mubr.bf16.mxu0 %v1621
  %5102 = vmatmul.mubr.bf16.gmra.mrb[0].mxu0 %v1620
  %v5103 = vpop.f32.mrb[0].mxu0
  %v5104 = vadd.f32 %v5007, %v5103
  %v5105 = vpop.f32.mrb[0].mxu0
  %v5106 = vpop.f32.mrb[0].mxu0
  %v5107 = vadd.f32 %v5010, %v5106
  %v5108 = vpop.f32.mrb[0].mxu0
  %5109 = vmatprep.mubr.bf16.mxu0 %v1653
  %5110 = vmatmul.mubr.bf16.gmra.mrb[0].mxu0 %v1652
  %v5111 = vpop.f32.mrb[0].mxu0
  %v5112 = vadd.f32 %v5015, %v5111
  %v5113 = vpop.f32.mrb[0].mxu0
  %v5114 = vpop.f32.mrb[0].mxu0
  %v5115 = vadd.f32 %v5018, %v5114
  %v5116 = vpop.f32.mrb[0].mxu0
  %5117 = vmatprep.mubr.bf16.mxu0 %v1685
  %5118 = vmatmul.mubr.bf16.gmra.mrb[0].mxu0 %v1684
  %v5119 = vpop.f32.mrb[0].mxu0
  %v5120 = vadd.f32 %v5023, %v5119
  %v5121 = vpop.f32.mrb[0].mxu0
  %v5122 = vpop.f32.mrb[0].mxu0
  %v5123 = vadd.f32 %v5026, %v5122
  %v5124 = vpop.f32.mrb[0].mxu0
  %5125 = vmatprep.mubr.bf16.mxu0 %v1717
  %5126 = vmatmul.mubr.bf16.gmra.mrb[0].mxu0 %v1716
  %v5127 = vpop.f32.mrb[0].mxu0
  %v5128 = vadd.f32 %v5031, %v5127
  %v5129 = vpop.f32.mrb[0].mxu0
  %v5130 = vpop.f32.mrb[0].mxu0
  %v5131 = vadd.f32 %v5034, %v5130
  %v5132 = vpop.f32.mrb[0].mxu0
  %5133 = vmatprep.mubr.bf16.mxu0 %v1749
  %5134 = vmatmul.mubr.bf16.gmra.mrb[0].mxu0 %v1748
  %v5135 = vpop.f32.mrb[0].mxu0
  %v5136 = vadd.f32 %v5039, %v5135
  %v5137 = vpop.f32.mrb[0].mxu0
  %v5138 = vpop.f32.mrb[0].mxu0
  %v5139 = vadd.f32 %v5042, %v5138
  %v5140 = vpop.f32.mrb[0].mxu0
  %5141 = vmatprep.mubr.bf16.mxu0 %v1781
  %5142 = vmatmul.mubr.bf16.gmra.mrb[0].mxu0 %v1780
  %v5143 = vpop.f32.mrb[0].mxu0
  %v5144 = vadd.f32 %v5047, %v5143
  %v5145 = vpop.f32.mrb[0].mxu0
  %v5146 = vpop.f32.mrb[0].mxu0
  %v5147 = vadd.f32 %v5050, %v5146
  %v5148 = vpop.f32.mrb[0].mxu0
  %5149 = vmatprep.mubr.bf16.mxu0 %v1813
  %5150 = vmatmul.mubr.bf16.gmra.mrb[0].mxu0 %v1812
  %v5151 = vpop.f32.mrb[0].mxu0
  %v5152 = vadd.f32 %v5055, %v5151
  %v5153 = vpop.f32.mrb[0].mxu0
  %v5154 = vpop.f32.mrb[0].mxu0
  %v5155 = vadd.f32 %v5058, %v5154
  %v5156 = vpop.f32.mrb[0].mxu0
  %5157 = vdwg.mxu0
  %v5158 = vmax.f32 %v5096, 0.0
  %v5159 = vmax.f32 %v5099, 0.0
  %v5160 = vmax.f32 %v5104, 0.0
  %v5161 = vmax.f32 %v5107, 0.0
  %v5162 = vmax.f32 %v5112, 0.0
  %v5163 = vmax.f32 %v5115, 0.0
  %v5164 = vmax.f32 %v5120, 0.0
  %v5165 = vmax.f32 %v5123, 0.0
  %v5166 = vmax.f32 %v5128, 0.0
  %v5167 = vmax.f32 %v5131, 0.0
  %v5168 = vmax.f32 %v5136, 0.0
  %v5169 = vmax.f32 %v5139, 0.0
  %v5170 = vmax.f32 %v5144, 0.0
  %v5171 = vmax.f32 %v5147, 0.0
  %v5172 = vmax.f32 %v5152, 0.0
  %v5173 = vmax.f32 %v5155, 0.0
  %v5174 = vpack.c.bf16 %v5159, %v5158
  %v5175 = vpack.c.bf16 %v5161, %v5160
  %v5176 = vpack.c.bf16 %v5163, %v5162
  %v5177 = vpack.c.bf16 %v5165, %v5164
  %v5178 = vpack.c.bf16 %v5167, %v5166
  %v5179 = vpack.c.bf16 %v5169, %v5168
  %v5180 = vpack.c.bf16 %v5171, %v5170
  %v5181 = vpack.c.bf16 %v5173, %v5172
  %v5190 = vunpack.c.l.b16 %v5174
  %v5191 = vunpack.c.h.b16 %v5174
  %v5192 = vunpack.c.l.b16 %v5175
  %v5193 = vunpack.c.h.b16 %v5175
  %v5194 = vunpack.c.l.b16 %v5176
  %v5195 = vunpack.c.h.b16 %v5176
  %v5196 = vunpack.c.l.b16 %v5177
  %v5197 = vunpack.c.h.b16 %v5177
  %v5198 = vunpack.c.l.b16 %v5178
  %v5199 = vunpack.c.h.b16 %v5178
  %v5200 = vunpack.c.l.b16 %v5179
  %v5201 = vunpack.c.h.b16 %v5179
  %v5202 = vunpack.c.l.b16 %v5180
  %v5203 = vunpack.c.h.b16 %v5180
  %v5204 = vunpack.c.l.b16 %v5181
  %v5205 = vunpack.c.h.b16 %v5181
  %v5206 = vpack.c.b16 %v5190, %v5190
  %v5207 = vpack.c.b16 %v5191, %v5191
  %v5208 = vpack.c.b16 %v5192, %v5192
  %v5209 = vpack.c.b16 %v5193, %v5193
  %v5210 = vpack.c.b16 %v5194, %v5194
  %v5211 = vpack.c.b16 %v5195, %v5195
  %v5212 = vpack.c.b16 %v5196, %v5196
  %v5213 = vpack.c.b16 %v5197, %v5197
  %v5214 = vpack.c.b16 %v5198, %v5198
  %v5215 = vpack.c.b16 %v5199, %v5199
  %v5216 = vpack.c.b16 %v5200, %v5200
  %v5217 = vpack.c.b16 %v5201, %v5201
  %v5218 = vpack.c.b16 %v5202, %v5202
  %v5219 = vpack.c.b16 %v5203, %v5203
  %v5220 = vpack.c.b16 %v5204, %v5204
  %v5221 = vpack.c.b16 %v5205, %v5205
  %vm5238 = vcmask 519168
  %5239 = vst.msk [vmem:[%s3] sm:$0xf] %vm5238, %v5206
  %5240 = vst.msk [vmem:[%s3 + $0x4] sm:$0xf] %vm5238, %v5207
  %5241 = vst.msk [vmem:[%s3 + $0x8] sm:$0xf] %vm5238, %v5208
  %5242 = vst.msk [vmem:[%s3 + $0xc] sm:$0xf] %vm5238, %v5209
  %5243 = vst.msk [vmem:[%s3 + $0x10] sm:$0xf] %vm5238, %v5210
  %5244 = vst.msk [vmem:[%s3 + $0x14] sm:$0xf] %vm5238, %v5211
  %5245 = vst.msk [vmem:[%s3 + $0x18] sm:$0xf] %vm5238, %v5212
  %5246 = vst.msk [vmem:[%s3 + $0x1c] sm:$0xf] %vm5238, %v5213
  %5247 = vst.msk [vmem:[%s3 + $0x20] sm:$0xf] %vm5238, %v5214
  %5248 = vst.msk [vmem:[%s3 + $0x24] sm:$0xf] %vm5238, %v5215
  %5249 = vst.msk [vmem:[%s3 + $0x28] sm:$0xf] %vm5238, %v5216
  %5250 = vst.msk [vmem:[%s3 + $0x2c] sm:$0xf] %vm5238, %v5217
  %5251 = vst.msk [vmem:[%s3 + $0x30] sm:$0xf] %vm5238, %v5218
  %5252 = vst.msk [vmem:[%s3 + $0x34] sm:$0xf] %vm5238, %v5219
  %5253 = vst.msk [vmem:[%s3 + $0x38] sm:$0xf] %vm5238, %v5220
  %5254 = vst.msk [vmem:[%s3 + $0x3c] sm:$0xf] %vm5238, %v5221
  // Predicated region
  $region14: #{ghostnet_forward.2} parent=0 // pred_check
    _
  $region15: #{ghostnet_forward.2} parent=0 // pred_check_branch
    %5256 = sbr.rel (0) target = $region17
  $region16: #{ghostnet_forward.2} parent=0 // pred_region
    _
  $region17: #{ghostnet_forward.2} parent=0 // pred_fallthru
    _
  // Predicated region
  $region18: #{ghostnet_forward.2} parent=0 // pred_check
    _
  $region19: #{ghostnet_forward.2} parent=0 // pred_check_branch
    %5258 = sbr.rel (0) target = $region21
  $region20: #{ghostnet_forward.2} parent=0 // pred_region
    _
  $region21: #{ghostnet_forward.2} parent=0 // pred_fallthru
    _

// kernel: ghostnet_forward.3
$region0: #{ghostnet_forward.3}
  #allocation0 [shape = 'u32[]', space=smem, size = 0x4, offset = 0x4, fixed_abs, tag = 'smem constant byte address 0x4 - core index']
  #allocation1 [shape = 'u32[144,128]{1,0:T(1,128)}', space=vmem, size = 0x12000, scoped, tag = 'internal scratch']
  %s0 = inlined_call_operand.vmem [shape: bf16[18,1024], index: 0, kind: input, shape index: {}]
  %s1 = inlined_call_operand.vmem [shape: bf16[2,8], index: 1, kind: input, shape index: {}]
  %s2 = inlined_call_operand.vmem [shape: bf16[1024,64], index: 2, kind: input, shape index: {}]
  %s3 = inlined_call_operand.vmem [shape: f32[1,64], index: 3, kind: input, shape index: {}]
  %s4 = inlined_call_operand.vmem [shape: f32[1,64], index: 4, kind: input, shape index: {}]
  %s5 = inlined_call_operand.vmem [shape: f32[1,64], index: 5, kind: input, shape index: {}]
  %s6 = inlined_call_operand.vmem [shape: bf16[64,576], index: 6, kind: input, shape index: {}]
  %s7 = inlined_call_operand.vmem [shape: f32[1,64], index: 7, kind: input, shape index: {}]
  %s8 = inlined_call_operand.vmem [shape: bf16[8,64], index: 8, kind: input, shape index: {}]
  %s9 = inlined_call_operand.vmem [shape: f32[1,64], index: 9, kind: input, shape index: {}]
  %s10 = inlined_call_operand.vmem [shape: bf16[64,32], index: 10, kind: input, shape index: {}]
  %s11 = inlined_call_operand.vmem [shape: f32[1,32], index: 11, kind: input, shape index: {}]
  %s12 = inlined_call_operand.vmem [shape: bf16[32,15], index: 12, kind: input, shape index: {}]
  %s13 = inlined_call_operand.vmem [shape: f32[1,15], index: 13, kind: input, shape index: {}]
  %s14 = inlined_call_operand.vmem [shape: f32[2,15], index: 14, kind: output, shape index: {}]
  %s15 = sld [smem:[#allocation0]]
  $region66: #{ghostnet_forward.3} parent=0
    _
  %s17 = ssub.s32 1, %s15
  %s18 = scalar_select 0, %s17, %s15
  // Predicated region
  $region2: #{ghostnet_forward.3} parent=0 // pred_check
    _
  $region3: #{ghostnet_forward.3} parent=0 // pred_check_branch
    %20 = sbr.rel (0) target = $region5
  $region4: #{ghostnet_forward.3} parent=0 // pred_region
    _
  $region5: #{ghostnet_forward.3} parent=0 // pred_fallthru
    _
  // Predicated region
  $region6: #{ghostnet_forward.3} parent=0 // pred_check
    _
  $region7: #{ghostnet_forward.3} parent=0 // pred_check_branch
    %22 = sbr.rel (0) target = $region9
  $region8: #{ghostnet_forward.3} parent=0 // pred_region
    _
  $region9: #{ghostnet_forward.3} parent=0 // pred_fallthru
    _
  // Predicated region
  $region10: #{ghostnet_forward.3} parent=0 // pred_check
    _
  $region11: #{ghostnet_forward.3} parent=0 // pred_check_branch
    %24 = sbr.rel (0) target = $region13
  $region12: #{ghostnet_forward.3} parent=0 // pred_region
    _
  $region13: #{ghostnet_forward.3} parent=0 // pred_fallthru
    _
  // Predicated region
  $region14: #{ghostnet_forward.3} parent=0 // pred_check
    _
  $region15: #{ghostnet_forward.3} parent=0 // pred_check_branch
    %26 = sbr.rel (0) target = $region17
  $region16: #{ghostnet_forward.3} parent=0 // pred_region
    _
  $region17: #{ghostnet_forward.3} parent=0 // pred_fallthru
    _
  // Predicated region
  $region18: #{ghostnet_forward.3} parent=0 // pred_check
    _
  $region19: #{ghostnet_forward.3} parent=0 // pred_check_branch
    %28 = sbr.rel (0) target = $region21
  $region20: #{ghostnet_forward.3} parent=0 // pred_region
    _
  $region21: #{ghostnet_forward.3} parent=0 // pred_fallthru
    _
  // Predicated region
  $region22: #{ghostnet_forward.3} parent=0 // pred_check
    _
  $region23: #{ghostnet_forward.3} parent=0 // pred_check_branch
    %30 = sbr.rel (0) target = $region25
  $region24: #{ghostnet_forward.3} parent=0 // pred_region
    _
  $region25: #{ghostnet_forward.3} parent=0 // pred_fallthru
    _
  // Predicated region
  $region26: #{ghostnet_forward.3} parent=0 // pred_check
    _
  $region27: #{ghostnet_forward.3} parent=0 // pred_check_branch
    %32 = sbr.rel (0) target = $region29
  $region28: #{ghostnet_forward.3} parent=0 // pred_region
    _
  $region29: #{ghostnet_forward.3} parent=0 // pred_fallthru
    _
  // Predicated region
  $region30: #{ghostnet_forward.3} parent=0 // pred_check
    _
  $region31: #{ghostnet_forward.3} parent=0 // pred_check_branch
    %34 = sbr.rel (0) target = $region33
  $region32: #{ghostnet_forward.3} parent=0 // pred_region
    _
  $region33: #{ghostnet_forward.3} parent=0 // pred_fallthru
    _
  // Predicated region
  $region34: #{ghostnet_forward.3} parent=0 // pred_check
    _
  $region35: #{ghostnet_forward.3} parent=0 // pred_check_branch
    %36 = sbr.rel (0) target = $region37
  $region36: #{ghostnet_forward.3} parent=0 // pred_region
    _
  $region37: #{ghostnet_forward.3} parent=0 // pred_fallthru
    _
  // Predicated region
  $region38: #{ghostnet_forward.3} parent=0 // pred_check
    _
  $region39: #{ghostnet_forward.3} parent=0 // pred_check_branch
    %38 = sbr.rel (0) target = $region41
  $region40: #{ghostnet_forward.3} parent=0 // pred_region
    _
  $region41: #{ghostnet_forward.3} parent=0 // pred_fallthru
    _
  // Predicated region
  $region42: #{ghostnet_forward.3} parent=0 // pred_check
    _
  $region43: #{ghostnet_forward.3} parent=0 // pred_check_branch
    %40 = sbr.rel (0) target = $region45
  $region44: #{ghostnet_forward.3} parent=0 // pred_region
    _
  $region45: #{ghostnet_forward.3} parent=0 // pred_fallthru
    _
  // Predicated region
  $region46: #{ghostnet_forward.3} parent=0 // pred_check
    _
  $region47: #{ghostnet_forward.3} parent=0 // pred_check_branch
    %42 = sbr.rel (0) target = $region49
  $region48: #{ghostnet_forward.3} parent=0 // pred_region
    _
  $region49: #{ghostnet_forward.3} parent=0 // pred_fallthru
    _
  // Predicated region
  $region50: #{ghostnet_forward.3} parent=0 // pred_check
    _
  $region51: #{ghostnet_forward.3} parent=0 // pred_check_branch
    %44 = sbr.rel (0) target = $region53
  $region52: #{ghostnet_forward.3} parent=0 // pred_region
    _
  $region53: #{ghostnet_forward.3} parent=0 // pred_fallthru
    _
  // Predicated region
  $region54: #{ghostnet_forward.3} parent=0 // pred_check
    _
  $region55: #{ghostnet_forward.3} parent=0 // pred_check_branch
    %46 = sbr.rel (0) target = $region57
  $region56: #{ghostnet_forward.3} parent=0 // pred_region
    _
  $region57: #{ghostnet_forward.3} parent=0 // pred_fallthru
    _
  %v48 = vld [vmem:[%s0] sm:$0xff]
  %v49 = vld [vmem:[%s0 + $0x8] sm:$0xff]
  %v50 = vld [vmem:[%s0 + $0x10] sm:$0xff]
  %v51 = vld [vmem:[%s0 + $0x18] sm:$0xff]
  %v52 = vld [vmem:[%s0 + $0x20] sm:$0xff]
  %v53 = vld [vmem:[%s0 + $0x28] sm:$0xff]
  %v54 = vld [vmem:[%s0 + $0x30] sm:$0xff]
  %v55 = vld [vmem:[%s0 + $0x38] sm:$0xff]
  %v56 = vld [vmem:[%s0 + $0x40] sm:$0x11]
  %v57 = vld [vmem:[%s0 + $0x48] sm:$0x11]
  %v58 = vld [vmem:[%s0 + $0x50] sm:$0x11]
  %v59 = vld [vmem:[%s0 + $0x58] sm:$0x11]
  %v60 = vld [vmem:[%s2] sm:$0xf]
  %v61 = vld [vmem:[%s2 + $0x4] sm:$0xf]
  %v62 = vld [vmem:[%s2 + $0x8] sm:$0xf]
  %v63 = vld [vmem:[%s2 + $0xc] sm:$0xf]
  %v64 = vld [vmem:[%s2 + $0x10] sm:$0xf]
  %v65 = vld [vmem:[%s2 + $0x14] sm:$0xf]
  %v66 = vld [vmem:[%s2 + $0x18] sm:$0xf]
  %v67 = vld [vmem:[%s2 + $0x1c] sm:$0xf]
  %v68 = vld [vmem:[%s2 + $0x20] sm:$0xf]
  %v69 = vld [vmem:[%s2 + $0x24] sm:$0xf]
  %v70 = vld [vmem:[%s2 + $0x28] sm:$0xf]
  %v71 = vld [vmem:[%s2 + $0x2c] sm:$0xf]
  %v72 = vld [vmem:[%s2 + $0x30] sm:$0xf]
  %v73 = vld [vmem:[%s2 + $0x34] sm:$0xf]
  %v74 = vld [vmem:[%s2 + $0x38] sm:$0xf]
  %v75 = vld [vmem:[%s2 + $0x3c] sm:$0xf]
  %v76 = vld [vmem:[%s2 + $0x40] sm:$0xf]
  %v77 = vld [vmem:[%s2 + $0x44] sm:$0xf]
  %v78 = vld [vmem:[%s2 + $0x48] sm:$0xf]
  %v79 = vld [vmem:[%s2 + $0x4c] sm:$0xf]
  %v80 = vld [vmem:[%s2 + $0x50] sm:$0xf]
  %v81 = vld [vmem:[%s2 + $0x54] sm:$0xf]
  %v82 = vld [vmem:[%s2 + $0x58] sm:$0xf]
  %v83 = vld [vmem:[%s2 + $0x5c] sm:$0xf]
  %v84 = vld [vmem:[%s2 + $0x60] sm:$0xf]
  %v85 = vld [vmem:[%s2 + $0x64] sm:$0xf]
  %v86 = vld [vmem:[%s2 + $0x68] sm:$0xf]
  %v87 = vld [vmem:[%s2 + $0x6c] sm:$0xf]
  %v88 = vld [vmem:[%s2 + $0x70] sm:$0xf]
  %v89 = vld [vmem:[%s2 + $0x74] sm:$0xf]
  %v90 = vld [vmem:[%s2 + $0x78] sm:$0xf]
  %v91 = vld [vmem:[%s2 + $0x7c] sm:$0xf]
  %v92 = vld [vmem:[%s2 + $0x80] sm:$0xf]
  %v93 = vld [vmem:[%s2 + $0x84] sm:$0xf]
  %v94 = vld [vmem:[%s2 + $0x88] sm:$0xf]
  %v95 = vld [vmem:[%s2 + $0x8c] sm:$0xf]
  %v96 = vld [vmem:[%s2 + $0x90] sm:$0xf]
  %v97 = vld [vmem:[%s2 + $0x94] sm:$0xf]
  %v98 = vld [vmem:[%s2 + $0x98] sm:$0xf]
  %v99 = vld [vmem:[%s2 + $0x9c] sm:$0xf]
  %v100 = vld [vmem:[%s2 + $0xa0] sm:$0xf]
  %v101 = vld [vmem:[%s2 + $0xa4] sm:$0xf]
  %v102 = vld [vmem:[%s2 + $0xa8] sm:$0xf]
  %v103 = vld [vmem:[%s2 + $0xac] sm:$0xf]
  %v104 = vld [vmem:[%s2 + $0xb0] sm:$0xf]
  %v105 = vld [vmem:[%s2 + $0xb4] sm:$0xf]
  %v106 = vld [vmem:[%s2 + $0xb8] sm:$0xf]
  %v107 = vld [vmem:[%s2 + $0xbc] sm:$0xf]
  %v108 = vld [vmem:[%s2 + $0xc0] sm:$0xf]
  %v109 = vld [vmem:[%s2 + $0xc4] sm:$0xf]
  %v110 = vld [vmem:[%s2 + $0xc8] sm:$0xf]
  %v111 = vld [vmem:[%s2 + $0xcc] sm:$0xf]
  %v112 = vld [vmem:[%s2 + $0xd0] sm:$0xf]
  %v113 = vld [vmem:[%s2 + $0xd4] sm:$0xf]
  %v114 = vld [vmem:[%s2 + $0xd8] sm:$0xf]
  %v115 = vld [vmem:[%s2 + $0xdc] sm:$0xf]
  %v116 = vld [vmem:[%s2 + $0xe0] sm:$0xf]
  %v117 = vld [vmem:[%s2 + $0xe4] sm:$0xf]
  %v118 = vld [vmem:[%s2 + $0xe8] sm:$0xf]
  %v119 = vld [vmem:[%s2 + $0xec] sm:$0xf]
  %v120 = vld [vmem:[%s2 + $0xf0] sm:$0xf]
  %v121 = vld [vmem:[%s2 + $0xf4] sm:$0xf]
  %v122 = vld [vmem:[%s2 + $0xf8] sm:$0xf]
  %v123 = vld [vmem:[%s2 + $0xfc] sm:$0xf]
  %v124 = vld [vmem:[%s2 + $0x100] sm:$0xf]
  %v125 = vld [vmem:[%s2 + $0x104] sm:$0xf]
  %v126 = vld [vmem:[%s2 + $0x108] sm:$0xf]
  %v127 = vld [vmem:[%s2 + $0x10c] sm:$0xf]
  %v128 = vld [vmem:[%s2 + $0x110] sm:$0xf]
  %v129 = vld [vmem:[%s2 + $0x114] sm:$0xf]
  %v130 = vld [vmem:[%s2 + $0x118] sm:$0xf]
  %v131 = vld [vmem:[%s2 + $0x11c] sm:$0xf]
  %v132 = vld [vmem:[%s2 + $0x120] sm:$0xf]
  %v133 = vld [vmem:[%s2 + $0x124] sm:$0xf]
  %v134 = vld [vmem:[%s2 + $0x128] sm:$0xf]
  %v135 = vld [vmem:[%s2 + $0x12c] sm:$0xf]
  %v136 = vld [vmem:[%s2 + $0x130] sm:$0xf]
  %v137 = vld [vmem:[%s2 + $0x134] sm:$0xf]
  %v138 = vld [vmem:[%s2 + $0x138] sm:$0xf]
  %v139 = vld [vmem:[%s2 + $0x13c] sm:$0xf]
  %v140 = vld [vmem:[%s2 + $0x140] sm:$0xf]
  %v141 = vld [vmem:[%s2 + $0x144] sm:$0xf]
  %v142 = vld [vmem:[%s2 + $0x148] sm:$0xf]
  %v143 = vld [vmem:[%s2 + $0x14c] sm:$0xf]
  %v144 = vld [vmem:[%s2 + $0x150] sm:$0xf]
  %v145 = vld [vmem:[%s2 + $0x154] sm:$0xf]
  %v146 = vld [vmem:[%s2 + $0x158] sm:$0xf]
  %v147 = vld [vmem:[%s2 + $0x15c] sm:$0xf]
  %v148 = vld [vmem:[%s2 + $0x160] sm:$0xf]
  %v149 = vld [vmem:[%s2 + $0x164] sm:$0xf]
  %v150 = vld [vmem:[%s2 + $0x168] sm:$0xf]
  %v151 = vld [vmem:[%s2 + $0x16c] sm:$0xf]
  %v152 = vld [vmem:[%s2 + $0x170] sm:$0xf]
  %v153 = vld [vmem:[%s2 + $0x174] sm:$0xf]
  %v154 = vld [vmem:[%s2 + $0x178] sm:$0xf]
  %v155 = vld [vmem:[%s2 + $0x17c] sm:$0xf]
  %v156 = vld [vmem:[%s2 + $0x180] sm:$0xf]
  %v157 = vld [vmem:[%s2 + $0x184] sm:$0xf]
  %v158 = vld [vmem:[%s2 + $0x188] sm:$0xf]
  %v159 = vld [vmem:[%s2 + $0x18c] sm:$0xf]
  %v160 = vld [vmem:[%s2 + $0x190] sm:$0xf]
  %v161 = vld [vmem:[%s2 + $0x194] sm:$0xf]
  %v162 = vld [vmem:[%s2 + $0x198] sm:$0xf]
  %v163 = vld [vmem:[%s2 + $0x19c] sm:$0xf]
  %v164 = vld [vmem:[%s2 + $0x1a0] sm:$0xf]
  %v165 = vld [vmem:[%s2 + $0x1a4] sm:$0xf]
  %v166 = vld [vmem:[%s2 + $0x1a8] sm:$0xf]
  %v167 = vld [vmem:[%s2 + $0x1ac] sm:$0xf]
  %v168 = vld [vmem:[%s2 + $0x1b0] sm:$0xf]
  %v169 = vld [vmem:[%s2 + $0x1b4] sm:$0xf]
  %v170 = vld [vmem:[%s2 + $0x1b8] sm:$0xf]
  %v171 = vld [vmem:[%s2 + $0x1bc] sm:$0xf]
  %v172 = vld [vmem:[%s2 + $0x1c0] sm:$0xf]
  %v173 = vld [vmem:[%s2 + $0x1c4] sm:$0xf]
  %v174 = vld [vmem:[%s2 + $0x1c8] sm:$0xf]
  %v175 = vld [vmem:[%s2 + $0x1cc] sm:$0xf]
  %v176 = vld [vmem:[%s2 + $0x1d0] sm:$0xf]
  %v177 = vld [vmem:[%s2 + $0x1d4] sm:$0xf]
  %v178 = vld [vmem:[%s2 + $0x1d8] sm:$0xf]
  %v179 = vld [vmem:[%s2 + $0x1dc] sm:$0xf]
  %v180 = vld [vmem:[%s2 + $0x1e0] sm:$0xf]
  %v181 = vld [vmem:[%s2 + $0x1e4] sm:$0xf]
  %v182 = vld [vmem:[%s2 + $0x1e8] sm:$0xf]
  %v183 = vld [vmem:[%s2 + $0x1ec] sm:$0xf]
  %v184 = vld [vmem:[%s2 + $0x1f0] sm:$0xf]
  %v185 = vld [vmem:[%s2 + $0x1f4] sm:$0xf]
  %v186 = vld [vmem:[%s2 + $0x1f8] sm:$0xf]
  %v187 = vld [vmem:[%s2 + $0x1fc] sm:$0xf]
  %v188 = vld [vmem:[%s3] sm:$0x1]
  %v190 = vlaneseq
  %v191 = vshrl.u32 %v190, 7
  %v192 = vsub.s32 0, %v191
  %v193 = vrot.slane %v188, %v192
  %v207 = vunpack.c.l.b16 %v48
  %v208 = vunpack.c.h.b16 %v48
  %v209 = vunpack.c.l.b16 %v49
  %v210 = vunpack.c.h.b16 %v49
  %v211 = vunpack.c.l.b16 %v50
  %v212 = vunpack.c.h.b16 %v50
  %v213 = vunpack.c.l.b16 %v51
  %v214 = vunpack.c.h.b16 %v51
  %v215 = vunpack.c.l.b16 %v52
  %v216 = vunpack.c.h.b16 %v52
  %v217 = vunpack.c.l.b16 %v53
  %v218 = vunpack.c.h.b16 %v53
  %v219 = vunpack.c.l.b16 %v54
  %v220 = vunpack.c.h.b16 %v54
  %v221 = vunpack.c.l.b16 %v55
  %v222 = vunpack.c.h.b16 %v55
  %v223 = vunpack.c.l.b16 %v56
  %v224 = vunpack.c.h.b16 %v56
  %v225 = vunpack.c.l.b16 %v57
  %v226 = vunpack.c.h.b16 %v57
  %v227 = vunpack.c.l.b16 %v58
  %v228 = vunpack.c.h.b16 %v58
  %v229 = vunpack.c.l.b16 %v59
  %v230 = vunpack.c.h.b16 %v59
  %v231 = vpack.c.b16 %v215, %v207
  %v232 = vpack.c.b16 %v216, %v208
  %v233 = vpack.c.b16 %v217, %v209
  %v234 = vpack.c.b16 %v218, %v210
  %v235 = vpack.c.b16 %v219, %v211
  %v236 = vpack.c.b16 %v220, %v212
  %v237 = vpack.c.b16 %v221, %v213
  %v238 = vpack.c.b16 %v222, %v214
  %v239 = vpack.c.b16 %v223, %v223
  %v240 = vpack.c.b16 %v224, %v224
  %v241 = vpack.c.b16 %v225, %v225
  %v242 = vpack.c.b16 %v226, %v226
  %v243 = vpack.c.b16 %v227, %v227
  %v244 = vpack.c.b16 %v228, %v228
  %v245 = vpack.c.b16 %v229, %v229
  %v246 = vpack.c.b16 %v230, %v230
  %v391 = vunpack.c.l.b16 %v60
  %v392 = vunpack.c.l.b16 %v61
  %v393 = vunpack.c.l.b16 %v62
  %v394 = vunpack.c.l.b16 %v63
  %v395 = vunpack.c.l.b16 %v64
  %v396 = vunpack.c.l.b16 %v65
  %v397 = vunpack.c.l.b16 %v66
  %v398 = vunpack.c.l.b16 %v67
  %v399 = vunpack.c.l.b16 %v68
  %v400 = vunpack.c.l.b16 %v69
  %v401 = vunpack.c.l.b16 %v70
  %v402 = vunpack.c.l.b16 %v71
  %v403 = vunpack.c.l.b16 %v72
  %v404 = vunpack.c.l.b16 %v73
  %v405 = vunpack.c.l.b16 %v74
  %v406 = vunpack.c.l.b16 %v75
  %v407 = vunpack.c.l.b16 %v76
  %v408 = vunpack.c.l.b16 %v77
  %v409 = vunpack.c.l.b16 %v78
  %v410 = vunpack.c.l.b16 %v79
  %v411 = vunpack.c.l.b16 %v80
  %v412 = vunpack.c.l.b16 %v81
  %v413 = vunpack.c.l.b16 %v82
  %v414 = vunpack.c.l.b16 %v83
  %v415 = vunpack.c.l.b16 %v84
  %v416 = vunpack.c.l.b16 %v85
  %v417 = vunpack.c.l.b16 %v86
  %v418 = vunpack.c.l.b16 %v87
  %v419 = vunpack.c.l.b16 %v88
  %v420 = vunpack.c.l.b16 %v89
  %v421 = vunpack.c.l.b16 %v90
  %v422 = vunpack.c.l.b16 %v91
  %v423 = vunpack.c.l.b16 %v92
  %v424 = vunpack.c.l.b16 %v93
  %v425 = vunpack.c.l.b16 %v94
  %v426 = vunpack.c.l.b16 %v95
  %v427 = vunpack.c.l.b16 %v96
  %v428 = vunpack.c.l.b16 %v97
  %v429 = vunpack.c.l.b16 %v98
  %v430 = vunpack.c.l.b16 %v99
  %v431 = vunpack.c.l.b16 %v100
  %v432 = vunpack.c.l.b16 %v101
  %v433 = vunpack.c.l.b16 %v102
  %v434 = vunpack.c.l.b16 %v103
  %v435 = vunpack.c.l.b16 %v104
  %v436 = vunpack.c.l.b16 %v105
  %v437 = vunpack.c.l.b16 %v106
  %v438 = vunpack.c.l.b16 %v107
  %v439 = vunpack.c.l.b16 %v108
  %v440 = vunpack.c.l.b16 %v109
  %v441 = vunpack.c.l.b16 %v110
  %v442 = vunpack.c.l.b16 %v111
  %v443 = vunpack.c.l.b16 %v112
  %v444 = vunpack.c.l.b16 %v113
  %v445 = vunpack.c.l.b16 %v114
  %v446 = vunpack.c.l.b16 %v115
  %v447 = vunpack.c.l.b16 %v116
  %v448 = vunpack.c.l.b16 %v117
  %v449 = vunpack.c.l.b16 %v118
  %v450 = vunpack.c.l.b16 %v119
  %v451 = vunpack.c.l.b16 %v120
  %v452 = vunpack.c.l.b16 %v121
  %v453 = vunpack.c.l.b16 %v122
  %v454 = vunpack.c.l.b16 %v123
  %v455 = vunpack.c.l.b16 %v124
  %v456 = vunpack.c.l.b16 %v125
  %v457 = vunpack.c.l.b16 %v126
  %v458 = vunpack.c.l.b16 %v127
  %v459 = vunpack.c.l.b16 %v128
  %v460 = vunpack.c.l.b16 %v129
  %v461 = vunpack.c.l.b16 %v130
  %v462 = vunpack.c.l.b16 %v131
  %v463 = vunpack.c.l.b16 %v132
  %v464 = vunpack.c.l.b16 %v133
  %v465 = vunpack.c.l.b16 %v134
  %v466 = vunpack.c.l.b16 %v135
  %v467 = vunpack.c.l.b16 %v136
  %v468 = vunpack.c.l.b16 %v137
  %v469 = vunpack.c.l.b16 %v138
  %v470 = vunpack.c.l.b16 %v139
  %v471 = vunpack.c.l.b16 %v140
  %v472 = vunpack.c.l.b16 %v141
  %v473 = vunpack.c.l.b16 %v142
  %v474 = vunpack.c.l.b16 %v143
  %v475 = vunpack.c.l.b16 %v144
  %v476 = vunpack.c.l.b16 %v145
  %v477 = vunpack.c.l.b16 %v146
  %v478 = vunpack.c.l.b16 %v147
  %v479 = vunpack.c.l.b16 %v148
  %v480 = vunpack.c.l.b16 %v149
  %v481 = vunpack.c.l.b16 %v150
  %v482 = vunpack.c.l.b16 %v151
  %v483 = vunpack.c.l.b16 %v152
  %v484 = vunpack.c.l.b16 %v153
  %v485 = vunpack.c.l.b16 %v154
  %v486 = vunpack.c.l.b16 %v155
  %v487 = vunpack.c.l.b16 %v156
  %v488 = vunpack.c.l.b16 %v157
  %v489 = vunpack.c.l.b16 %v158
  %v490 = vunpack.c.l.b16 %v159
  %v491 = vunpack.c.l.b16 %v160
  %v492 = vunpack.c.l.b16 %v161
  %v493 = vunpack.c.l.b16 %v162
  %v494 = vunpack.c.l.b16 %v163
  %v495 = vunpack.c.l.b16 %v164
  %v496 = vunpack.c.l.b16 %v165
  %v497 = vunpack.c.l.b16 %v166
  %v498 = vunpack.c.l.b16 %v167
  %v499 = vunpack.c.l.b16 %v168
  %v500 = vunpack.c.l.b16 %v169
  %v501 = vunpack.c.l.b16 %v170
  %v502 = vunpack.c.l.b16 %v171
  %v503 = vunpack.c.l.b16 %v172
  %v504 = vunpack.c.l.b16 %v173
  %v505 = vunpack.c.l.b16 %v174
  %v506 = vunpack.c.l.b16 %v175
  %v507 = vunpack.c.l.b16 %v176
  %v508 = vunpack.c.l.b16 %v177
  %v509 = vunpack.c.l.b16 %v178
  %v510 = vunpack.c.l.b16 %v179
  %v511 = vunpack.c.l.b16 %v180
  %v512 = vunpack.c.l.b16 %v181
  %v513 = vunpack.c.l.b16 %v182
  %v514 = vunpack.c.l.b16 %v183
  %v515 = vunpack.c.l.b16 %v184
  %v516 = vunpack.c.l.b16 %v185
  %v517 = vunpack.c.l.b16 %v186
  %v518 = vunpack.c.l.b16 %v187
  %v519 = vpack.c.b16 %v392, %v391
  %v520 = vpack.c.b16 %v394, %v393
  %v521 = vpack.c.b16 %v396, %v395
  %v522 = vpack.c.b16 %v398, %v397
  %v523 = vpack.c.b16 %v400, %v399
  %v524 = vpack.c.b16 %v402, %v401
  %v525 = vpack.c.b16 %v404, %v403
  %v526 = vpack.c.b16 %v406, %v405
  %v527 = vpack.c.b16 %v408, %v407
  %v528 = vpack.c.b16 %v410, %v409
  %v529 = vpack.c.b16 %v412, %v411
  %v530 = vpack.c.b16 %v414, %v413
  %v531 = vpack.c.b16 %v416, %v415
  %v532 = vpack.c.b16 %v418, %v417
  %v533 = vpack.c.b16 %v420, %v419
  %v534 = vpack.c.b16 %v422, %v421
  %v535 = vpack.c.b16 %v424, %v423
  %v536 = vpack.c.b16 %v426, %v425
  %v537 = vpack.c.b16 %v428, %v427
  %v538 = vpack.c.b16 %v430, %v429
  %v539 = vpack.c.b16 %v432, %v431
  %v540 = vpack.c.b16 %v434, %v433
  %v541 = vpack.c.b16 %v436, %v435
  %v542 = vpack.c.b16 %v438, %v437
  %v543 = vpack.c.b16 %v440, %v439
  %v544 = vpack.c.b16 %v442, %v441
  %v545 = vpack.c.b16 %v444, %v443
  %v546 = vpack.c.b16 %v446, %v445
  %v547 = vpack.c.b16 %v448, %v447
  %v548 = vpack.c.b16 %v450, %v449
  %v549 = vpack.c.b16 %v452, %v451
  %v550 = vpack.c.b16 %v454, %v453
  %v551 = vpack.c.b16 %v456, %v455
  %v552 = vpack.c.b16 %v458, %v457
  %v553 = vpack.c.b16 %v460, %v459
  %v554 = vpack.c.b16 %v462, %v461
  %v555 = vpack.c.b16 %v464, %v463
  %v556 = vpack.c.b16 %v466, %v465
  %v557 = vpack.c.b16 %v468, %v467
  %v558 = vpack.c.b16 %v470, %v469
  %v559 = vpack.c.b16 %v472, %v471
  %v560 = vpack.c.b16 %v474, %v473
  %v561 = vpack.c.b16 %v476, %v475
  %v562 = vpack.c.b16 %v478, %v477
  %v563 = vpack.c.b16 %v480, %v479
  %v564 = vpack.c.b16 %v482, %v481
  %v565 = vpack.c.b16 %v484, %v483
  %v566 = vpack.c.b16 %v486, %v485
  %v567 = vpack.c.b16 %v488, %v487
  %v568 = vpack.c.b16 %v490, %v489
  %v569 = vpack.c.b16 %v492, %v491
  %v570 = vpack.c.b16 %v494, %v493
  %v571 = vpack.c.b16 %v496, %v495
  %v572 = vpack.c.b16 %v498, %v497
  %v573 = vpack.c.b16 %v500, %v499
  %v574 = vpack.c.b16 %v502, %v501
  %v575 = vpack.c.b16 %v504, %v503
  %v576 = vpack.c.b16 %v506, %v505
  %v577 = vpack.c.b16 %v508, %v507
  %v578 = vpack.c.b16 %v510, %v509
  %v579 = vpack.c.b16 %v512, %v511
  %v580 = vpack.c.b16 %v514, %v513
  %v581 = vpack.c.b16 %v516, %v515
  %v582 = vpack.c.b16 %v518, %v517
  %647 = vmatprep.subr.bf16.mxu0 0
  %648 = vmatpush1.bf16.msra.mxu0 %v519
  %649 = vmatprep.subr.bf16.mxu0 0
  %650 = vmatpush1.bf16.msra.mxu0 %v520
  %651 = vmatprep.subr.bf16.mxu0 0
  %652 = vmatpush1.bf16.msra.mxu0 %v521
  %653 = vmatprep.subr.bf16.mxu0 0
  %654 = vmatpush1.bf16.msra.mxu0 %v522
  %655 = vmatprep.subr.bf16.mxu0 0
  %656 = vmatpush1.bf16.msra.mxu0 %v523
  %657 = vmatprep.subr.bf16.mxu0 0
  %658 = vmatpush1.bf16.msra.mxu0 %v524
  %659 = vmatprep.subr.bf16.mxu0 0
  %660 = vmatpush1.bf16.msra.mxu0 %v525
  %661 = vmatprep.subr.bf16.mxu0 0
  %662 = vmatpush1.bf16.msra.mxu0 %v526
  %663 = vmatprep.subr.bf16.mxu0 0
  %664 = vmatpush1.bf16.msra.mxu0 %v527
  %665 = vmatprep.subr.bf16.mxu0 0
  %666 = vmatpush1.bf16.msra.mxu0 %v528
  %667 = vmatprep.subr.bf16.mxu0 0
  %668 = vmatpush1.bf16.msra.mxu0 %v529
  %669 = vmatprep.subr.bf16.mxu0 0
  %670 = vmatpush1.bf16.msra.mxu0 %v530
  %671 = vmatprep.subr.bf16.mxu0 0
  %672 = vmatpush1.bf16.msra.mxu0 %v531
  %673 = vmatprep.subr.bf16.mxu0 0
  %674 = vmatpush1.bf16.msra.mxu0 %v532
  %675 = vmatprep.subr.bf16.mxu0 0
  %676 = vmatpush1.bf16.msra.mxu0 %v533
  %677 = vmatprep.subr.bf16.mxu0 0
  %678 = vmatpush1.bf16.msra.mxu0 %v534
  %679 = vmatprep.mubr.bf16.mxu0 %v232
  %680 = vmatmul.mubr.bf16.gmra.mrb[0].mxu0 %v231
  %v681 = vpop.f32.mrb[0].mxu0
  %v682 = vadd.f32 %v193, %v681
  %v683 = vpop.f32.mrb[0].mxu0
  %v684 = vpop.f32.mrb[0].mxu0
  %v685 = vadd.f32 %v193, %v684
  %v686 = vpop.f32.mrb[0].mxu0
  %687 = vmatprep.mubr.bf16.mxu0 %v240
  %688 = vmatmul.mubr.bf16.gmra.mrb[0].mxu0 %v239
  %v689 = vpop.f32.mrb[0].mxu0
  %v690 = vadd.f32 %v193, %v689
  %v691 = vpop.f32.mrb[0].mxu0
  %v692 = vpop.f32.mrb[0].mxu0
  %v693 = vpop.f32.mrb[0].mxu0
  %694 = vdwg.mxu0
  %695 = vmatprep.subr.bf16.mxu0 0
  %696 = vmatpush1.bf16.msra.mxu0 %v535
  %697 = vmatprep.subr.bf16.mxu0 0
  %698 = vmatpush1.bf16.msra.mxu0 %v536
  %699 = vmatprep.subr.bf16.mxu0 0
  %700 = vmatpush1.bf16.msra.mxu0 %v537
  %701 = vmatprep.subr.bf16.mxu0 0
  %702 = vmatpush1.bf16.msra.mxu0 %v538
  %703 = vmatprep.subr.bf16.mxu0 0
  %704 = vmatpush1.bf16.msra.mxu0 %v539
  %705 = vmatprep.subr.bf16.mxu0 0
  %706 = vmatpush1.bf16.msra.mxu0 %v540
  %707 = vmatprep.subr.bf16.mxu0 0
  %708 = vmatpush1.bf16.msra.mxu0 %v541
  %709 = vmatprep.subr.bf16.mxu0 0
  %710 = vmatpush1.bf16.msra.mxu0 %v542
  %711 = vmatprep.subr.bf16.mxu0 0
  %712 = vmatpush1.bf16.msra.mxu0 %v543
  %713 = vmatprep.subr.bf16.mxu0 0
  %714 = vmatpush1.bf16.msra.mxu0 %v544
  %715 = vmatprep.subr.bf16.mxu0 0
  %716 = vmatpush1.bf16.msra.mxu0 %v545
  %717 = vmatprep.subr.bf16.mxu0 0
  %718 = vmatpush1.bf16.msra.mxu0 %v546
  %719 = vmatprep.subr.bf16.mxu0 0
  %720 = vmatpush1.bf16.msra.mxu0 %v547
  %721 = vmatprep.subr.bf16.mxu0 0
  %722 = vmatpush1.bf16.msra.mxu0 %v548
  %723 = vmatprep.subr.bf16.mxu0 0
  %724 = vmatpush1.bf16.msra.mxu0 %v549
  %725 = vmatprep.subr.bf16.mxu0 0
  %726 = vmatpush1.bf16.msra.mxu0 %v550
  %727 = vmatprep.mubr.bf16.mxu0 %v234
  %728 = vmatmul.mubr.bf16.gmra.mrb[0].mxu0 %v233
  %v729 = vpop.f32.mrb[0].mxu0
  %v730 = vadd.f32 %v682, %v729
  %v731 = vpop.f32.mrb[0].mxu0
  %v732 = vpop.f32.mrb[0].mxu0
  %v733 = vadd.f32 %v685, %v732
  %v734 = vpop.f32.mrb[0].mxu0
  %735 = vmatprep.mubr.bf16.mxu0 %v242
  %736 = vmatmul.mubr.bf16.gmra.mrb[0].mxu0 %v241
  %v737 = vpop.f32.mrb[0].mxu0
  %v738 = vadd.f32 %v690, %v737
  %v739 = vpop.f32.mrb[0].mxu0
  %v740 = vpop.f32.mrb[0].mxu0
  %v741 = vpop.f32.mrb[0].mxu0
  %742 = vdwg.mxu0
  %743 = vmatprep.subr.bf16.mxu0 0
  %744 = vmatpush1.bf16.msra.mxu0 %v551
  %745 = vmatprep.subr.bf16.mxu0 0
  %746 = vmatpush1.bf16.msra.mxu0 %v552
  %747 = vmatprep.subr.bf16.mxu0 0
  %748 = vmatpush1.bf16.msra.mxu0 %v553
  %749 = vmatprep.subr.bf16.mxu0 0
  %750 = vmatpush1.bf16.msra.mxu0 %v554
  %751 = vmatprep.subr.bf16.mxu0 0
  %752 = vmatpush1.bf16.msra.mxu0 %v555
  %753 = vmatprep.subr.bf16.mxu0 0
  %754 = vmatpush1.bf16.msra.mxu0 %v556
  %755 = vmatprep.subr.bf16.mxu0 0
  %756 = vmatpush1.bf16.msra.mxu0 %v557
  %757 = vmatprep.subr.bf16.mxu0 0
  %758 = vmatpush1.bf16.msra.mxu0 %v558
  %759 = vmatprep.subr.bf16.mxu0 0
  %760 = vmatpush1.bf16.msra.mxu0 %v559
  %761 = vmatprep.subr.bf16.mxu0 0
  %762 = vmatpush1.bf16.msra.mxu0 %v560
  %763 = vmatprep.subr.bf16.mxu0 0
  %764 = vmatpush1.bf16.msra.mxu0 %v561
  %765 = vmatprep.subr.bf16.mxu0 0
  %766 = vmatpush1.bf16.msra.mxu0 %v562
  %767 = vmatprep.subr.bf16.mxu0 0
  %768 = vmatpush1.bf16.msra.mxu0 %v563
  %769 = vmatprep.subr.bf16.mxu0 0
  %770 = vmatpush1.bf16.msra.mxu0 %v564
  %771 = vmatprep.subr.bf16.mxu0 0
  %772 = vmatpush1.bf16.msra.mxu0 %v565
  %773 = vmatprep.subr.bf16.mxu0 0
  %774 = vmatpush1.bf16.msra.mxu0 %v566
  %775 = vmatprep.mubr.bf16.mxu0 %v236
  %776 = vmatmul.mubr.bf16.gmra.mrb[0].mxu0 %v235
  %v777 = vpop.f32.mrb[0].mxu0
  %v778 = vadd.f32 %v730, %v777
  %v779 = vpop.f32.mrb[0].mxu0
  %v780 = vpop.f32.mrb[0].mxu0
  %v781 = vadd.f32 %v733, %v780
  %v782 = vpop.f32.mrb[0].mxu0
  %783 = vmatprep.mubr.bf16.mxu0 %v244
  %784 = vmatmul.mubr.bf16.gmra.mrb[0].mxu0 %v243
  %v785 = vpop.f32.mrb[0].mxu0
  %v786 = vadd.f32 %v738, %v785
  %v787 = vpop.f32.mrb[0].mxu0
  %v788 = vpop.f32.mrb[0].mxu0
  %v789 = vpop.f32.mrb[0].mxu0
  %790 = vdwg.mxu0
  %791 = vmatprep.subr.bf16.mxu0 0
  %792 = vmatpush1.bf16.msra.mxu0 %v567
  %793 = vmatprep.subr.bf16.mxu0 0
  %794 = vmatpush1.bf16.msra.mxu0 %v568
  %795 = vmatprep.subr.bf16.mxu0 0
  %796 = vmatpush1.bf16.msra.mxu0 %v569
  %797 = vmatprep.subr.bf16.mxu0 0
  %798 = vmatpush1.bf16.msra.mxu0 %v570
  %799 = vmatprep.subr.bf16.mxu0 0
  %800 = vmatpush1.bf16.msra.mxu0 %v571
  %801 = vmatprep.subr.bf16.mxu0 0
  %802 = vmatpush1.bf16.msra.mxu0 %v572
  %803 = vmatprep.subr.bf16.mxu0 0
  %804 = vmatpush1.bf16.msra.mxu0 %v573
  %805 = vmatprep.subr.bf16.mxu0 0
  %806 = vmatpush1.bf16.msra.mxu0 %v574
  %807 = vmatprep.subr.bf16.mxu0 0
  %808 = vmatpush1.bf16.msra.mxu0 %v575
  %809 = vmatprep.subr.bf16.mxu0 0
  %810 = vmatpush1.bf16.msra.mxu0 %v576
  %811 = vmatprep.subr.bf16.mxu0 0
  %812 = vmatpush1.bf16.msra.mxu0 %v577
  %813 = vmatprep.subr.bf16.mxu0 0
  %814 = vmatpush1.bf16.msra.mxu0 %v578
  %815 = vmatprep.subr.bf16.mxu0 0
  %816 = vmatpush1.bf16.msra.mxu0 %v579
  %817 = vmatprep.subr.bf16.mxu0 0
  %818 = vmatpush1.bf16.msra.mxu0 %v580
  %819 = vmatprep.subr.bf16.mxu0 0
  %820 = vmatpush1.bf16.msra.mxu0 %v581
  %821 = vmatprep.subr.bf16.mxu0 0
  %822 = vmatpush1.bf16.msra.mxu0 %v582
  %823 = vmatprep.mubr.bf16.mxu0 %v238
  %824 = vmatmul.mubr.bf16.gmra.mrb[0].mxu0 %v237
  %v825 = vpop.f32.mrb[0].mxu0
  %v826 = vadd.f32 %v778, %v825
  %v827 = vpop.f32.mrb[0].mxu0
  %v828 = vpop.f32.mrb[0].mxu0
  %v829 = vadd.f32 %v781, %v828
  %v830 = vpop.f32.mrb[0].mxu0
  %831 = vmatprep.mubr.bf16.mxu0 %v246
  %832 = vmatmul.mubr.bf16.gmra.mrb[0].mxu0 %v245
  %v833 = vpop.f32.mrb[0].mxu0
  %v834 = vadd.f32 %v786, %v833
  %v835 = vpop.f32.mrb[0].mxu0
  %v836 = vpop.f32.mrb[0].mxu0
  %v837 = vpop.f32.mrb[0].mxu0
  %838 = vdwg.mxu0
  %v839 = vmax.f32 %v826, 0.0
  %v840 = vmax.f32 %v829, 0.0
  %v841 = vmax.f32 %v834, 0.0
  %vm842 = vcmask 523264
  %v843 = vsel %vm842, %v839, 0.0
  %v844 = vsel %vm842, %v840, 0.0
  %v845 = vadd.f32 %v843, %v844
  %vm846 = vcmask 517120
  %v847 = vsel %vm846, %v841, 0.0
  %v848 = vadd.f32 %v845, %v847
  %v849 = vrot.slane %v848, 4
  %v850 = vadd.f32 %v848, %v849
  %v851 = vrot.slane %v850, 2
  %v852 = vadd.f32 %v850, %v851
  %v853 = vrot.slane %v852, 1
  %v854 = vadd.f32 %v852, %v853
  %v855 = vrcp.pop 18.0
  %v856 = vmul.f32 %v854, %v855
  %v857 = vsub.f32 %v839, %v856
  %v858 = vsub.f32 %v840, %v856
  %v859 = vsub.f32 %v841, %v856
  %v860 = vmul.f32 %v857, %v857
  %v861 = vmul.f32 %v858, %v858
  %v862 = vmul.f32 %v859, %v859
  %v863 = vsel %vm842, %v860, 0.0
  %v864 = vsel %vm842, %v861, 0.0
  %v865 = vadd.f32 %v863, %v864
  %v866 = vsel %vm846, %v862, 0.0
  %v867 = vadd.f32 %v865, %v866
  %v868 = vrot.slane %v867, 4
  %v869 = vadd.f32 %v867, %v868
  %v870 = vrot.slane %v869, 2
  %v871 = vadd.f32 %v869, %v870
  %v872 = vrot.slane %v871, 1
  %v873 = vadd.f32 %v871, %v872
  %v874 = vmul.f32 %v873, %v855
  %v875 = vadd.f32 %v874, 1e-05
  %v876 = vrsqrt.pop %v875
  %v877 = vmul.f32 %v857, %v876
  %v878 = vmul.f32 %v858, %v876
  %v879 = vmul.f32 %v859, %v876
  %v880 = vld [vmem:[%s4] sm:$0x1]
  %v882 = vlaneseq
  %v883 = vshrl.u32 %v882, 7
  %v884 = vsub.s32 0, %v883
  %v885 = vrot.slane %v880, %v884
  %v887 = vmul.f32 %v877, %v885
  %v888 = vmul.f32 %v878, %v885
  %v889 = vmul.f32 %v879, %v885
  %v890 = vld [vmem:[%s5] sm:$0x1]
  %v892 = vlaneseq
  %v893 = vshrl.u32 %v892, 7
  %v894 = vsub.s32 0, %v893
  %v895 = vrot.slane %v890, %v894
  %v897 = vadd.f32 %v887, %v895
  %v898 = vadd.f32 %v888, %v895
  %v899 = vadd.f32 %v889, %v895
  %v900 = vpack.c.bf16 %v898, %v897
  %v901 = vpack.c.bf16 %v899, %v899
  %v902 = vld [vmem:[%s6] sm:$0xff]
  %v903 = vld [vmem:[%s6 + $0x8] sm:$0xff]
  %v904 = vld [vmem:[%s6 + $0x10] sm:$0xf]
  %v905 = vld [vmem:[%s6 + $0x14] sm:$0xff]
  %v906 = vld [vmem:[%s6 + $0x1c] sm:$0xff]
  %v907 = vld [vmem:[%s6 + $0x24] sm:$0xf]
  %v908 = vld [vmem:[%s6 + $0x28] sm:$0xff]
  %v909 = vld [vmem:[%s6 + $0x30] sm:$0xff]
  %v910 = vld [vmem:[%s6 + $0x38] sm:$0xf]
  %v911 = vld [vmem:[%s6 + $0x3c] sm:$0xff]
  %v912 = vld [vmem:[%s6 + $0x44] sm:$0xff]
  %v913 = vld [vmem:[%s6 + $0x4c] sm:$0xf]
  %v914 = vld [vmem:[%s6 + $0x50] sm:$0xff]
  %v915 = vld [vmem:[%s6 + $0x58] sm:$0xff]
  %v916 = vld [vmem:[%s6 + $0x60] sm:$0xf]
  %v917 = vld [vmem:[%s6 + $0x64] sm:$0xff]
  %v918 = vld [vmem:[%s6 + $0x6c] sm:$0xff]
  %v919 = vld [vmem:[%s6 + $0x74] sm:$0xf]
  %v920 = vld [vmem:[%s6 + $0x78] sm:$0xff]
  %v921 = vld [vmem:[%s6 + $0x80] sm:$0xff]
  %v922 = vld [vmem:[%s6 + $0x88] sm:$0xf]
  %v923 = vld [vmem:[%s6 + $0x8c] sm:$0xff]
  %v924 = vld [vmem:[%s6 + $0x94] sm:$0xff]
  %v925 = vld [vmem:[%s6 + $0x9c] sm:$0xf]
  %v950 = vunpack.c.l.b16 %v902
  %v951 = vunpack.c.h.b16 %v902
  %v952 = vunpack.c.l.b16 %v903
  %v953 = vunpack.c.h.b16 %v903
  %v954 = vunpack.c.l.b16 %v904
  %v955 = vunpack.c.l.b16 %v905
  %v956 = vunpack.c.h.b16 %v905
  %v957 = vunpack.c.l.b16 %v906
  %v958 = vunpack.c.h.b16 %v906
  %v959 = vunpack.c.l.b16 %v907
  %v960 = vunpack.c.l.b16 %v908
  %v961 = vunpack.c.h.b16 %v908
  %v962 = vunpack.c.l.b16 %v909
  %v963 = vunpack.c.h.b16 %v909
  %v964 = vunpack.c.l.b16 %v910
  %v965 = vunpack.c.l.b16 %v911
  %v966 = vunpack.c.h.b16 %v911
  %v967 = vunpack.c.l.b16 %v912
  %v968 = vunpack.c.h.b16 %v912
  %v969 = vunpack.c.l.b16 %v913
  %v970 = vunpack.c.l.b16 %v914
  %v971 = vunpack.c.h.b16 %v914
  %v972 = vunpack.c.l.b16 %v915
  %v973 = vunpack.c.h.b16 %v915
  %v974 = vunpack.c.l.b16 %v916
  %v975 = vunpack.c.l.b16 %v917
  %v976 = vunpack.c.h.b16 %v917
  %v977 = vunpack.c.l.b16 %v918
  %v978 = vunpack.c.h.b16 %v918
  %v979 = vunpack.c.l.b16 %v919
  %v980 = vunpack.c.l.b16 %v920
  %v981 = vunpack.c.h.b16 %v920
  %v982 = vunpack.c.l.b16 %v921
  %v983 = vunpack.c.h.b16 %v921
  %v984 = vunpack.c.l.b16 %v922
  %v985 = vunpack.c.l.b16 %v923
  %v986 = vunpack.c.h.b16 %v923
  %v987 = vunpack.c.l.b16 %v924
  %v988 = vunpack.c.h.b16 %v924
  %v989 = vunpack.c.l.b16 %v925
  %v990 = vpack.c.b16 %v955, %v950
  %v991 = vpack.c.b16 %v956, %v951
  %v992 = vpack.c.b16 %v957, %v952
  %v993 = vpack.c.b16 %v958, %v953
  %v994 = vpack.c.b16 %v959, %v954
  %v995 = vpack.c.b16 %v965, %v960
  %v996 = vpack.c.b16 %v966, %v961
  %v997 = vpack.c.b16 %v967, %v962
  %v998 = vpack.c.b16 %v968, %v963
  %v999 = vpack.c.b16 %v969, %v964
  %v1000 = vpack.c.b16 %v975, %v970
  %v1001 = vpack.c.b16 %v976, %v971
  %v1002 = vpack.c.b16 %v977, %v972
  %v1003 = vpack.c.b16 %v978, %v973
  %v1004 = vpack.c.b16 %v979, %v974
  %v1005 = vpack.c.b16 %v985, %v980
  %v1006 = vpack.c.b16 %v986, %v981
  %v1007 = vpack.c.b16 %v987, %v982
  %v1008 = vpack.c.b16 %v988, %v983
  %v1009 = vpack.c.b16 %v989, %v984
  %v1031 = vsel %vm842, %v900, 0
  %v1034 = vsel %vm842, %v901, 0
  %1036 = vmatprep.subr.bf16.mxu0 %v991
  %1037 = vmatpush1.bf16.msra.mxu0 %v990
  %1038 = vmatprep.subr.bf16.mxu0 %v996
  %1039 = vmatpush1.bf16.msra.mxu0 %v995
  %1040 = vmatprep.subr.bf16.mxu0 %v1001
  %1041 = vmatpush1.bf16.msra.mxu0 %v1000
  %1042 = vmatprep.subr.bf16.mxu0 %v1006
  %1043 = vmatpush1.bf16.msra.mxu0 %v1005
  %1044 = vmatprep.subr.bf16.mxu0 0
  %1045 = vmatpush1.bf16.msra.mxu0 0
  %1046 = vmatprep.subr.bf16.mxu0 0
  %1047 = vmatpush1.bf16.msra.mxu0 0
  %1048 = vmatprep.subr.bf16.mxu0 0
  %1049 = vmatpush1.bf16.msra.mxu0 0
  %1050 = vmatprep.subr.bf16.mxu0 0
  %1051 = vmatpush1.bf16.msra.mxu0 0
  %1052 = vmatprep.subr.bf16.mxu0 0
  %1053 = vmatpush1.bf16.msra.mxu0 0
  %1054 = vmatprep.subr.bf16.mxu0 0
  %1055 = vmatpush1.bf16.msra.mxu0 0
  %1056 = vmatprep.subr.bf16.mxu0 0
  %1057 = vmatpush1.bf16.msra.mxu0 0
  %1058 = vmatprep.subr.bf16.mxu0 0
  %1059 = vmatpush1.bf16.msra.mxu0 0
  %1060 = vmatprep.subr.bf16.mxu0 0
  %1061 = vmatpush1.bf16.msra.mxu0 0
  %1062 = vmatprep.subr.bf16.mxu0 0
  %1063 = vmatpush1.bf16.msra.mxu0 0
  %1064 = vmatprep.subr.bf16.mxu0 0
  %1065 = vmatpush1.bf16.msra.mxu0 0
  %1066 = vmatprep.subr.bf16.mxu0 0
  %1067 = vmatpush1.bf16.msra.mxu0 0
  %1068 = vmatprep.mubr.bf16.mxu0 0
  %1069 = vmatmul.mubr.bf16.gmra.mrb[0].mxu0 %v1031
  %v1070 = vpop.f32.mrb[0].mxu0
  %v1071 = vadd.f32 0.0, %v1070
  %v1072 = vpop.f32.mrb[0].mxu0
  %v1073 = vadd.f32 0.0, %v1072
  %v1074 = vpop.f32.mrb[0].mxu0
  %v1075 = vpop.f32.mrb[0].mxu0
  %1076 = vmatprep.mubr.bf16.mxu0 0
  %1077 = vmatmul.mubr.bf16.gmra.mrb[0].mxu0 %v1034
  %v1078 = vpop.f32.mrb[0].mxu0
  %v1079 = vpop.f32.mrb[0].mxu0
  %v1080 = vpop.f32.mrb[0].mxu0
  %v1081 = vpop.f32.mrb[0].mxu0
  %1082 = vdwg.mxu0
  %1083 = vmatprep.subr.bf16.mxu0 %v993
  %1084 = vmatpush1.bf16.msra.mxu0 %v992
  %1085 = vmatprep.subr.bf16.mxu0 %v998
  %1086 = vmatpush1.bf16.msra.mxu0 %v997
  %1087 = vmatprep.subr.bf16.mxu0 %v1003
  %1088 = vmatpush1.bf16.msra.mxu0 %v1002
  %1089 = vmatprep.subr.bf16.mxu0 %v1008
  %1090 = vmatpush1.bf16.msra.mxu0 %v1007
  %1091 = vmatprep.subr.bf16.mxu0 0
  %1092 = vmatpush1.bf16.msra.mxu0 0
  %1093 = vmatprep.subr.bf16.mxu0 0
  %1094 = vmatpush1.bf16.msra.mxu0 0
  %1095 = vmatprep.subr.bf16.mxu0 0
  %1096 = vmatpush1.bf16.msra.mxu0 0
  %1097 = vmatprep.subr.bf16.mxu0 0
  %1098 = vmatpush1.bf16.msra.mxu0 0
  %1099 = vmatprep.subr.bf16.mxu0 0
  %1100 = vmatpush1.bf16.msra.mxu0 0
  %1101 = vmatprep.subr.bf16.mxu0 0
  %1102 = vmatpush1.bf16.msra.mxu0 0
  %1103 = vmatprep.subr.bf16.mxu0 0
  %1104 = vmatpush1.bf16.msra.mxu0 0
  %1105 = vmatprep.subr.bf16.mxu0 0
  %1106 = vmatpush1.bf16.msra.mxu0 0
  %1107 = vmatprep.subr.bf16.mxu0 0
  %1108 = vmatpush1.bf16.msra.mxu0 0
  %1109 = vmatprep.subr.bf16.mxu0 0
  %1110 = vmatpush1.bf16.msra.mxu0 0
  %1111 = vmatprep.subr.bf16.mxu0 0
  %1112 = vmatpush1.bf16.msra.mxu0 0
  %1113 = vmatprep.subr.bf16.mxu0 0
  %1114 = vmatpush1.bf16.msra.mxu0 0
  %1115 = vmatprep.mubr.bf16.mxu0 0
  %1116 = vmatmul.mubr.bf16.gmra.mrb[0].mxu0 %v1031
  %v1117 = vpop.f32.mrb[0].mxu0
  %v1118 = vpop.f32.mrb[0].mxu0
  %v1119 = vpop.f32.mrb[0].mxu0
  %v1120 = vadd.f32 0.0, %v1119
  %v1121 = vpop.f32.mrb[0].mxu0
  %v1122 = vadd.f32 0.0, %v1121
  %1123 = vmatprep.mubr.bf16.mxu0 0
  %1124 = vmatmul.mubr.bf16.gmra.mrb[0].mxu0 %v1034
  %v1125 = vpop.f32.mrb[0].mxu0
  %v1126 = vpop.f32.mrb[0].mxu0
  %v1127 = vpop.f32.mrb[0].mxu0
  %v1128 = vpop.f32.mrb[0].mxu0
  %1129 = vdwg.mxu0
  %1130 = vmatprep.subr.bf16.mxu0 0
  %1131 = vmatpush1.bf16.msra.mxu0 %v994
  %1132 = vmatprep.subr.bf16.mxu0 0
  %1133 = vmatpush1.bf16.msra.mxu0 %v999
  %1134 = vmatprep.subr.bf16.mxu0 0
  %1135 = vmatpush1.bf16.msra.mxu0 %v1004
  %1136 = vmatprep.subr.bf16.mxu0 0
  %1137 = vmatpush1.bf16.msra.mxu0 %v1009
  %1138 = vmatprep.subr.bf16.mxu0 0
  %1139 = vmatpush1.bf16.msra.mxu0 0
  %1140 = vmatprep.subr.bf16.mxu0 0
  %1141 = vmatpush1.bf16.msra.mxu0 0
  %1142 = vmatprep.subr.bf16.mxu0 0
  %1143 = vmatpush1.bf16.msra.mxu0 0
  %1144 = vmatprep.subr.bf16.mxu0 0
  %1145 = vmatpush1.bf16.msra.mxu0 0
  %1146 = vmatprep.subr.bf16.mxu0 0
  %1147 = vmatpush1.bf16.msra.mxu0 0
  %1148 = vmatprep.subr.bf16.mxu0 0
  %1149 = vmatpush1.bf16.msra.mxu0 0
  %1150 = vmatprep.subr.bf16.mxu0 0
  %1151 = vmatpush1.bf16.msra.mxu0 0
  %1152 = vmatprep.subr.bf16.mxu0 0
  %1153 = vmatpush1.bf16.msra.mxu0 0
  %1154 = vmatprep.subr.bf16.mxu0 0
  %1155 = vmatpush1.bf16.msra.mxu0 0
  %1156 = vmatprep.subr.bf16.mxu0 0
  %1157 = vmatpush1.bf16.msra.mxu0 0
  %1158 = vmatprep.subr.bf16.mxu0 0
  %1159 = vmatpush1.bf16.msra.mxu0 0
  %1160 = vmatprep.subr.bf16.mxu0 0
  %1161 = vmatpush1.bf16.msra.mxu0 0
  %1162 = vmatprep.mubr.bf16.mxu0 0
  %1163 = vmatmul.mubr.bf16.gmra.mrb[0].mxu0 %v1031
  %v1164 = vpop.f32.mrb[0].mxu0
  %v1165 = vpop.f32.mrb[0].mxu0
  %v1166 = vpop.f32.mrb[0].mxu0
  %v1167 = vpop.f32.mrb[0].mxu0
  %1168 = vmatprep.mubr.bf16.mxu0 0
  %1169 = vmatmul.mubr.bf16.gmra.mrb[0].mxu0 %v1034
  %v1170 = vpop.f32.mrb[0].mxu0
  %v1171 = vadd.f32 0.0, %v1170
  %v1172 = vpop.f32.mrb[0].mxu0
  %v1173 = vpop.f32.mrb[0].mxu0
  %v1174 = vpop.f32.mrb[0].mxu0
  %1175 = vdwg.mxu0
  %v1177 = vrot.slane %v1071, 2
  %1178 = vrot.lane.b32.xlu0 %v1177, 64
  %v1179 = vpop.permute.xlu0 %1178
  %v1181 = vadd.f32 %v1071, %v1179
  %v1183 = vrot.slane %v1073, 4
  %v1185 = vadd.f32 %v1181, %v1183
  %v1186 = vrot.slane %v1073, 6
  %1187 = vrot.lane.b32.xlu0 %v1186, 64
  %v1188 = vpop.permute.xlu0 %1187
  %v1190 = vadd.f32 %v1185, %v1188
  %v1191 = vadd.f32 %v1190, %v1120
  %v1193 = vrot.slane %v1120, 2
  %1194 = vrot.lane.b32.xlu0 %v1193, 64
  %v1195 = vpop.permute.xlu0 %1194
  %v1197 = vadd.f32 %v1191, %v1195
  %v1199 = vrot.slane %v1122, 4
  %v1201 = vadd.f32 %v1197, %v1199
  %v1202 = vrot.slane %v1122, 6
  %1203 = vrot.lane.b32.xlu0 %v1202, 64
  %v1204 = vpop.permute.xlu0 %1203
  %v1206 = vadd.f32 %v1201, %v1204
  %v1207 = vadd.f32 %v1206, %v1171
  %v1208 = vld [vmem:[%s7] sm:$0x1]
  %v1210 = vlaneseq
  %v1211 = vshrl.u32 %v1210, 7
  %v1212 = vsub.s32 0, %v1211
  %v1213 = vrot.slane %v1208, %v1212
  %v1215 = vadd.f32 %v1207, %v1213
  %v1216 = vmax.f32 %v1215, 0.0
  %v1217 = vld [vmem:[%s1] sm:$0x1]
  %v1218 = vld [vmem:[%s8] sm:$0xf]
  %v1219 = vld [vmem:[%s9] sm:$0x1]
  %v1221 = vlaneseq
  %v1222 = vshrl.u32 %v1221, 7
  %v1223 = vsub.s32 0, %v1222
  %v1224 = vrot.slane %v1219, %v1223
  %vm1226 = vcmask 64512
  %v1228 = vsel %vm1226, %v1217, 0
  %vm1230 = vcmask 1043456
  %v1232 = vsel %vm1230, %v1218, 0
  %1234 = vmatprep.subr.bf16.mxu0 0
  %1235 = vmatpush1.bf16.msra.mxu0 %v1232
  %1236 = vmatprep.subr.bf16.mxu0 0
  %1237 = vmatpush1.bf16.msra.mxu0 0
  %1238 = vmatprep.subr.bf16.mxu0 0
  %1239 = vmatpush1.bf16.msra.mxu0 0
  %1240 = vmatprep.subr.bf16.mxu0 0
  %1241 = vmatpush1.bf16.msra.mxu0 0
  %1242 = vmatprep.subr.bf16.mxu0 0
  %1243 = vmatpush1.bf16.msra.mxu0 0
  %1244 = vmatprep.subr.bf16.mxu0 0
  %1245 = vmatpush1.bf16.msra.mxu0 0
  %1246 = vmatprep.subr.bf16.mxu0 0
  %1247 = vmatpush1.bf16.msra.mxu0 0
  %1248 = vmatprep.subr.bf16.mxu0 0
  %1249 = vmatpush1.bf16.msra.mxu0 0
  %1250 = vmatprep.subr.bf16.mxu0 0
  %1251 = vmatpush1.bf16.msra.mxu0 0
  %1252 = vmatprep.subr.bf16.mxu0 0
  %1253 = vmatpush1.bf16.msra.mxu0 0
  %1254 = vmatprep.subr.bf16.mxu0 0
  %1255 = vmatpush1.bf16.msra.mxu0 0
  %1256 = vmatprep.subr.bf16.mxu0 0
  %1257 = vmatpush1.bf16.msra.mxu0 0
  %1258 = vmatprep.subr.bf16.mxu0 0
  %1259 = vmatpush1.bf16.msra.mxu0 0
  %1260 = vmatprep.subr.bf16.mxu0 0
  %1261 = vmatpush1.bf16.msra.mxu0 0
  %1262 = vmatprep.subr.bf16.mxu0 0
  %1263 = vmatpush1.bf16.msra.mxu0 0
  %1264 = vmatprep.subr.bf16.mxu0 0
  %1265 = vmatpush1.bf16.msra.mxu0 0
  %1266 = vmatprep.mubr.bf16.mxu0 0
  %1267 = vmatmul.mubr.bf16.gmra.mrb[0].mxu0 %v1228
  %v1268 = vpop.f32.mrb[0].mxu0
  %v1269 = vadd.f32 %v1224, %v1268
  %v1270 = vpop.f32.mrb[0].mxu0
  %v1271 = vpop.f32.mrb[0].mxu0
  %v1272 = vpop.f32.mrb[0].mxu0
  %1273 = vdwg.mxu0
  %v1274 = vmul.f32 %v1269, 0.5
  %v1275 = vtanh.pop %v1274
  %v1276 = vadd.f32 %v1275, 1.0
  %v1277 = vmul.f32 %v1276, 0.5
  %v1278 = vadd.f32 %v1216, %v1277
  %v1279 = vpack.c.bf16 %v1278, %v1278
  %v1280 = vld [vmem:[%s10] sm:$0xf]
  %v1281 = vld [vmem:[%s10 + $0x4] sm:$0xf]
  %v1282 = vld [vmem:[%s10 + $0x8] sm:$0xf]
  %v1283 = vld [vmem:[%s10 + $0xc] sm:$0xf]
  %v1284 = vld [vmem:[%s10 + $0x10] sm:$0xf]
  %v1285 = vld [vmem:[%s10 + $0x14] sm:$0xf]
  %v1286 = vld [vmem:[%s10 + $0x18] sm:$0xf]
  %v1287 = vld [vmem:[%s10 + $0x1c] sm:$0xf]
  %v1288 = vld [vmem:[%s11] sm:$0x1]
  %v1290 = vlaneseq
  %v1291 = vshrl.u32 %v1290, 7
  %v1292 = vsub.s32 0, %v1291
  %v1293 = vrot.slane %v1288, %v1292
  %v1303 = vunpack.c.l.b16 %v1280
  %v1304 = vunpack.c.l.b16 %v1281
  %v1305 = vunpack.c.l.b16 %v1282
  %v1306 = vunpack.c.l.b16 %v1283
  %v1307 = vunpack.c.l.b16 %v1284
  %v1308 = vunpack.c.l.b16 %v1285
  %v1309 = vunpack.c.l.b16 %v1286
  %v1310 = vunpack.c.l.b16 %v1287
  %v1311 = vpack.c.b16 %v1304, %v1303
  %v1312 = vpack.c.b16 %v1306, %v1305
  %v1313 = vpack.c.b16 %v1308, %v1307
  %v1314 = vpack.c.b16 %v1310, %v1309
  %v1320 = vsel %vm842, %v1279, 0
  %1322 = vmatprep.subr.bf16.mxu0 0
  %1323 = vmatpush1.bf16.msra.mxu0 %v1311
  %1324 = vmatprep.subr.bf16.mxu0 0
  %1325 = vmatpush1.bf16.msra.mxu0 %v1312
  %1326 = vmatprep.subr.bf16.mxu0 0
  %1327 = vmatpush1.bf16.msra.mxu0 %v1313
  %1328 = vmatprep.subr.bf16.mxu0 0
  %1329 = vmatpush1.bf16.msra.mxu0 %v1314
  %1330 = vmatprep.subr.bf16.mxu0 0
  %1331 = vmatpush1.bf16.msra.mxu0 0
  %1332 = vmatprep.subr.bf16.mxu0 0
  %1333 = vmatpush1.bf16.msra.mxu0 0
  %1334 = vmatprep.subr.bf16.mxu0 0
  %1335 = vmatpush1.bf16.msra.mxu0 0
  %1336 = vmatprep.subr.bf16.mxu0 0
  %1337 = vmatpush1.bf16.msra.mxu0 0
  %1338 = vmatprep.subr.bf16.mxu0 0
  %1339 = vmatpush1.bf16.msra.mxu0 0
  %1340 = vmatprep.subr.bf16.mxu0 0
  %1341 = vmatpush1.bf16.msra.mxu0 0
  %1342 = vmatprep.subr.bf16.mxu0 0
  %1343 = vmatpush1.bf16.msra.mxu0 0
  %1344 = vmatprep.subr.bf16.mxu0 0
  %1345 = vmatpush1.bf16.msra.mxu0 0
  %1346 = vmatprep.subr.bf16.mxu0 0
  %1347 = vmatpush1.bf16.msra.mxu0 0
  %1348 = vmatprep.subr.bf16.mxu0 0
  %1349 = vmatpush1.bf16.msra.mxu0 0
  %1350 = vmatprep.subr.bf16.mxu0 0
  %1351 = vmatpush1.bf16.msra.mxu0 0
  %1352 = vmatprep.subr.bf16.mxu0 0
  %1353 = vmatpush1.bf16.msra.mxu0 0
  %1354 = vmatprep.mubr.bf16.mxu0 0
  %1355 = vmatmul.mubr.bf16.gmra.mrb[0].mxu0 %v1320
  %v1356 = vpop.f32.mrb[0].mxu0
  %v1357 = vadd.f32 %v1293, %v1356
  %v1358 = vpop.f32.mrb[0].mxu0
  %v1359 = vpop.f32.mrb[0].mxu0
  %v1360 = vpop.f32.mrb[0].mxu0
  %1361 = vdwg.mxu0
  %v1362 = vmax.f32 %v1357, 0.0
  %v1363 = vpack.c.bf16 %v1362, %v1362
  %v1364 = vld [vmem:[%s12] sm:$0xf]
  %v1365 = vld [vmem:[%s12 + $0x4] sm:$0xf]
  %v1366 = vld [vmem:[%s12 + $0x8] sm:$0xf]
  %v1367 = vld [vmem:[%s12 + $0xc] sm:$0xf]
  %v1368 = vld [vmem:[%s13] sm:$0x1]
  %v1370 = vlaneseq
  %v1371 = vshrl.u32 %v1370, 7
  %v1372 = vsub.s32 0, %v1371
  %v1373 = vrot.slane %v1368, %v1372
  %v1379 = vunpack.c.l.b16 %v1364
  %v1380 = vunpack.c.l.b16 %v1365
  %v1381 = vunpack.c.l.b16 %v1366
  %v1382 = vunpack.c.l.b16 %v1367
  %v1383 = vpack.c.b16 %v1380, %v1379
  %v1384 = vpack.c.b16 %v1382, %v1381
  %vm1387 = vcmask 261120
  %v1389 = vsel %vm1387, %v1363, 0
  %1391 = vmatprep.subr.bf16.mxu0 0
  %1392 = vmatpush1.bf16.msra.mxu0 %v1383
  %1393 = vmatprep.subr.bf16.mxu0 0
  %1394 = vmatpush1.bf16.msra.mxu0 %v1384
  %1395 = vmatprep.subr.bf16.mxu0 0
  %1396 = vmatpush1.bf16.msra.mxu0 0
  %1397 = vmatprep.subr.bf16.mxu0 0
  %1398 = vmatpush1.bf16.msra.mxu0 0
  %1399 = vmatprep.subr.bf16.mxu0 0
  %1400 = vmatpush1.bf16.msra.mxu0 0
  %1401 = vmatprep.subr.bf16.mxu0 0
  %1402 = vmatpush1.bf16.msra.mxu0 0
  %1403 = vmatprep.subr.bf16.mxu0 0
  %1404 = vmatpush1.bf16.msra.mxu0 0
  %1405 = vmatprep.subr.bf16.mxu0 0
  %1406 = vmatpush1.bf16.msra.mxu0 0
  %1407 = vmatprep.subr.bf16.mxu0 0
  %1408 = vmatpush1.bf16.msra.mxu0 0
  %1409 = vmatprep.subr.bf16.mxu0 0
  %1410 = vmatpush1.bf16.msra.mxu0 0
  %1411 = vmatprep.subr.bf16.mxu0 0
  %1412 = vmatpush1.bf16.msra.mxu0 0
  %1413 = vmatprep.subr.bf16.mxu0 0
  %1414 = vmatpush1.bf16.msra.mxu0 0
  %1415 = vmatprep.subr.bf16.mxu0 0
  %1416 = vmatpush1.bf16.msra.mxu0 0
  %1417 = vmatprep.subr.bf16.mxu0 0
  %1418 = vmatpush1.bf16.msra.mxu0 0
  %1419 = vmatprep.subr.bf16.mxu0 0
  %1420 = vmatpush1.bf16.msra.mxu0 0
  %1421 = vmatprep.subr.bf16.mxu0 0
  %1422 = vmatpush1.bf16.msra.mxu0 0
  %1423 = vmatprep.mubr.bf16.mxu0 0
  %1424 = vmatmul.mubr.bf16.gmra.mrb[0].mxu0 %v1389
  %v1425 = vpop.f32.mrb[0].mxu0
  %v1426 = vadd.f32 %v1373, %v1425
  %v1427 = vpop.f32.mrb[0].mxu0
  %v1428 = vpop.f32.mrb[0].mxu0
  %v1429 = vpop.f32.mrb[0].mxu0
  %1430 = vdwg.mxu0
  %vm1431 = vcmask 115712
  %1432 = vst.msk [vmem:[%s14] sm:$0x3] %vm1431, %v1426
  // Predicated region
  $region58: #{ghostnet_forward.3} parent=0 // pred_check
    _
  $region59: #{ghostnet_forward.3} parent=0 // pred_check_branch
    %1434 = sbr.rel (0) target = $region61
  $region60: #{ghostnet_forward.3} parent=0 // pred_region
    _
  $region61: #{ghostnet_forward.3} parent=0 // pred_fallthru
    _
  // Predicated region
  $region62: #{ghostnet_forward.3} parent=0 // pred_check
    _
  $region63: #{ghostnet_forward.3} parent=0 // pred_check_branch
    %1436 = sbr.rel (0) target = $region65
  $region64: #{ghostnet_forward.3} parent=0 // pred_region
    _
  $region65: #{ghostnet_forward.3} parent=0 // pred_fallthru
    _

</llo_original>
